<compile_context>
chip_gen: v7x
topology: tpu7x:2x2x1
jax: 0.10.0
libtpu: 0.0.40
codegen_flags: <defaults>
</compile_context>

<pallas_src>
import functools
import numpy as np
import jax
import jax.numpy as jnp
from jax.experimental import pallas as pl
from jax.experimental.pallas import tpu as pltpu


def _round_up(x, m):
    return ((x + m - 1) // m) * m


def _pick_tile(dim, cap, unit):
    """Largest multiple of `unit` <= cap that evenly divides round_up(dim, unit)."""
    dp = _round_up(dim, unit)
    t = min(cap, dp)
    t = max(t - t % unit, unit)
    while t > unit and dp % t != 0:
        t -= unit
    return t, dp


def _default_quantize_fc():
    """int8 classifier weights on v5e/v6e (native-ish narrow path); bf16 on v7x."""
    try:
        kind = jax.devices()[0].device_kind.lower()
    except Exception:
        return True
    return "v7" not in kind


# ---------------------------------------------------------------------------
# Matmul kernel (classifier): bf16/int8 weights, f32 accumulation,
# fused per-channel scale + bias (+ReLU) epilogue.
# ---------------------------------------------------------------------------

def _mm_kernel(a_ref, b_ref, scale_ref, bias_ref, o_ref, acc_ref, *, relu, quantized):
    @pl.when(pl.program_id(2) == 0)
    def _():
        acc_ref[...] = jnp.zeros_like(acc_ref)

    b = b_ref[...]
    if quantized:
        b = b.astype(jnp.bfloat16)          # int8 -> bf16 dequant (scale in epilogue)
    acc_ref[...] += jnp.dot(a_ref[...], b, preferred_element_type=jnp.float32)

    @pl.when(pl.program_id(2) == pl.num_programs(2) - 1)
    def _():
        r = acc_ref[...] * scale_ref[...] + bias_ref[...]
        if relu:
            r = jnp.maximum(r, 0.0)
        o_ref[...] = r.astype(o_ref.dtype)


def matmul_bias_act(a, b, bias, scale=None, relu=False, out_dtype=jnp.bfloat16):
    """out = act((a @ b) * scale + bias); a:(M,K), b:(K,N) bf16|int8, bias/scale:(N,)."""
    M, K = a.shape
    K2, N = b.shape
    assert K == K2 and bias.shape[-1] == N
    quantized = (b.dtype == jnp.int8)

    a = a.astype(jnp.bfloat16)
    if not quantized:
        b = b.astype(jnp.bfloat16)
    bias = bias.reshape(N).astype(jnp.float32)
    if scale is None:
        scale = jnp.ones((N,), jnp.float32)
    else:
        scale = scale.reshape(N).astype(jnp.float32)

    # M is tiny (batch) -> a single full-extent block.
    if M <= 256:
        tm, Mp = M, M
    else:
        tm, Mp = _pick_tile(M, 256, 8)
    tn, Np = _pick_tile(N, 1024, 128)     # weight streaming: wide N tiles
    tk, Kp = _pick_tile(K, 4096, 128)     # deep K tiles (fc1 -> 3584, fc2/fc3 -> 4096)

    a_p = a if (Mp, Kp) == (M, K) else \
        jnp.zeros((Mp, Kp), a.dtype).at[:M, :K].set(a)
    b_p = b if (Kp, Np) == (K, N) else \
        jnp.zeros((Kp, Np), b.dtype).at[:K, :N].set(b)
    bias_p = bias.reshape(1, N) if Np == N else \
        jnp.zeros((1, Np), jnp.float32).at[0, :N].set(bias)
    scale_p = scale.reshape(1, N) if Np == N else \
        jnp.zeros((1, Np), jnp.float32).at[0, :N].set(scale)

    grid = (Mp // tm, Np // tn, Kp // tk)
    flops = 2 * Mp * Kp * Np
    bytes_accessed = int(a_p.size * a_p.dtype.itemsize
                         + b_p.size * b_p.dtype.itemsize
                         + Mp * Np * jnp.dtype(out_dtype).itemsize)

    out = pl.pallas_call(
        functools.partial(_mm_kernel, relu=relu, quantized=quantized),
        out_shape=jax.ShapeDtypeStruct((Mp, Np), out_dtype),
        grid_spec=pltpu.PrefetchScalarGridSpec(
            num_scalar_prefetch=0,
            grid=grid,
            in_specs=[
                pl.BlockSpec((tm, tk), lambda i, j, k: (i, k)),
                pl.BlockSpec((tk, tn), lambda i, j, k: (k, j)),
                pl.BlockSpec((1, tn), lambda i, j, k: (0, j)),
                pl.BlockSpec((1, tn), lambda i, j, k: (0, j)),
            ],
            out_specs=pl.BlockSpec((tm, tn), lambda i, j, k: (i, j)),
            scratch_shapes=[pltpu.VMEM((tm, tn), jnp.float32)],
        ),
        compiler_params=pltpu.CompilerParams(
            dimension_semantics=("parallel", "parallel", "arbitrary"),
            vmem_limit_bytes=48 * 1024 * 1024),
        cost_estimate=pl.CostEstimate(flops=flops, transcendentals=0,
                                      bytes_accessed=bytes_accessed),
    )(a_p, b_p, scale_p, bias_p)
    if (Mp, Np) != (M, N):
        out = out[:M, :N]
    return out


# ---------------------------------------------------------------------------
# 3x3 conv + bias + ReLU, NHWC: 3 ky-band matmuls with K = 3*Cin
# (kx folded onto the channel/lane axis once in the wrapper; in-kernel slices
#  touch only the leading H axis, so no strided sublane extracts).
# ---------------------------------------------------------------------------

def _conv3x3_relu_kernel(xb_ref, w_ref, b_ref, o_ref):
    # xb_ref: (1, H+2, W, 3*Cin) bf16   w_ref: (3, 3*Cin, CB) bf16
    # b_ref:  (1, CB) f32               o_ref: (1, H, W, CB) bf16
    h, wd, cb = o_ref.shape[1], o_ref.shape[2], o_ref.shape[3]
    k3 = xb_ref.shape[3]
    acc = None
    for ky in range(3):                       # static unroll over 3 ky bands
        a = xb_ref[0, pl.ds(ky, h), :, :].reshape(h * wd, k3)
        c = jnp.dot(a, w_ref[ky], preferred_element_type=jnp.float32)
        acc = c if acc is None else acc + c
    r = jnp.maximum(acc + b_ref[...], 0.0)
    o_ref[0] = r.reshape(h, wd, cb).astype(o_ref.dtype)


def conv3x3_relu_nhwc(x, w_bands, bias):
    """x: (N,H,W,Cin) bf16, w_bands: (3, 3*Cin, Cout) bf16, bias: (1,Cout) f32."""
    n, h, wd, cin = x.shape
    cout = w_bands.shape[2]
    cb = cout if cout <= 256 else 256          # Cout grid axis shrinks acc working set
    assert cout % cb == 0
    xp = jnp.pad(x, ((0, 0), (1, 1), (1, 1), (0, 0)))          # spatial halo
    # fold the kx shift onto the channel axis: (N, H+2, W, 3*Cin)
    xb = jnp.concatenate([xp[:, :, 0:wd, :],
                          xp[:, :, 1:wd + 1, :],
                          xp[:, :, 2:wd + 2, :]], axis=-1)
    return pl.pallas_call(
        _conv3x3_relu_kernel,
        out_shape=jax.ShapeDtypeStruct((n, h, wd, cout), jnp.bfloat16),
        grid_spec=pltpu.PrefetchScalarGridSpec(
            num_scalar_prefetch=0,
            grid=(n, cout // cb),
            in_specs=[
                pl.BlockSpec((1, h + 2, wd, 3 * cin), lambda i, j: (i, 0, 0, 0)),
                pl.BlockSpec((3, 3 * cin, cb), lambda i, j: (0, 0, j)),
                pl.BlockSpec((1, cb), lambda i, j: (0, j)),
            ],
            out_specs=pl.BlockSpec((1, h, wd, cb), lambda i, j: (i, 0, 0, j)),
        ),
        compiler_params=pltpu.CompilerParams(
            dimension_semantics=("parallel", "parallel")),
    )(xb, w_bands, bias)


# ---------------------------------------------------------------------------
# 2x2 / stride-2 max pool, NHWC, single read of the tensor, lane-dense store
# ---------------------------------------------------------------------------

def _maxpool2x2_kernel(x_ref, o_ref):
    # x_ref: (H2, 2, W2, 2*C)  -- (dy) as a leading dim, (dx, c) folded into lanes
    c = o_ref.shape[2]
    x = x_ref[...]
    a = jnp.maximum(x[:, 0], x[:, 1])                       # max over the H pair
    o_ref[...] = jnp.maximum(a[..., :c], a[..., c:])        # max over the W pair


def maxpool2x2_nhwc(x):
    n, h, w, c = x.shape
    h2, w2 = h // 2, w // 2
    xr = x.reshape(n * h2, 2, w2, 2 * c)      # free reshape of contiguous NHWC data
    out = pl.pallas_call(
        _maxpool2x2_kernel,
        out_shape=jax.ShapeDtypeStruct((n * h2, w2, c), x.dtype),
        grid_spec=pltpu.PrefetchScalarGridSpec(
            num_scalar_prefetch=0,
            grid=(n,),
            in_specs=[pl.BlockSpec((h2, 2, w2, 2 * c), lambda i: (i, 0, 0, 0))],
            out_specs=pl.BlockSpec((h2, w2, c), lambda i: (i, 0, 0)),
        ),
        compiler_params=pltpu.CompilerParams(dimension_semantics=("parallel",)),
    )(xr)
    return out.reshape(n, h2, w2, c)


# ---------------------------------------------------------------------------
# AdaptiveAvgPool2d(7), NHWC: per-image (49 x HW) pooling-matrix matmul, C on lanes.
# Pooling matrix kept in f32 (exact averaging weights).
# ---------------------------------------------------------------------------

def _adaptive_pool_matrix(in_size, out_size):
    p = np.zeros((out_size, in_size), np.float32)
    for i in range(out_size):
        s = (i * in_size) // out_size
        e = -((-((i + 1) * in_size)) // out_size)       # ceil
        p[i, s:e] = 1.0 / (e - s)
    return p


def _avgpool_kernel(p_ref, x_ref, o_ref):
    # p_ref: (49, HW) f32   x_ref: (1, HW, C) bf16   o_ref: (1, 49, C) bf16
    o_ref[0] = jnp.dot(p_ref[...], x_ref[0].astype(jnp.float32),
                       preferred_element_type=jnp.float32).astype(o_ref.dtype)


def adaptive_avg_pool_nhwc(x, out_size=7):
    n, h, w, c = x.shape
    oo = out_size * out_size
    p = jnp.asarray(np.kron(_adaptive_pool_matrix(h, out_size),
                            _adaptive_pool_matrix(w, out_size)), jnp.float32)
    xr = x.reshape(n, h * w, c)
    return pl.pallas_call(
        _avgpool_kernel,
        out_shape=jax.ShapeDtypeStruct((n, oo, c), x.dtype),
        grid_spec=pltpu.PrefetchScalarGridSpec(
            num_scalar_prefetch=0,
            grid=(n,),
            in_specs=[
                pl.BlockSpec((oo, h * w), lambda i: (0, 0)),
                pl.BlockSpec((1, h * w, c), lambda i: (i, 0, 0)),
            ],
            out_specs=pl.BlockSpec((1, oo, c), lambda i: (i, 0, 0)),
        ),
        compiler_params=pltpu.CompilerParams(dimension_semantics=("parallel",)),
    )(p, xr)


# ---------------------------------------------------------------------------
# VGG model
# ---------------------------------------------------------------------------

def _quantize_int8_per_col(w_kn):
    """(K,N) f32 -> (int8 (K,N), f32 (N,) per-output-channel scale)."""
    scale = jnp.maximum(jnp.max(jnp.abs(w_kn), axis=0) / 127.0, 1e-8)
    q = jnp.clip(jnp.round(w_kn / scale[None, :]), -127, 127).astype(jnp.int8)
    return q, scale.astype(jnp.float32)


class VGGPallas:
    """VGG: small conv `features` stack -> AdaptiveAvgPool2d(7) -> classifier."""

    def __init__(self, output_dim=10, key=None, quantize_fc=None):
        if key is None:
            key = jax.random.PRNGKey(0)
        if quantize_fc is None:
            quantize_fc = _default_quantize_fc()
        ks = jax.random.split(key, 10)
        self.output_dim = output_dim
        self.quantize_fc = quantize_fc

        def init(k, shape, fan_in):
            return jax.random.normal(k, shape, jnp.float32) / np.sqrt(fan_in)

        # conv weights: torch (Cout,Cin,KH,KW) layout repacked once at init into
        # (ky, 3*Cin, Cout) bf16 band matrices for the NHWC band-matmul kernel.
        def pack_conv(w):
            cout, cin = w.shape[0], w.shape[1]
            return jnp.transpose(w, (2, 3, 1, 0)).reshape(3, 3 * cin, cout).astype(jnp.bfloat16)

        # features: Conv(3->64)+ReLU+MaxPool2, Conv(64->512)+ReLU+MaxPool2
        # (features must end with 512 channels: classifier input is 512*7*7)
        self.conv1_w = pack_conv(init(ks[0], (64, 3, 3, 3), 3 * 9))
        self.conv1_b = init(ks[1], (64,), 64).reshape(1, 64)
        self.conv2_w = pack_conv(init(ks[2], (512, 64, 3, 3), 64 * 9))
        self.conv2_b = init(ks[3], (512,), 512).reshape(1, 512)

        # classifier: weights pre-transposed to (K,N); fc1 K-rows permuted from the
        # torch (c,h,w) flatten order to the (h,w,c) order the NHWC pipeline produces;
        # fc3 pre-padded to a lane-dense N=128.  fc1/fc2 stored int8 + per-N scale
        # on v5e/v6e; bf16 on v7x.
        f1 = init(ks[4], (4096, 512 * 7 * 7), 512 * 7 * 7)
        f1 = f1.reshape(4096, 512, 7, 7).transpose(0, 2, 3, 1).reshape(4096, 512 * 7 * 7)
        f1 = f1.T                                                     # (25088, 4096)
        f2 = init(ks[6], (4096, 4096), 4096).T                        # (4096, 4096)
        if quantize_fc:
            self.fc1_w, self.fc1_scale = _quantize_int8_per_col(f1)
            self.fc2_w, self.fc2_scale = _quantize_int8_per_col(f2)
        else:
            self.fc1_w, self.fc1_scale = f1.astype(jnp.bfloat16), None
            self.fc2_w, self.fc2_scale = f2.astype(jnp.bfloat16), None
        self.fc1_b = init(ks[5], (4096,), 4096)
        self.fc2_b = init(ks[7], (4096,), 4096)

        f3 = init(ks[8], (output_dim, 4096), 4096).T.astype(jnp.bfloat16)
        n_pad = _round_up(output_dim, 128)
        self.fc3_w = jnp.zeros((4096, n_pad), jnp.bfloat16).at[:, :output_dim].set(f3)
        self.fc3_b = jnp.zeros((n_pad,), jnp.float32).at[:output_dim].set(
            init(ks[9], (output_dim,), output_dim))

    def __call__(self, x):
        n = x.shape[0]
        # single NCHW -> NHWC layout change at the (3-channel) input; bf16 activations
        x = jnp.transpose(x, (0, 2, 3, 1)).astype(jnp.bfloat16)
        # self.features(x)
        x = conv3x3_relu_nhwc(x, self.conv1_w, self.conv1_b)
        x = maxpool2x2_nhwc(x)
        x = conv3x3_relu_nhwc(x, self.conv2_w, self.conv2_b)
        x = maxpool2x2_nhwc(x)
        # self.avgpool(x)  -> (N, 49, 512), channels on the lane axis
        x = adaptive_avg_pool_nhwc(x, 7)
        # h = x.view(N, -1): flatten in (h, w, c) order; fc1 rows are pre-permuted to match
        h = x.reshape(n, -1)
        # classifier (weights stored (K, N); int8 dequant + scale fused in the epilogue)
        x = matmul_bias_act(h, self.fc1_w, self.fc1_b, self.fc1_scale, relu=True)
        # TODO(synk): nn.Dropout(0.5) implemented as eval-mode identity (no stochastic masking).
        x = matmul_bias_act(x, self.fc2_w, self.fc2_b, self.fc2_scale, relu=True)
        x = matmul_bias_act(x, self.fc3_w, self.fc3_b, None, relu=False,
                            out_dtype=jnp.float32)
        return x[:, :self.output_dim]


if __name__ == "__main__":
    root = jax.random.PRNGKey(0)
    k_params, k_input = jax.random.split(root)
    model = VGGPallas(output_dim=10, key=k_params)
    x = jax.random.normal(k_input, (2, 3, 32, 32), jnp.float32)  # NCHW
    y = model(x)
    jax.block_until_ready(y)
    assert y.shape == (2, 10) and y.dtype == jnp.float32
    print("KERNEL_OK")
</pallas_src>

<mosaic_0001>
module attributes {stable_mosaic.version = 11 : i64} {
  func.func @_conv3x3_relu_kernel(%arg0: i32, %arg1: i32, %arg2: memref<1x34x32x9xbf16, #tpu.memory_space<vmem>>, %arg3: memref<3x9x64xbf16, #tpu.memory_space<vmem>>, %arg4: memref<1x64xf32, #tpu.memory_space<vmem>>, %arg5: memref<1x32x32x64xbf16, #tpu.memory_space<vmem>>) attributes {dimension_semantics = [#tpu.dimension_semantics<parallel>, #tpu.dimension_semantics<parallel>], iteration_bounds = array<i64: 2, 1>, scalar_prefetch = 0 : i64, scratch_operands = 0 : i64, tpu.core_type = #tpu.core_type<tc>, window_params = [{transform_indices = @transform_0, window_bounds = array<i64: 1, 34, 32, 9>}, {transform_indices = @transform_1, window_bounds = array<i64: 3, 9, 64>}, {transform_indices = @transform_2, window_bounds = array<i64: 1, 64>}, {transform_indices = @transform_3, window_bounds = array<i64: 1, 32, 32, 64>}]} {
    %c0 = arith.constant 0 : index
    %c0_0 = arith.constant 0 : index
    %c0_1 = arith.constant 0 : index
    %c0_2 = arith.constant 0 : index
    %0 = vector.load %arg2[%c0, %c0_0, %c0_1, %c0_2] : memref<1x34x32x9xbf16, #tpu.memory_space<vmem>>, vector<1x32x32x9xbf16>
    %1 = vector.shape_cast %0 : vector<1x32x32x9xbf16> to vector<32x32x9xbf16>
    %2 = vector.shape_cast %1 : vector<32x32x9xbf16> to vector<1024x9xbf16>
    %c0_3 = arith.constant 0 : index
    %c0_4 = arith.constant 0 : index
    %c0_5 = arith.constant 0 : index
    %3 = vector.load %arg3[%c0_3, %c0_4, %c0_5] : memref<3x9x64xbf16, #tpu.memory_space<vmem>>, vector<1x9x64xbf16>
    %4 = vector.shape_cast %3 : vector<1x9x64xbf16> to vector<9x64xbf16>
    %cst = arith.constant dense<0.000000e+00> : vector<1024x64xf32>
    %5 = tpu.matmul %2, %4, %cst {dimension_numbers = #tpu.dot_dimension_numbers<[1], [0], [0], [1], [0, 0, 1, 1], [], []>} : vector<1024x9xbf16>, vector<9x64xbf16>, vector<1024x64xf32> -> vector<1024x64xf32>
    %c0_6 = arith.constant 0 : index
    %c1 = arith.constant 1 : index
    %c0_7 = arith.constant 0 : index
    %c0_8 = arith.constant 0 : index
    %6 = vector.load %arg2[%c0_6, %c1, %c0_7, %c0_8] : memref<1x34x32x9xbf16, #tpu.memory_space<vmem>>, vector<1x32x32x9xbf16>
    %7 = vector.shape_cast %6 : vector<1x32x32x9xbf16> to vector<32x32x9xbf16>
    %8 = vector.shape_cast %7 : vector<32x32x9xbf16> to vector<1024x9xbf16>
    %c1_9 = arith.constant 1 : index
    %c0_10 = arith.constant 0 : index
    %c0_11 = arith.constant 0 : index
    %9 = vector.load %arg3[%c1_9, %c0_10, %c0_11] : memref<3x9x64xbf16, #tpu.memory_space<vmem>>, vector<1x9x64xbf16>
    %10 = vector.shape_cast %9 : vector<1x9x64xbf16> to vector<9x64xbf16>
    %cst_12 = arith.constant dense<0.000000e+00> : vector<1024x64xf32>
    %11 = tpu.matmul %8, %10, %cst_12 {dimension_numbers = #tpu.dot_dimension_numbers<[1], [0], [0], [1], [0, 0, 1, 1], [], []>} : vector<1024x9xbf16>, vector<9x64xbf16>, vector<1024x64xf32> -> vector<1024x64xf32>
    %12 = arith.addf %5, %11 : vector<1024x64xf32>
    %c0_13 = arith.constant 0 : index
    %c2 = arith.constant 2 : index
    %c0_14 = arith.constant 0 : index
    %c0_15 = arith.constant 0 : index
    %13 = vector.load %arg2[%c0_13, %c2, %c0_14, %c0_15] : memref<1x34x32x9xbf16, #tpu.memory_space<vmem>>, vector<1x32x32x9xbf16>
    %14 = vector.shape_cast %13 : vector<1x32x32x9xbf16> to vector<32x32x9xbf16>
    %15 = vector.shape_cast %14 : vector<32x32x9xbf16> to vector<1024x9xbf16>
    %c2_16 = arith.constant 2 : index
    %c0_17 = arith.constant 0 : index
    %c0_18 = arith.constant 0 : index
    %16 = vector.load %arg3[%c2_16, %c0_17, %c0_18] : memref<3x9x64xbf16, #tpu.memory_space<vmem>>, vector<1x9x64xbf16>
    %17 = vector.shape_cast %16 : vector<1x9x64xbf16> to vector<9x64xbf16>
    %cst_19 = arith.constant dense<0.000000e+00> : vector<1024x64xf32>
    %18 = tpu.matmul %15, %17, %cst_19 {dimension_numbers = #tpu.dot_dimension_numbers<[1], [0], [0], [1], [0, 0, 1, 1], [], []>} : vector<1024x9xbf16>, vector<9x64xbf16>, vector<1024x64xf32> -> vector<1024x64xf32>
    %19 = arith.addf %12, %18 : vector<1024x64xf32>
    %c0_20 = arith.constant 0 : index
    %c0_21 = arith.constant 0 : index
    %20 = vector.load %arg4[%c0_20, %c0_21] : memref<1x64xf32, #tpu.memory_space<vmem>>, vector<1x64xf32>
    %21 = vector.broadcast %20 : vector<1x64xf32> to vector<1024x64xf32>
    %22 = arith.addf %19, %21 : vector<1024x64xf32>
    %cst_22 = arith.constant 0.000000e+00 : f32
    %23 = vector.broadcast %cst_22 : f32 to vector<1024x64xf32>
    %24 = arith.maximumf %22, %23 : vector<1024x64xf32>
    %25 = vector.shape_cast %24 : vector<1024x64xf32> to vector<32x32x64xf32>
    %26 = arith.truncf %25 : vector<32x32x64xf32> to vector<32x32x64xbf16>
    %c0_23 = arith.constant 0 : index
    %c0_24 = arith.constant 0 : index
    %c0_25 = arith.constant 0 : index
    %c0_26 = arith.constant 0 : index
    %27 = vector.load %arg5[%c0_23, %c0_24, %c0_25, %c0_26] : memref<1x32x32x64xbf16, #tpu.memory_space<vmem>>, vector<1x32x32x64xbf16>
    %28 = vector.shape_cast %27 : vector<1x32x32x64xbf16> to vector<32x32x64xbf16>
    %29 = vector.shape_cast %26 : vector<32x32x64xbf16> to vector<1x32x32x64xbf16>
    tpu.vector_store %arg5[%c0_23, %c0_24, %c0_25, %c0_26], %29 {strides = array<i32>} : memref<1x32x32x64xbf16, #tpu.memory_space<vmem>>, vector<1x32x32x64xbf16>,
    return
  }
  func.func @transform_0(%arg0: i32, %arg1: i32) -> (i32, i32, i32, i32) {
    %c0_i32 = arith.constant 0 : i32
    %c0_i32_0 = arith.constant 0 : i32
    %c0_i32_1 = arith.constant 0 : i32
    %c0_i32_2 = arith.constant 0 : i32
    return %arg0, %c0_i32, %c0_i32_0, %c0_i32_1 : i32, i32, i32, i32
  }
  func.func @transform_1(%arg0: i32, %arg1: i32) -> (i32, i32, i32) {
    %c0_i32 = arith.constant 0 : i32
    %c0_i32_0 = arith.constant 0 : i32
    %c0_i32_1 = arith.constant 0 : i32
    return %c0_i32, %c0_i32_0, %arg1 : i32, i32, i32
  }
  func.func @transform_2(%arg0: i32, %arg1: i32) -> (i32, i32) {
    %c0_i32 = arith.constant 0 : i32
    %c0_i32_0 = arith.constant 0 : i32
    return %c0_i32, %arg1 : i32, i32
  }
  func.func @transform_3(%arg0: i32, %arg1: i32) -> (i32, i32, i32, i32) {
    %c0_i32 = arith.constant 0 : i32
    %c0_i32_0 = arith.constant 0 : i32
    %c0_i32_1 = arith.constant 0 : i32
    return %arg0, %c0_i32, %c0_i32_0, %arg1 : i32, i32, i32, i32
  }
}

</mosaic_0001>

<llo_original>
// kernel: tpu_custom_call.1
$region0: #{tpu_custom_call.1}
  #allocation0 [shape = 'u32[]', space=smem, size = 0x4, offset = 0x4, fixed_abs, tag = 'smem constant byte address 0x4 - core index']
  #allocation1 [shape = 'u32[144,128]{1,0:T(1,128)}', space=vmem, size = 0x12000, scoped, tag = 'internal scratch']
  %s0 = inlined_call_operand.vmem [shape: bf16[2,34,32,9], index: 0, kind: input, shape index: {}]
  %s1 = inlined_call_operand.vmem [shape: bf16[3,9,64], index: 1, kind: input, shape index: {}]
  %s2 = inlined_call_operand.vmem [shape: f32[1,64], index: 2, kind: input, shape index: {}]
  %s3 = inlined_call_operand.hbm [shape: bf16[2,32,32,64], index: 3, kind: output, shape index: {}]
  %s4 = sld [smem:[#allocation0]]
  $region45: #{tpu_custom_call.1} parent=0
    _
  %s6 = ssub.s32 1, %s4
  %s7 = scalar_select 0, %s6, %s4
  $region1: #{tpu_custom_call.1} parent=0
    #allocation2 [shape = 'u8[524288]{0}', space=vmem, size = 0x80000, scoped, tag = 'output window, operand 0']
    #allocation3 [shape = 's32[2]{0}', space=sflag, size = 0x8, scoped, tag = 'scoped memory for tpu_custom_call.1']
    %8 = vsyncpa [#allocation3], 0
    %s9 = scalar_lea.sflag [#allocation3], 1
    %10 = vsyncpa %s9, 0
    loop: start=0, step=1, limit=4
    $region2: #{tpu_custom_call.1} parent=1 // loop_pre_header
      _
    $region3: #{tpu_custom_call.1} parent=1 // loop_header
      %s12 = sphi 0, %s16
      %p13 = scmp.ge.s32.totalorder %s12, 4
      %s19 = sphi 0, %s31
      %s20 = sphi 0, %s27
      %s21 = sphi 0, %s19
      %s22 = sphi 0, %s20
      %s23 = sphi 0, %s21
      %s24 = sphi 0, %s22
      %s34 = sphi 0, %s36
      %s37 = sphi 0, %s34
      %s38 = sphi 0, %s37
      %s54 = sphi 0, %s38
      %s60 = sphi 0, %s62
      %s63 = sphi 0, %s60
      %s64 = sphi 0, %s63
      %s80 = sphi 0, %s64
      %s86 = sphi 0, %s88
      %s89 = sphi 0, %s86
      %s90 = sphi 0, %s89
      %s106 = sphi 0, %s90
      %s114 = sphi 0, %s116
      %s117 = sphi 0, %s114
      %s118 = sphi 0, %s117
      %s134 = sphi 0, %s118
    $region4: #{tpu_custom_call.1} parent=1 // loop_header_branch
      %15 = sbr.rel (%p13) target = $region8
    $region5: #{tpu_custom_call.1} parent=1 // loop_body
      %s17 = ssub.s32 %s12, 1
      %s18 = ssub.s32 %s12, 2
      %s25 = sadd.s32 1, %s20
      %p26 = scmp.ge.s32.totalorder %s25, 1
      %s27 = scalar_select %p26, 0, %s25
      %s28 = sadd.s32 1, %s19
      %s29 = scalar_select %p26, %s28, %s19
      %p30 = scmp.ge.s32.totalorder %s29, 2
      %s31 = scalar_select %p30, 0, %s29
      %s32 = ssub.s32 %s19, %s31
      %p33 = scmp.eq.s32.totalorder %s32, 0
      %s35 = sadd.s32 %s34, 1
      %s36 = scalar_select %p33, %s34, %s35
      %p39 = pneg %p33
      %p40 = scmp.eq.s32.totalorder %s12, 1
      %p41 = por %p39, %p40
      %p42 = scmp.ne.s32.totalorder %s34, %s37
      %p43 = scmp.eq.s32.totalorder %s12, 0
      %p44 = por %p42, %p43
      %p45 = scmp.ne.s32.totalorder %s34, %s37
      %p46 = scmp.eq.s32.totalorder %s17, 1
      %p47 = por %p45, %p46
      %p48 = scmp.ne.s32.totalorder %s37, %s38
      %p49 = scmp.eq.s32.totalorder %s17, 0
      %p50 = por %p48, %p49
      %p51 = scmp.ne.s32.totalorder %s37, %s38
      %p52 = scmp.eq.s32.totalorder %s18, 1
      %p53 = por %p51, %p52
      %p55 = scmp.ne.s32.totalorder %s38, %s54
      %p56 = scmp.eq.s32.totalorder %s18, 0
      %p57 = por %p55, %p56
      %s58 = ssub.s32 %s20, %s27
      %p59 = scmp.eq.s32.totalorder %s58, 0
      %s61 = sadd.s32 %s60, 1
      %s62 = scalar_select %p59, %s60, %s61
      %p65 = pneg %p59
      %p66 = scmp.eq.s32.totalorder %s12, 1
      %p67 = por %p65, %p66
      %p68 = scmp.ne.s32.totalorder %s60, %s63
      %p69 = scmp.eq.s32.totalorder %s12, 0
      %p70 = por %p68, %p69
      %p71 = scmp.ne.s32.totalorder %s60, %s63
      %p72 = scmp.eq.s32.totalorder %s17, 1
      %p73 = por %p71, %p72
      %p74 = scmp.ne.s32.totalorder %s63, %s64
      %p75 = scmp.eq.s32.totalorder %s17, 0
      %p76 = por %p74, %p75
      %p77 = scmp.ne.s32.totalorder %s63, %s64
      %p78 = scmp.eq.s32.totalorder %s18, 1
      %p79 = por %p77, %p78
      %p81 = scmp.ne.s32.totalorder %s64, %s80
      %p82 = scmp.eq.s32.totalorder %s18, 0
      %p83 = por %p81, %p82
      %s84 = ssub.s32 %s20, %s27
      %p85 = scmp.eq.s32.totalorder %s84, 0
      %s87 = sadd.s32 %s86, 1
      %s88 = scalar_select %p85, %s86, %s87
      %p91 = pneg %p85
      %p92 = scmp.eq.s32.totalorder %s12, 1
      %p93 = por %p91, %p92
      %p94 = scmp.ne.s32.totalorder %s86, %s89
      %p95 = scmp.eq.s32.totalorder %s12, 0
      %p96 = por %p94, %p95
      %p97 = scmp.ne.s32.totalorder %s86, %s89
      %p98 = scmp.eq.s32.totalorder %s17, 1
      %p99 = por %p97, %p98
      %p100 = scmp.ne.s32.totalorder %s89, %s90
      %p101 = scmp.eq.s32.totalorder %s17, 0
      %p102 = por %p100, %p101
      %p103 = scmp.ne.s32.totalorder %s89, %s90
      %p104 = scmp.eq.s32.totalorder %s18, 1
      %p105 = por %p103, %p104
      %p107 = scmp.ne.s32.totalorder %s90, %s106
      %p108 = scmp.eq.s32.totalorder %s18, 0
      %p109 = por %p107, %p108
      %s110 = ssub.s32 %s19, %s31
      %s111 = ssub.s32 %s20, %s27
      %s112 = sor.u32 %s110, %s111
      %p113 = scmp.eq.s32.totalorder %s112, 0
      %s115 = sadd.s32 %s114, 1
      %s116 = scalar_select %p113, %s114, %s115
      %p119 = pneg %p113
      %p120 = scmp.eq.s32.totalorder %s12, 1
      %p121 = por %p119, %p120
      %p122 = scmp.ne.s32.totalorder %s114, %s117
      %p123 = scmp.eq.s32.totalorder %s12, 0
      %p124 = por %p122, %p123
      %p125 = scmp.ne.s32.totalorder %s114, %s117
      %p126 = scmp.eq.s32.totalorder %s17, 1
      %p127 = por %p125, %p126
      %p128 = scmp.ne.s32.totalorder %s117, %s118
      %p129 = scmp.eq.s32.totalorder %s17, 0
      %p130 = por %p128, %p129
      %p131 = scmp.ne.s32.totalorder %s117, %s118
      %p132 = scmp.eq.s32.totalorder %s18, 1
      %p133 = por %p131, %p132
      %p135 = scmp.ne.s32.totalorder %s118, %s134
      %p136 = scmp.eq.s32.totalorder %s18, 0
      %p137 = por %p135, %p136
      %p138 = scmp.le.s32.totalorder 1, %s12
      %p139 = scmp.lt.s32.totalorder %s12, 3
      %p140 = pnand %p138, %p139
      %p141 = pneg %p140
      // Predicated region
      $region9: #{tpu_custom_call.1} parent=5 // pred_check
        _
      $region10: #{tpu_custom_call.1} parent=5 // pred_check_branch
        %143 = sbr.rel (%p140) target = $region12
      $region11: #{tpu_custom_call.1} parent=5 // pred_region
        %s144 = ssub.s32 %s12, 1
        // Predicated region
        $region13: #{tpu_custom_call.1} parent=11 // pred_check
          %p145 = pneg %p76
        $region14: #{tpu_custom_call.1} parent=11 // pred_check_branch
          %147 = sbr.rel (%p145) target = $region16
        $region15: #{tpu_custom_call.1} parent=11 // pred_region
          %p148 = scmp.lt.s32.totalorder %s22, 0
          %s149 = scalar_select %p148, %s22, 0
          %s150 = smul.addr %s149, 4
          %s151 = scalar_lea.vmem %s1, %s150
        $region16: #{tpu_custom_call.1} parent=11 // pred_fallthru
          _
        // Predicated region
        $region17: #{tpu_custom_call.1} parent=11 // pred_check
          %p152 = pneg %p102
        $region18: #{tpu_custom_call.1} parent=11 // pred_check_branch
          %154 = sbr.rel (%p152) target = $region20
        $region19: #{tpu_custom_call.1} parent=11 // pred_region
          %p155 = scmp.lt.s32.totalorder %s22, 0
          %s156 = scalar_select %p155, %s22, 0
          %s157 = scalar_lea.vmem %s2, %s156
        $region20: #{tpu_custom_call.1} parent=11 // pred_fallthru
          _
      $region12: #{tpu_custom_call.1} parent=5 // pred_fallthru
        _
      %p158 = scmp.lt.s32.totalorder %s12, 2
      // Predicated region
      $region21: #{tpu_custom_call.1} parent=5 // pred_check
        %p159 = pneg %p158
      $region22: #{tpu_custom_call.1} parent=5 // pred_check_branch
        %161 = sbr.rel (%p159) target = $region24
      $region23: #{tpu_custom_call.1} parent=5 // pred_region
        // Predicated region
        $region25: #{tpu_custom_call.1} parent=23 // pred_check
          %p162 = pneg %p44
        $region26: #{tpu_custom_call.1} parent=23 // pred_check_branch
          %164 = sbr.rel (%p162) target = $region28
        $region27: #{tpu_custom_call.1} parent=23 // pred_region
          %p165 = scmp.lt.s32.totalorder %s19, 1
          %s166 = scalar_select %p165, %s19, 1
          %s167 = smul.addr %s166, 136
          %s168 = smul.addr %s167, 4
          %s169 = scalar_lea.vmem %s0, %s168
        $region28: #{tpu_custom_call.1} parent=23 // pred_fallthru
          _
      $region24: #{tpu_custom_call.1} parent=5 // pred_fallthru
        _
      %p170 = scmp.le.s32.totalorder 1, %s12
      %p171 = scmp.lt.s32.totalorder %s12, 3
      %p172 = pnand %p170, %p171
      %p173 = pneg %p172
      // Predicated region
      $region29: #{tpu_custom_call.1} parent=5 // pred_check
        _
      $region30: #{tpu_custom_call.1} parent=5 // pred_check_branch
        %175 = sbr.rel (%p172) target = $region32
      $region31: #{tpu_custom_call.1} parent=5 // pred_region
        %s176 = ssub.s32 %s12, 1
        %p177 = scmp.lt.s32.totalorder %s21, 1
        %s178 = scalar_select %p177, %s21, 1
        %s179 = smul.addr %s178, 136
        %s180 = smul.addr %s179, 4
        %s181 = scalar_lea.vmem %s0, %s180
        %p182 = pneg %p50
        %p183 = pneg %p47
        %p184 = scmp.lt.s32.totalorder %s22, 0
        %s185 = scalar_select %p184, %s22, 0
        %s186 = smul.addr %s185, 4
        %s187 = scalar_lea.vmem %s1, %s186
        %p188 = pneg %p76
        %p189 = pneg %p73
        %p190 = scmp.lt.s32.totalorder %s22, 0
        %s191 = scalar_select %p190, %s22, 0
        %s192 = scalar_lea.vmem %s2, %s191
        %p193 = pneg %p102
        %p194 = pneg %p99
        %p195 = pneg %p130
        %p196 = pneg %p127
        %s197 = sand.u32 %s117, 1
        %s198 = scalar_lea.sflag [#allocation3], %s197
        %s199 = sand.u32 %s117, 1
        %s200 = smul.addr %s199, 512
        %s201 = scalar_lea.vmem [#allocation2], %s200
        %p202 = scmp.lt.s32.totalorder %s21, 1
        %s203 = scalar_select %p202, %s21, 1
        %s204 = smul.addr %s203, 136
        %s205 = smul.addr %s204, 4
        %s206 = scalar_lea.vmem %s0, %s205
        %p207 = scmp.lt.s32.totalorder %s22, 0
        %s208 = scalar_select %p207, %s22, 0
        %s209 = smul.addr %s208, 4
        %s210 = scalar_lea.vmem %s1, %s209
        %p211 = scmp.lt.s32.totalorder %s22, 0
        %s212 = scalar_select %p211, %s22, 0
        %s213 = scalar_lea.vmem %s2, %s212
        %v215 = vld [vmem:[%s206] sm:$0xf]
        %v216 = vld [vmem:[%s206 + $0x4] sm:$0xf]
        %v217 = vld [vmem:[%s206 + $0x8] sm:$0xf]
        %v218 = vld [vmem:[%s206 + $0xc] sm:$0xf]
        %v219 = vld [vmem:[%s206 + $0x10] sm:$0xf]
        %v220 = vld [vmem:[%s206 + $0x14] sm:$0xf]
        %v221 = vld [vmem:[%s206 + $0x18] sm:$0xf]
        %v222 = vld [vmem:[%s206 + $0x1c] sm:$0xf]
        %v223 = vld [vmem:[%s206 + $0x20] sm:$0xf]
        %v224 = vld [vmem:[%s206 + $0x24] sm:$0xf]
        %v225 = vld [vmem:[%s206 + $0x28] sm:$0xf]
        %v226 = vld [vmem:[%s206 + $0x2c] sm:$0xf]
        %v227 = vld [vmem:[%s206 + $0x30] sm:$0xf]
        %v228 = vld [vmem:[%s206 + $0x34] sm:$0xf]
        %v229 = vld [vmem:[%s206 + $0x38] sm:$0xf]
        %v230 = vld [vmem:[%s206 + $0x3c] sm:$0xf]
        %v231 = vld [vmem:[%s206 + $0x40] sm:$0xf]
        %v232 = vld [vmem:[%s206 + $0x44] sm:$0xf]
        %v233 = vld [vmem:[%s206 + $0x48] sm:$0xf]
        %v234 = vld [vmem:[%s206 + $0x4c] sm:$0xf]
        %v235 = vld [vmem:[%s206 + $0x50] sm:$0xf]
        %v236 = vld [vmem:[%s206 + $0x54] sm:$0xf]
        %v237 = vld [vmem:[%s206 + $0x58] sm:$0xf]
        %v238 = vld [vmem:[%s206 + $0x5c] sm:$0xf]
        %v239 = vld [vmem:[%s206 + $0x60] sm:$0xf]
        %v240 = vld [vmem:[%s206 + $0x64] sm:$0xf]
        %v241 = vld [vmem:[%s206 + $0x68] sm:$0xf]
        %v242 = vld [vmem:[%s206 + $0x6c] sm:$0xf]
        %v243 = vld [vmem:[%s206 + $0x70] sm:$0xf]
        %v244 = vld [vmem:[%s206 + $0x74] sm:$0xf]
        %v245 = vld [vmem:[%s206 + $0x78] sm:$0xf]
        %v246 = vld [vmem:[%s206 + $0x7c] sm:$0xf]
        %v247 = vld [vmem:[%s206 + $0x80] sm:$0xf]
        %v248 = vld [vmem:[%s206 + $0x84] sm:$0xf]
        %v249 = vld [vmem:[%s206 + $0x88] sm:$0xf]
        %v250 = vld [vmem:[%s206 + $0x8c] sm:$0xf]
        %v251 = vld [vmem:[%s206 + $0x90] sm:$0xf]
        %v252 = vld [vmem:[%s206 + $0x94] sm:$0xf]
        %v253 = vld [vmem:[%s206 + $0x98] sm:$0xf]
        %v254 = vld [vmem:[%s206 + $0x9c] sm:$0xf]
        %v255 = vld [vmem:[%s206 + $0xa0] sm:$0xf]
        %v256 = vld [vmem:[%s206 + $0xa4] sm:$0xf]
        %v257 = vld [vmem:[%s206 + $0xa8] sm:$0xf]
        %v258 = vld [vmem:[%s206 + $0xac] sm:$0xf]
        %v259 = vld [vmem:[%s206 + $0xb0] sm:$0xf]
        %v260 = vld [vmem:[%s206 + $0xb4] sm:$0xf]
        %v261 = vld [vmem:[%s206 + $0xb8] sm:$0xf]
        %v262 = vld [vmem:[%s206 + $0xbc] sm:$0xf]
        %v263 = vld [vmem:[%s206 + $0xc0] sm:$0xf]
        %v264 = vld [vmem:[%s206 + $0xc4] sm:$0xf]
        %v265 = vld [vmem:[%s206 + $0xc8] sm:$0xf]
        %v266 = vld [vmem:[%s206 + $0xcc] sm:$0xf]
        %v267 = vld [vmem:[%s206 + $0xd0] sm:$0xf]
        %v268 = vld [vmem:[%s206 + $0xd4] sm:$0xf]
        %v269 = vld [vmem:[%s206 + $0xd8] sm:$0xf]
        %v270 = vld [vmem:[%s206 + $0xdc] sm:$0xf]
        %v271 = vld [vmem:[%s206 + $0xe0] sm:$0xf]
        %v272 = vld [vmem:[%s206 + $0xe4] sm:$0xf]
        %v273 = vld [vmem:[%s206 + $0xe8] sm:$0xf]
        %v274 = vld [vmem:[%s206 + $0xec] sm:$0xf]
        %v275 = vld [vmem:[%s206 + $0xf0] sm:$0xf]
        %v276 = vld [vmem:[%s206 + $0xf4] sm:$0xf]
        %v277 = vld [vmem:[%s206 + $0xf8] sm:$0xf]
        %v278 = vld [vmem:[%s206 + $0xfc] sm:$0xf]
        %v279 = vld [vmem:[%s206 + $0x100] sm:$0xf]
        %v280 = vld [vmem:[%s206 + $0x104] sm:$0xf]
        %v281 = vld [vmem:[%s206 + $0x108] sm:$0xf]
        %v282 = vld [vmem:[%s206 + $0x10c] sm:$0xf]
        %v283 = vld [vmem:[%s206 + $0x110] sm:$0xf]
        %v284 = vld [vmem:[%s206 + $0x114] sm:$0xf]
        %v285 = vld [vmem:[%s206 + $0x118] sm:$0xf]
        %v286 = vld [vmem:[%s206 + $0x11c] sm:$0xf]
        %v287 = vld [vmem:[%s206 + $0x120] sm:$0xf]
        %v288 = vld [vmem:[%s206 + $0x124] sm:$0xf]
        %v289 = vld [vmem:[%s206 + $0x128] sm:$0xf]
        %v290 = vld [vmem:[%s206 + $0x12c] sm:$0xf]
        %v291 = vld [vmem:[%s206 + $0x130] sm:$0xf]
        %v292 = vld [vmem:[%s206 + $0x134] sm:$0xf]
        %v293 = vld [vmem:[%s206 + $0x138] sm:$0xf]
        %v294 = vld [vmem:[%s206 + $0x13c] sm:$0xf]
        %v295 = vld [vmem:[%s206 + $0x140] sm:$0xf]
        %v296 = vld [vmem:[%s206 + $0x144] sm:$0xf]
        %v297 = vld [vmem:[%s206 + $0x148] sm:$0xf]
        %v298 = vld [vmem:[%s206 + $0x14c] sm:$0xf]
        %v299 = vld [vmem:[%s206 + $0x150] sm:$0xf]
        %v300 = vld [vmem:[%s206 + $0x154] sm:$0xf]
        %v301 = vld [vmem:[%s206 + $0x158] sm:$0xf]
        %v302 = vld [vmem:[%s206 + $0x15c] sm:$0xf]
        %v303 = vld [vmem:[%s206 + $0x160] sm:$0xf]
        %v304 = vld [vmem:[%s206 + $0x164] sm:$0xf]
        %v305 = vld [vmem:[%s206 + $0x168] sm:$0xf]
        %v306 = vld [vmem:[%s206 + $0x16c] sm:$0xf]
        %v307 = vld [vmem:[%s206 + $0x170] sm:$0xf]
        %v308 = vld [vmem:[%s206 + $0x174] sm:$0xf]
        %v309 = vld [vmem:[%s206 + $0x178] sm:$0xf]
        %v310 = vld [vmem:[%s206 + $0x17c] sm:$0xf]
        %v311 = vld [vmem:[%s206 + $0x180] sm:$0xf]
        %v312 = vld [vmem:[%s206 + $0x184] sm:$0xf]
        %v313 = vld [vmem:[%s206 + $0x188] sm:$0xf]
        %v314 = vld [vmem:[%s206 + $0x18c] sm:$0xf]
        %v315 = vld [vmem:[%s206 + $0x190] sm:$0xf]
        %v316 = vld [vmem:[%s206 + $0x194] sm:$0xf]
        %v317 = vld [vmem:[%s206 + $0x198] sm:$0xf]
        %v318 = vld [vmem:[%s206 + $0x19c] sm:$0xf]
        %v319 = vld [vmem:[%s206 + $0x1a0] sm:$0xf]
        %v320 = vld [vmem:[%s206 + $0x1a4] sm:$0xf]
        %v321 = vld [vmem:[%s206 + $0x1a8] sm:$0xf]
        %v322 = vld [vmem:[%s206 + $0x1ac] sm:$0xf]
        %v323 = vld [vmem:[%s206 + $0x1b0] sm:$0xf]
        %v324 = vld [vmem:[%s206 + $0x1b4] sm:$0xf]
        %v325 = vld [vmem:[%s206 + $0x1b8] sm:$0xf]
        %v326 = vld [vmem:[%s206 + $0x1bc] sm:$0xf]
        %v327 = vld [vmem:[%s206 + $0x1c0] sm:$0xf]
        %v328 = vld [vmem:[%s206 + $0x1c4] sm:$0xf]
        %v329 = vld [vmem:[%s206 + $0x1c8] sm:$0xf]
        %v330 = vld [vmem:[%s206 + $0x1cc] sm:$0xf]
        %v331 = vld [vmem:[%s206 + $0x1d0] sm:$0xf]
        %v332 = vld [vmem:[%s206 + $0x1d4] sm:$0xf]
        %v333 = vld [vmem:[%s206 + $0x1d8] sm:$0xf]
        %v334 = vld [vmem:[%s206 + $0x1dc] sm:$0xf]
        %v335 = vld [vmem:[%s206 + $0x1e0] sm:$0xf]
        %v336 = vld [vmem:[%s206 + $0x1e4] sm:$0xf]
        %v337 = vld [vmem:[%s206 + $0x1e8] sm:$0xf]
        %v338 = vld [vmem:[%s206 + $0x1ec] sm:$0xf]
        %v339 = vld [vmem:[%s206 + $0x1f0] sm:$0xf]
        %v340 = vld [vmem:[%s206 + $0x1f4] sm:$0xf]
        %v341 = vld [vmem:[%s206 + $0x1f8] sm:$0xf]
        %v342 = vld [vmem:[%s206 + $0x1fc] sm:$0xf]
        %v343 = vld [vmem:[%s210] sm:$0xf]
        %v344 = vld [vmem:[%s210 + $0x4] sm:$0x1]
        %s345 = scalar_lea.vmem %s206, 16
        %v346 = vld [vmem:[%s345] sm:$0xf]
        %v347 = vld [vmem:[%s345 + $0x4] sm:$0xf]
        %v348 = vld [vmem:[%s345 + $0x8] sm:$0xf]
        %v349 = vld [vmem:[%s345 + $0xc] sm:$0xf]
        %v350 = vld [vmem:[%s345 + $0x10] sm:$0xf]
        %v351 = vld [vmem:[%s345 + $0x14] sm:$0xf]
        %v352 = vld [vmem:[%s345 + $0x18] sm:$0xf]
        %v353 = vld [vmem:[%s345 + $0x1c] sm:$0xf]
        %v354 = vld [vmem:[%s345 + $0x20] sm:$0xf]
        %v355 = vld [vmem:[%s345 + $0x24] sm:$0xf]
        %v356 = vld [vmem:[%s345 + $0x28] sm:$0xf]
        %v357 = vld [vmem:[%s345 + $0x2c] sm:$0xf]
        %v358 = vld [vmem:[%s345 + $0x30] sm:$0xf]
        %v359 = vld [vmem:[%s345 + $0x34] sm:$0xf]
        %v360 = vld [vmem:[%s345 + $0x38] sm:$0xf]
        %v361 = vld [vmem:[%s345 + $0x3c] sm:$0xf]
        %v362 = vld [vmem:[%s345 + $0x40] sm:$0xf]
        %v363 = vld [vmem:[%s345 + $0x44] sm:$0xf]
        %v364 = vld [vmem:[%s345 + $0x48] sm:$0xf]
        %v365 = vld [vmem:[%s345 + $0x4c] sm:$0xf]
        %v366 = vld [vmem:[%s345 + $0x50] sm:$0xf]
        %v367 = vld [vmem:[%s345 + $0x54] sm:$0xf]
        %v368 = vld [vmem:[%s345 + $0x58] sm:$0xf]
        %v369 = vld [vmem:[%s345 + $0x5c] sm:$0xf]
        %v370 = vld [vmem:[%s345 + $0x60] sm:$0xf]
        %v371 = vld [vmem:[%s345 + $0x64] sm:$0xf]
        %v372 = vld [vmem:[%s345 + $0x68] sm:$0xf]
        %v373 = vld [vmem:[%s345 + $0x6c] sm:$0xf]
        %v374 = vld [vmem:[%s345 + $0x70] sm:$0xf]
        %v375 = vld [vmem:[%s345 + $0x74] sm:$0xf]
        %v376 = vld [vmem:[%s345 + $0x78] sm:$0xf]
        %v377 = vld [vmem:[%s345 + $0x7c] sm:$0xf]
        %v378 = vld [vmem:[%s345 + $0x80] sm:$0xf]
        %v379 = vld [vmem:[%s345 + $0x84] sm:$0xf]
        %v380 = vld [vmem:[%s345 + $0x88] sm:$0xf]
        %v381 = vld [vmem:[%s345 + $0x8c] sm:$0xf]
        %v382 = vld [vmem:[%s345 + $0x90] sm:$0xf]
        %v383 = vld [vmem:[%s345 + $0x94] sm:$0xf]
        %v384 = vld [vmem:[%s345 + $0x98] sm:$0xf]
        %v385 = vld [vmem:[%s345 + $0x9c] sm:$0xf]
        %v386 = vld [vmem:[%s345 + $0xa0] sm:$0xf]
        %v387 = vld [vmem:[%s345 + $0xa4] sm:$0xf]
        %v388 = vld [vmem:[%s345 + $0xa8] sm:$0xf]
        %v389 = vld [vmem:[%s345 + $0xac] sm:$0xf]
        %v390 = vld [vmem:[%s345 + $0xb0] sm:$0xf]
        %v391 = vld [vmem:[%s345 + $0xb4] sm:$0xf]
        %v392 = vld [vmem:[%s345 + $0xb8] sm:$0xf]
        %v393 = vld [vmem:[%s345 + $0xbc] sm:$0xf]
        %v394 = vld [vmem:[%s345 + $0xc0] sm:$0xf]
        %v395 = vld [vmem:[%s345 + $0xc4] sm:$0xf]
        %v396 = vld [vmem:[%s345 + $0xc8] sm:$0xf]
        %v397 = vld [vmem:[%s345 + $0xcc] sm:$0xf]
        %v398 = vld [vmem:[%s345 + $0xd0] sm:$0xf]
        %v399 = vld [vmem:[%s345 + $0xd4] sm:$0xf]
        %v400 = vld [vmem:[%s345 + $0xd8] sm:$0xf]
        %v401 = vld [vmem:[%s345 + $0xdc] sm:$0xf]
        %v402 = vld [vmem:[%s345 + $0xe0] sm:$0xf]
        %v403 = vld [vmem:[%s345 + $0xe4] sm:$0xf]
        %v404 = vld [vmem:[%s345 + $0xe8] sm:$0xf]
        %v405 = vld [vmem:[%s345 + $0xec] sm:$0xf]
        %v406 = vld [vmem:[%s345 + $0xf0] sm:$0xf]
        %v407 = vld [vmem:[%s345 + $0xf4] sm:$0xf]
        %v408 = vld [vmem:[%s345 + $0xf8] sm:$0xf]
        %v409 = vld [vmem:[%s345 + $0xfc] sm:$0xf]
        %v410 = vld [vmem:[%s345 + $0x100] sm:$0xf]
        %v411 = vld [vmem:[%s345 + $0x104] sm:$0xf]
        %v412 = vld [vmem:[%s345 + $0x108] sm:$0xf]
        %v413 = vld [vmem:[%s345 + $0x10c] sm:$0xf]
        %v414 = vld [vmem:[%s345 + $0x110] sm:$0xf]
        %v415 = vld [vmem:[%s345 + $0x114] sm:$0xf]
        %v416 = vld [vmem:[%s345 + $0x118] sm:$0xf]
        %v417 = vld [vmem:[%s345 + $0x11c] sm:$0xf]
        %v418 = vld [vmem:[%s345 + $0x120] sm:$0xf]
        %v419 = vld [vmem:[%s345 + $0x124] sm:$0xf]
        %v420 = vld [vmem:[%s345 + $0x128] sm:$0xf]
        %v421 = vld [vmem:[%s345 + $0x12c] sm:$0xf]
        %v422 = vld [vmem:[%s345 + $0x130] sm:$0xf]
        %v423 = vld [vmem:[%s345 + $0x134] sm:$0xf]
        %v424 = vld [vmem:[%s345 + $0x138] sm:$0xf]
        %v425 = vld [vmem:[%s345 + $0x13c] sm:$0xf]
        %v426 = vld [vmem:[%s345 + $0x140] sm:$0xf]
        %v427 = vld [vmem:[%s345 + $0x144] sm:$0xf]
        %v428 = vld [vmem:[%s345 + $0x148] sm:$0xf]
        %v429 = vld [vmem:[%s345 + $0x14c] sm:$0xf]
        %v430 = vld [vmem:[%s345 + $0x150] sm:$0xf]
        %v431 = vld [vmem:[%s345 + $0x154] sm:$0xf]
        %v432 = vld [vmem:[%s345 + $0x158] sm:$0xf]
        %v433 = vld [vmem:[%s345 + $0x15c] sm:$0xf]
        %v434 = vld [vmem:[%s345 + $0x160] sm:$0xf]
        %v435 = vld [vmem:[%s345 + $0x164] sm:$0xf]
        %v436 = vld [vmem:[%s345 + $0x168] sm:$0xf]
        %v437 = vld [vmem:[%s345 + $0x16c] sm:$0xf]
        %v438 = vld [vmem:[%s345 + $0x170] sm:$0xf]
        %v439 = vld [vmem:[%s345 + $0x174] sm:$0xf]
        %v440 = vld [vmem:[%s345 + $0x178] sm:$0xf]
        %v441 = vld [vmem:[%s345 + $0x17c] sm:$0xf]
        %v442 = vld [vmem:[%s345 + $0x180] sm:$0xf]
        %v443 = vld [vmem:[%s345 + $0x184] sm:$0xf]
        %v444 = vld [vmem:[%s345 + $0x188] sm:$0xf]
        %v445 = vld [vmem:[%s345 + $0x18c] sm:$0xf]
        %v446 = vld [vmem:[%s345 + $0x190] sm:$0xf]
        %v447 = vld [vmem:[%s345 + $0x194] sm:$0xf]
        %v448 = vld [vmem:[%s345 + $0x198] sm:$0xf]
        %v449 = vld [vmem:[%s345 + $0x19c] sm:$0xf]
        %v450 = vld [vmem:[%s345 + $0x1a0] sm:$0xf]
        %v451 = vld [vmem:[%s345 + $0x1a4] sm:$0xf]
        %v452 = vld [vmem:[%s345 + $0x1a8] sm:$0xf]
        %v453 = vld [vmem:[%s345 + $0x1ac] sm:$0xf]
        %v454 = vld [vmem:[%s345 + $0x1b0] sm:$0xf]
        %v455 = vld [vmem:[%s345 + $0x1b4] sm:$0xf]
        %v456 = vld [vmem:[%s345 + $0x1b8] sm:$0xf]
        %v457 = vld [vmem:[%s345 + $0x1bc] sm:$0xf]
        %v458 = vld [vmem:[%s345 + $0x1c0] sm:$0xf]
        %v459 = vld [vmem:[%s345 + $0x1c4] sm:$0xf]
        %v460 = vld [vmem:[%s345 + $0x1c8] sm:$0xf]
        %v461 = vld [vmem:[%s345 + $0x1cc] sm:$0xf]
        %v462 = vld [vmem:[%s345 + $0x1d0] sm:$0xf]
        %v463 = vld [vmem:[%s345 + $0x1d4] sm:$0xf]
        %v464 = vld [vmem:[%s345 + $0x1d8] sm:$0xf]
        %v465 = vld [vmem:[%s345 + $0x1dc] sm:$0xf]
        %v466 = vld [vmem:[%s345 + $0x1e0] sm:$0xf]
        %v467 = vld [vmem:[%s345 + $0x1e4] sm:$0xf]
        %v468 = vld [vmem:[%s345 + $0x1e8] sm:$0xf]
        %v469 = vld [vmem:[%s345 + $0x1ec] sm:$0xf]
        %v470 = vld [vmem:[%s345 + $0x1f0] sm:$0xf]
        %v471 = vld [vmem:[%s345 + $0x1f4] sm:$0xf]
        %v472 = vld [vmem:[%s345 + $0x1f8] sm:$0xf]
        %v473 = vld [vmem:[%s345 + $0x1fc] sm:$0xf]
        %s474 = scalar_lea.vmem %s210, 8
        %v475 = vld [vmem:[%s474] sm:$0xf]
        %v476 = vld [vmem:[%s474 + $0x4] sm:$0x1]
        %v605 = vunpack.c.l.b16 %v346
        %v606 = vunpack.c.l.b16 %v347
        %v607 = vunpack.c.l.b16 %v348
        %v608 = vunpack.c.l.b16 %v349
        %v609 = vunpack.c.l.b16 %v350
        %v610 = vunpack.c.l.b16 %v351
        %v611 = vunpack.c.l.b16 %v352
        %v612 = vunpack.c.l.b16 %v353
        %v613 = vunpack.c.l.b16 %v354
        %v614 = vunpack.c.l.b16 %v355
        %v615 = vunpack.c.l.b16 %v356
        %v616 = vunpack.c.l.b16 %v357
        %v617 = vunpack.c.l.b16 %v358
        %v618 = vunpack.c.l.b16 %v359
        %v619 = vunpack.c.l.b16 %v360
        %v620 = vunpack.c.l.b16 %v361
        %v621 = vunpack.c.l.b16 %v362
        %v622 = vunpack.c.l.b16 %v363
        %v623 = vunpack.c.l.b16 %v364
        %v624 = vunpack.c.l.b16 %v365
        %v625 = vunpack.c.l.b16 %v366
        %v626 = vunpack.c.l.b16 %v367
        %v627 = vunpack.c.l.b16 %v368
        %v628 = vunpack.c.l.b16 %v369
        %v629 = vunpack.c.l.b16 %v370
        %v630 = vunpack.c.l.b16 %v371
        %v631 = vunpack.c.l.b16 %v372
        %v632 = vunpack.c.l.b16 %v373
        %v633 = vunpack.c.l.b16 %v374
        %v634 = vunpack.c.l.b16 %v375
        %v635 = vunpack.c.l.b16 %v376
        %v636 = vunpack.c.l.b16 %v377
        %v637 = vunpack.c.l.b16 %v378
        %v638 = vunpack.c.l.b16 %v379
        %v639 = vunpack.c.l.b16 %v380
        %v640 = vunpack.c.l.b16 %v381
        %v641 = vunpack.c.l.b16 %v382
        %v642 = vunpack.c.l.b16 %v383
        %v643 = vunpack.c.l.b16 %v384
        %v644 = vunpack.c.l.b16 %v385
        %v645 = vunpack.c.l.b16 %v386
        %v646 = vunpack.c.l.b16 %v387
        %v647 = vunpack.c.l.b16 %v388
        %v648 = vunpack.c.l.b16 %v389
        %v649 = vunpack.c.l.b16 %v390
        %v650 = vunpack.c.l.b16 %v391
        %v651 = vunpack.c.l.b16 %v392
        %v652 = vunpack.c.l.b16 %v393
        %v653 = vunpack.c.l.b16 %v394
        %v654 = vunpack.c.l.b16 %v395
        %v655 = vunpack.c.l.b16 %v396
        %v656 = vunpack.c.l.b16 %v397
        %v657 = vunpack.c.l.b16 %v398
        %v658 = vunpack.c.l.b16 %v399
        %v659 = vunpack.c.l.b16 %v400
        %v660 = vunpack.c.l.b16 %v401
        %v661 = vunpack.c.l.b16 %v402
        %v662 = vunpack.c.l.b16 %v403
        %v663 = vunpack.c.l.b16 %v404
        %v664 = vunpack.c.l.b16 %v405
        %v665 = vunpack.c.l.b16 %v406
        %v666 = vunpack.c.l.b16 %v407
        %v667 = vunpack.c.l.b16 %v408
        %v668 = vunpack.c.l.b16 %v409
        %v669 = vunpack.c.l.b16 %v410
        %v670 = vunpack.c.l.b16 %v411
        %v671 = vunpack.c.l.b16 %v412
        %v672 = vunpack.c.l.b16 %v413
        %v673 = vunpack.c.l.b16 %v414
        %v674 = vunpack.c.l.b16 %v415
        %v675 = vunpack.c.l.b16 %v416
        %v676 = vunpack.c.l.b16 %v417
        %v677 = vunpack.c.l.b16 %v418
        %v678 = vunpack.c.l.b16 %v419
        %v679 = vunpack.c.l.b16 %v420
        %v680 = vunpack.c.l.b16 %v421
        %v681 = vunpack.c.l.b16 %v422
        %v682 = vunpack.c.l.b16 %v423
        %v683 = vunpack.c.l.b16 %v424
        %v684 = vunpack.c.l.b16 %v425
        %v685 = vunpack.c.l.b16 %v426
        %v686 = vunpack.c.l.b16 %v427
        %v687 = vunpack.c.l.b16 %v428
        %v688 = vunpack.c.l.b16 %v429
        %v689 = vunpack.c.l.b16 %v430
        %v690 = vunpack.c.l.b16 %v431
        %v691 = vunpack.c.l.b16 %v432
        %v692 = vunpack.c.l.b16 %v433
        %v693 = vunpack.c.l.b16 %v434
        %v694 = vunpack.c.l.b16 %v435
        %v695 = vunpack.c.l.b16 %v436
        %v696 = vunpack.c.l.b16 %v437
        %v697 = vunpack.c.l.b16 %v438
        %v698 = vunpack.c.l.b16 %v439
        %v699 = vunpack.c.l.b16 %v440
        %v700 = vunpack.c.l.b16 %v441
        %v701 = vunpack.c.l.b16 %v442
        %v702 = vunpack.c.l.b16 %v443
        %v703 = vunpack.c.l.b16 %v444
        %v704 = vunpack.c.l.b16 %v445
        %v705 = vunpack.c.l.b16 %v446
        %v706 = vunpack.c.l.b16 %v447
        %v707 = vunpack.c.l.b16 %v448
        %v708 = vunpack.c.l.b16 %v449
        %v709 = vunpack.c.l.b16 %v450
        %v710 = vunpack.c.l.b16 %v451
        %v711 = vunpack.c.l.b16 %v452
        %v712 = vunpack.c.l.b16 %v453
        %v713 = vunpack.c.l.b16 %v454
        %v714 = vunpack.c.l.b16 %v455
        %v715 = vunpack.c.l.b16 %v456
        %v716 = vunpack.c.l.b16 %v457
        %v717 = vunpack.c.l.b16 %v458
        %v718 = vunpack.c.l.b16 %v459
        %v719 = vunpack.c.l.b16 %v460
        %v720 = vunpack.c.l.b16 %v461
        %v721 = vunpack.c.l.b16 %v462
        %v722 = vunpack.c.l.b16 %v463
        %v723 = vunpack.c.l.b16 %v464
        %v724 = vunpack.c.l.b16 %v465
        %v725 = vunpack.c.l.b16 %v466
        %v726 = vunpack.c.l.b16 %v467
        %v727 = vunpack.c.l.b16 %v468
        %v728 = vunpack.c.l.b16 %v469
        %v729 = vunpack.c.l.b16 %v470
        %v730 = vunpack.c.l.b16 %v471
        %v731 = vunpack.c.l.b16 %v472
        %v732 = vunpack.c.l.b16 %v473
        %v733 = vpack.c.b16 %v606, %v605
        %v734 = vpack.c.b16 %v608, %v607
        %v735 = vpack.c.b16 %v610, %v609
        %v736 = vpack.c.b16 %v612, %v611
        %v737 = vpack.c.b16 %v614, %v613
        %v738 = vpack.c.b16 %v616, %v615
        %v739 = vpack.c.b16 %v618, %v617
        %v740 = vpack.c.b16 %v620, %v619
        %v741 = vpack.c.b16 %v622, %v621
        %v742 = vpack.c.b16 %v624, %v623
        %v743 = vpack.c.b16 %v626, %v625
        %v744 = vpack.c.b16 %v628, %v627
        %v745 = vpack.c.b16 %v630, %v629
        %v746 = vpack.c.b16 %v632, %v631
        %v747 = vpack.c.b16 %v634, %v633
        %v748 = vpack.c.b16 %v636, %v635
        %v749 = vpack.c.b16 %v638, %v637
        %v750 = vpack.c.b16 %v640, %v639
        %v751 = vpack.c.b16 %v642, %v641
        %v752 = vpack.c.b16 %v644, %v643
        %v753 = vpack.c.b16 %v646, %v645
        %v754 = vpack.c.b16 %v648, %v647
        %v755 = vpack.c.b16 %v650, %v649
        %v756 = vpack.c.b16 %v652, %v651
        %v757 = vpack.c.b16 %v654, %v653
        %v758 = vpack.c.b16 %v656, %v655
        %v759 = vpack.c.b16 %v658, %v657
        %v760 = vpack.c.b16 %v660, %v659
        %v761 = vpack.c.b16 %v662, %v661
        %v762 = vpack.c.b16 %v664, %v663
        %v763 = vpack.c.b16 %v666, %v665
        %v764 = vpack.c.b16 %v668, %v667
        %v765 = vpack.c.b16 %v670, %v669
        %v766 = vpack.c.b16 %v672, %v671
        %v767 = vpack.c.b16 %v674, %v673
        %v768 = vpack.c.b16 %v676, %v675
        %v769 = vpack.c.b16 %v678, %v677
        %v770 = vpack.c.b16 %v680, %v679
        %v771 = vpack.c.b16 %v682, %v681
        %v772 = vpack.c.b16 %v684, %v683
        %v773 = vpack.c.b16 %v686, %v685
        %v774 = vpack.c.b16 %v688, %v687
        %v775 = vpack.c.b16 %v690, %v689
        %v776 = vpack.c.b16 %v692, %v691
        %v777 = vpack.c.b16 %v694, %v693
        %v778 = vpack.c.b16 %v696, %v695
        %v779 = vpack.c.b16 %v698, %v697
        %v780 = vpack.c.b16 %v700, %v699
        %v781 = vpack.c.b16 %v702, %v701
        %v782 = vpack.c.b16 %v704, %v703
        %v783 = vpack.c.b16 %v706, %v705
        %v784 = vpack.c.b16 %v708, %v707
        %v785 = vpack.c.b16 %v710, %v709
        %v786 = vpack.c.b16 %v712, %v711
        %v787 = vpack.c.b16 %v714, %v713
        %v788 = vpack.c.b16 %v716, %v715
        %v789 = vpack.c.b16 %v718, %v717
        %v790 = vpack.c.b16 %v720, %v719
        %v791 = vpack.c.b16 %v722, %v721
        %v792 = vpack.c.b16 %v724, %v723
        %v793 = vpack.c.b16 %v726, %v725
        %v794 = vpack.c.b16 %v728, %v727
        %v795 = vpack.c.b16 %v730, %v729
        %v796 = vpack.c.b16 %v732, %v731
        %v799 = vunpack.c.l.b16 %v475
        %v800 = vunpack.c.l.b16 %v476
        %v801 = vpack.c.b16 %v800, %v799
        %vm802 = vcmask 72704
        %v804 = vsel %vm802, %v733, 0
        %v807 = vsel %vm802, %v734, 0
        %v810 = vsel %vm802, %v735, 0
        %v813 = vsel %vm802, %v736, 0
        %v816 = vsel %vm802, %v737, 0
        %v819 = vsel %vm802, %v738, 0
        %v822 = vsel %vm802, %v739, 0
        %v825 = vsel %vm802, %v740, 0
        %v828 = vsel %vm802, %v741, 0
        %v831 = vsel %vm802, %v742, 0
        %v834 = vsel %vm802, %v743, 0
        %v837 = vsel %vm802, %v744, 0
        %v840 = vsel %vm802, %v745, 0
        %v843 = vsel %vm802, %v746, 0
        %v846 = vsel %vm802, %v747, 0
        %v849 = vsel %vm802, %v748, 0
        %v852 = vsel %vm802, %v749, 0
        %v855 = vsel %vm802, %v750, 0
        %v858 = vsel %vm802, %v751, 0
        %v861 = vsel %vm802, %v752, 0
        %v864 = vsel %vm802, %v753, 0
        %v867 = vsel %vm802, %v754, 0
        %v870 = vsel %vm802, %v755, 0
        %v873 = vsel %vm802, %v756, 0
        %v876 = vsel %vm802, %v757, 0
        %v879 = vsel %vm802, %v758, 0
        %v882 = vsel %vm802, %v759, 0
        %v885 = vsel %vm802, %v760, 0
        %v888 = vsel %vm802, %v761, 0
        %v891 = vsel %vm802, %v762, 0
        %v894 = vsel %vm802, %v763, 0
        %v897 = vsel %vm802, %v764, 0
        %v900 = vsel %vm802, %v765, 0
        %v903 = vsel %vm802, %v766, 0
        %v906 = vsel %vm802, %v767, 0
        %v909 = vsel %vm802, %v768, 0
        %v912 = vsel %vm802, %v769, 0
        %v915 = vsel %vm802, %v770, 0
        %v918 = vsel %vm802, %v771, 0
        %v921 = vsel %vm802, %v772, 0
        %v924 = vsel %vm802, %v773, 0
        %v927 = vsel %vm802, %v774, 0
        %v930 = vsel %vm802, %v775, 0
        %v933 = vsel %vm802, %v776, 0
        %v936 = vsel %vm802, %v777, 0
        %v939 = vsel %vm802, %v778, 0
        %v942 = vsel %vm802, %v779, 0
        %v945 = vsel %vm802, %v780, 0
        %v948 = vsel %vm802, %v781, 0
        %v951 = vsel %vm802, %v782, 0
        %v954 = vsel %vm802, %v783, 0
        %v957 = vsel %vm802, %v784, 0
        %v960 = vsel %vm802, %v785, 0
        %v963 = vsel %vm802, %v786, 0
        %v966 = vsel %vm802, %v787, 0
        %v969 = vsel %vm802, %v788, 0
        %v972 = vsel %vm802, %v789, 0
        %v975 = vsel %vm802, %v790, 0
        %v978 = vsel %vm802, %v791, 0
        %v981 = vsel %vm802, %v792, 0
        %v984 = vsel %vm802, %v793, 0
        %v987 = vsel %vm802, %v794, 0
        %v990 = vsel %vm802, %v795, 0
        %v993 = vsel %vm802, %v796, 0
        %vm995 = vcmask 1043456
        %vm996 = vcmask 1044480
        %v997 = vsel %vm995, 4294967295, 65535
        %v998 = vsel %vm996, %v997, 0
        %v1000 = vand.u32 %v801, %v998
        %1002 = vmatprep.subr.bf16.mxu0 0
        %1003 = vmatpush1.bf16.msra.mxu0 %v1000
        %1004 = vmatprep.subr.bf16.mxu0 0
        %1005 = vmatpush1.bf16.msra.mxu0 0
        %1006 = vmatprep.subr.bf16.mxu0 0
        %1007 = vmatpush1.bf16.msra.mxu0 0
        %1008 = vmatprep.subr.bf16.mxu0 0
        %1009 = vmatpush1.bf16.msra.mxu0 0
        %1010 = vmatprep.subr.bf16.mxu0 0
        %1011 = vmatpush1.bf16.msra.mxu0 0
        %1012 = vmatprep.subr.bf16.mxu0 0
        %1013 = vmatpush1.bf16.msra.mxu0 0
        %1014 = vmatprep.subr.bf16.mxu0 0
        %1015 = vmatpush1.bf16.msra.mxu0 0
        %1016 = vmatprep.subr.bf16.mxu0 0
        %1017 = vmatpush1.bf16.msra.mxu0 0
        %1018 = vmatprep.subr.bf16.mxu0 0
        %1019 = vmatpush1.bf16.msra.mxu0 0
        %1020 = vmatprep.subr.bf16.mxu0 0
        %1021 = vmatpush1.bf16.msra.mxu0 0
        %1022 = vmatprep.subr.bf16.mxu0 0
        %1023 = vmatpush1.bf16.msra.mxu0 0
        %1024 = vmatprep.subr.bf16.mxu0 0
        %1025 = vmatpush1.bf16.msra.mxu0 0
        %1026 = vmatprep.subr.bf16.mxu0 0
        %1027 = vmatpush1.bf16.msra.mxu0 0
        %1028 = vmatprep.subr.bf16.mxu0 0
        %1029 = vmatpush1.bf16.msra.mxu0 0
        %1030 = vmatprep.subr.bf16.mxu0 0
        %1031 = vmatpush1.bf16.msra.mxu0 0
        %1032 = vmatprep.subr.bf16.mxu0 0
        %1033 = vmatpush1.bf16.msra.mxu0 0
        %1034 = vmatprep.mubr.bf16.mxu0 0
        %1035 = vmatmul.mubr.bf16.gmra.mrb[0].mxu0 %v804
        %v1036 = vpop.f32.mrb[0].mxu0
        %v1037 = vadd.f32 0.0, %v1036
        %v1038 = vpop.f32.mrb[0].mxu0
        %v1039 = vpop.f32.mrb[0].mxu0
        %v1040 = vadd.f32 0.0, %v1039
        %v1041 = vpop.f32.mrb[0].mxu0
        %1042 = vmatprep.mubr.bf16.mxu0 0
        %1043 = vmatmul.mubr.bf16.gmra.mrb[0].mxu0 %v807
        %v1044 = vpop.f32.mrb[0].mxu0
        %v1045 = vadd.f32 0.0, %v1044
        %v1046 = vpop.f32.mrb[0].mxu0
        %v1047 = vpop.f32.mrb[0].mxu0
        %v1048 = vadd.f32 0.0, %v1047
        %v1049 = vpop.f32.mrb[0].mxu0
        %1050 = vmatprep.mubr.bf16.mxu0 0
        %1051 = vmatmul.mubr.bf16.gmra.mrb[0].mxu0 %v810
        %v1052 = vpop.f32.mrb[0].mxu0
        %v1053 = vadd.f32 0.0, %v1052
        %v1054 = vpop.f32.mrb[0].mxu0
        %v1055 = vpop.f32.mrb[0].mxu0
        %v1056 = vadd.f32 0.0, %v1055
        %v1057 = vpop.f32.mrb[0].mxu0
        %1058 = vmatprep.mubr.bf16.mxu0 0
        %1059 = vmatmul.mubr.bf16.gmra.mrb[0].mxu0 %v813
        %v1060 = vpop.f32.mrb[0].mxu0
        %v1061 = vadd.f32 0.0, %v1060
        %v1062 = vpop.f32.mrb[0].mxu0
        %v1063 = vpop.f32.mrb[0].mxu0
        %v1064 = vadd.f32 0.0, %v1063
        %v1065 = vpop.f32.mrb[0].mxu0
        %1066 = vmatprep.mubr.bf16.mxu0 0
        %1067 = vmatmul.mubr.bf16.gmra.mrb[0].mxu0 %v816
        %v1068 = vpop.f32.mrb[0].mxu0
        %v1069 = vadd.f32 0.0, %v1068
        %v1070 = vpop.f32.mrb[0].mxu0
        %v1071 = vpop.f32.mrb[0].mxu0
        %v1072 = vadd.f32 0.0, %v1071
        %v1073 = vpop.f32.mrb[0].mxu0
        %1074 = vmatprep.mubr.bf16.mxu0 0
        %1075 = vmatmul.mubr.bf16.gmra.mrb[0].mxu0 %v819
        %v1076 = vpop.f32.mrb[0].mxu0
        %v1077 = vadd.f32 0.0, %v1076
        %v1078 = vpop.f32.mrb[0].mxu0
        %v1079 = vpop.f32.mrb[0].mxu0
        %v1080 = vadd.f32 0.0, %v1079
        %v1081 = vpop.f32.mrb[0].mxu0
        %1082 = vmatprep.mubr.bf16.mxu0 0
        %1083 = vmatmul.mubr.bf16.gmra.mrb[0].mxu0 %v822
        %v1084 = vpop.f32.mrb[0].mxu0
        %v1085 = vadd.f32 0.0, %v1084
        %v1086 = vpop.f32.mrb[0].mxu0
        %v1087 = vpop.f32.mrb[0].mxu0
        %v1088 = vadd.f32 0.0, %v1087
        %v1089 = vpop.f32.mrb[0].mxu0
        %1090 = vmatprep.mubr.bf16.mxu0 0
        %1091 = vmatmul.mubr.bf16.gmra.mrb[0].mxu0 %v825
        %v1092 = vpop.f32.mrb[0].mxu0
        %v1093 = vadd.f32 0.0, %v1092
        %v1094 = vpop.f32.mrb[0].mxu0
        %v1095 = vpop.f32.mrb[0].mxu0
        %v1096 = vadd.f32 0.0, %v1095
        %v1097 = vpop.f32.mrb[0].mxu0
        %1098 = vmatprep.mubr.bf16.mxu0 0
        %1099 = vmatmul.mubr.bf16.gmra.mrb[0].mxu0 %v828
        %v1100 = vpop.f32.mrb[0].mxu0
        %v1101 = vadd.f32 0.0, %v1100
        %v1102 = vpop.f32.mrb[0].mxu0
        %v1103 = vpop.f32.mrb[0].mxu0
        %v1104 = vadd.f32 0.0, %v1103
        %v1105 = vpop.f32.mrb[0].mxu0
        %1106 = vmatprep.mubr.bf16.mxu0 0
        %1107 = vmatmul.mubr.bf16.gmra.mrb[0].mxu0 %v831
        %v1108 = vpop.f32.mrb[0].mxu0
        %v1109 = vadd.f32 0.0, %v1108
        %v1110 = vpop.f32.mrb[0].mxu0
        %v1111 = vpop.f32.mrb[0].mxu0
        %v1112 = vadd.f32 0.0, %v1111
        %v1113 = vpop.f32.mrb[0].mxu0
        %1114 = vmatprep.mubr.bf16.mxu0 0
        %1115 = vmatmul.mubr.bf16.gmra.mrb[0].mxu0 %v834
        %v1116 = vpop.f32.mrb[0].mxu0
        %v1117 = vadd.f32 0.0, %v1116
        %v1118 = vpop.f32.mrb[0].mxu0
        %v1119 = vpop.f32.mrb[0].mxu0
        %v1120 = vadd.f32 0.0, %v1119
        %v1121 = vpop.f32.mrb[0].mxu0
        %1122 = vmatprep.mubr.bf16.mxu0 0
        %1123 = vmatmul.mubr.bf16.gmra.mrb[0].mxu0 %v837
        %v1124 = vpop.f32.mrb[0].mxu0
        %v1125 = vadd.f32 0.0, %v1124
        %v1126 = vpop.f32.mrb[0].mxu0
        %v1127 = vpop.f32.mrb[0].mxu0
        %v1128 = vadd.f32 0.0, %v1127
        %v1129 = vpop.f32.mrb[0].mxu0
        %1130 = vmatprep.mubr.bf16.mxu0 0
        %1131 = vmatmul.mubr.bf16.gmra.mrb[0].mxu0 %v840
        %v1132 = vpop.f32.mrb[0].mxu0
        %v1133 = vadd.f32 0.0, %v1132
        %v1134 = vpop.f32.mrb[0].mxu0
        %v1135 = vpop.f32.mrb[0].mxu0
        %v1136 = vadd.f32 0.0, %v1135
        %v1137 = vpop.f32.mrb[0].mxu0
        %1138 = vmatprep.mubr.bf16.mxu0 0
        %1139 = vmatmul.mubr.bf16.gmra.mrb[0].mxu0 %v843
        %v1140 = vpop.f32.mrb[0].mxu0
        %v1141 = vadd.f32 0.0, %v1140
        %v1142 = vpop.f32.mrb[0].mxu0
        %v1143 = vpop.f32.mrb[0].mxu0
        %v1144 = vadd.f32 0.0, %v1143
        %v1145 = vpop.f32.mrb[0].mxu0
        %1146 = vmatprep.mubr.bf16.mxu0 0
        %1147 = vmatmul.mubr.bf16.gmra.mrb[0].mxu0 %v846
        %v1148 = vpop.f32.mrb[0].mxu0
        %v1149 = vadd.f32 0.0, %v1148
        %v1150 = vpop.f32.mrb[0].mxu0
        %v1151 = vpop.f32.mrb[0].mxu0
        %v1152 = vadd.f32 0.0, %v1151
        %v1153 = vpop.f32.mrb[0].mxu0
        %1154 = vmatprep.mubr.bf16.mxu0 0
        %1155 = vmatmul.mubr.bf16.gmra.mrb[0].mxu0 %v849
        %v1156 = vpop.f32.mrb[0].mxu0
        %v1157 = vadd.f32 0.0, %v1156
        %v1158 = vpop.f32.mrb[0].mxu0
        %v1159 = vpop.f32.mrb[0].mxu0
        %v1160 = vadd.f32 0.0, %v1159
        %v1161 = vpop.f32.mrb[0].mxu0
        %1162 = vmatprep.mubr.bf16.mxu0 0
        %1163 = vmatmul.mubr.bf16.gmra.mrb[0].mxu0 %v852
        %v1164 = vpop.f32.mrb[0].mxu0
        %v1165 = vadd.f32 0.0, %v1164
        %v1166 = vpop.f32.mrb[0].mxu0
        %v1167 = vpop.f32.mrb[0].mxu0
        %v1168 = vadd.f32 0.0, %v1167
        %v1169 = vpop.f32.mrb[0].mxu0
        %1170 = vmatprep.mubr.bf16.mxu0 0
        %1171 = vmatmul.mubr.bf16.gmra.mrb[0].mxu0 %v855
        %v1172 = vpop.f32.mrb[0].mxu0
        %v1173 = vadd.f32 0.0, %v1172
        %v1174 = vpop.f32.mrb[0].mxu0
        %v1175 = vpop.f32.mrb[0].mxu0
        %v1176 = vadd.f32 0.0, %v1175
        %v1177 = vpop.f32.mrb[0].mxu0
        %1178 = vmatprep.mubr.bf16.mxu0 0
        %1179 = vmatmul.mubr.bf16.gmra.mrb[0].mxu0 %v858
        %v1180 = vpop.f32.mrb[0].mxu0
        %v1181 = vadd.f32 0.0, %v1180
        %v1182 = vpop.f32.mrb[0].mxu0
        %v1183 = vpop.f32.mrb[0].mxu0
        %v1184 = vadd.f32 0.0, %v1183
        %v1185 = vpop.f32.mrb[0].mxu0
        %1186 = vmatprep.mubr.bf16.mxu0 0
        %1187 = vmatmul.mubr.bf16.gmra.mrb[0].mxu0 %v861
        %v1188 = vpop.f32.mrb[0].mxu0
        %v1189 = vadd.f32 0.0, %v1188
        %v1190 = vpop.f32.mrb[0].mxu0
        %v1191 = vpop.f32.mrb[0].mxu0
        %v1192 = vadd.f32 0.0, %v1191
        %v1193 = vpop.f32.mrb[0].mxu0
        %1194 = vmatprep.mubr.bf16.mxu0 0
        %1195 = vmatmul.mubr.bf16.gmra.mrb[0].mxu0 %v864
        %v1196 = vpop.f32.mrb[0].mxu0
        %v1197 = vadd.f32 0.0, %v1196
        %v1198 = vpop.f32.mrb[0].mxu0
        %v1199 = vpop.f32.mrb[0].mxu0
        %v1200 = vadd.f32 0.0, %v1199
        %v1201 = vpop.f32.mrb[0].mxu0
        %1202 = vmatprep.mubr.bf16.mxu0 0
        %1203 = vmatmul.mubr.bf16.gmra.mrb[0].mxu0 %v867
        %v1204 = vpop.f32.mrb[0].mxu0
        %v1205 = vadd.f32 0.0, %v1204
        %v1206 = vpop.f32.mrb[0].mxu0
        %v1207 = vpop.f32.mrb[0].mxu0
        %v1208 = vadd.f32 0.0, %v1207
        %v1209 = vpop.f32.mrb[0].mxu0
        %1210 = vmatprep.mubr.bf16.mxu0 0
        %1211 = vmatmul.mubr.bf16.gmra.mrb[0].mxu0 %v870
        %v1212 = vpop.f32.mrb[0].mxu0
        %v1213 = vadd.f32 0.0, %v1212
        %v1214 = vpop.f32.mrb[0].mxu0
        %v1215 = vpop.f32.mrb[0].mxu0
        %v1216 = vadd.f32 0.0, %v1215
        %v1217 = vpop.f32.mrb[0].mxu0
        %1218 = vmatprep.mubr.bf16.mxu0 0
        %1219 = vmatmul.mubr.bf16.gmra.mrb[0].mxu0 %v873
        %v1220 = vpop.f32.mrb[0].mxu0
        %v1221 = vadd.f32 0.0, %v1220
        %v1222 = vpop.f32.mrb[0].mxu0
        %v1223 = vpop.f32.mrb[0].mxu0
        %v1224 = vadd.f32 0.0, %v1223
        %v1225 = vpop.f32.mrb[0].mxu0
        %1226 = vmatprep.mubr.bf16.mxu0 0
        %1227 = vmatmul.mubr.bf16.gmra.mrb[0].mxu0 %v876
        %v1228 = vpop.f32.mrb[0].mxu0
        %v1229 = vadd.f32 0.0, %v1228
        %v1230 = vpop.f32.mrb[0].mxu0
        %v1231 = vpop.f32.mrb[0].mxu0
        %v1232 = vadd.f32 0.0, %v1231
        %v1233 = vpop.f32.mrb[0].mxu0
        %1234 = vmatprep.mubr.bf16.mxu0 0
        %1235 = vmatmul.mubr.bf16.gmra.mrb[0].mxu0 %v879
        %v1236 = vpop.f32.mrb[0].mxu0
        %v1237 = vadd.f32 0.0, %v1236
        %v1238 = vpop.f32.mrb[0].mxu0
        %v1239 = vpop.f32.mrb[0].mxu0
        %v1240 = vadd.f32 0.0, %v1239
        %v1241 = vpop.f32.mrb[0].mxu0
        %1242 = vmatprep.mubr.bf16.mxu0 0
        %1243 = vmatmul.mubr.bf16.gmra.mrb[0].mxu0 %v882
        %v1244 = vpop.f32.mrb[0].mxu0
        %v1245 = vadd.f32 0.0, %v1244
        %v1246 = vpop.f32.mrb[0].mxu0
        %v1247 = vpop.f32.mrb[0].mxu0
        %v1248 = vadd.f32 0.0, %v1247
        %v1249 = vpop.f32.mrb[0].mxu0
        %1250 = vmatprep.mubr.bf16.mxu0 0
        %1251 = vmatmul.mubr.bf16.gmra.mrb[0].mxu0 %v885
        %v1252 = vpop.f32.mrb[0].mxu0
        %v1253 = vadd.f32 0.0, %v1252
        %v1254 = vpop.f32.mrb[0].mxu0
        %v1255 = vpop.f32.mrb[0].mxu0
        %v1256 = vadd.f32 0.0, %v1255
        %v1257 = vpop.f32.mrb[0].mxu0
        %1258 = vmatprep.mubr.bf16.mxu0 0
        %1259 = vmatmul.mubr.bf16.gmra.mrb[0].mxu0 %v888
        %v1260 = vpop.f32.mrb[0].mxu0
        %v1261 = vadd.f32 0.0, %v1260
        %v1262 = vpop.f32.mrb[0].mxu0
        %v1263 = vpop.f32.mrb[0].mxu0
        %v1264 = vadd.f32 0.0, %v1263
        %v1265 = vpop.f32.mrb[0].mxu0
        %1266 = vmatprep.mubr.bf16.mxu0 0
        %1267 = vmatmul.mubr.bf16.gmra.mrb[0].mxu0 %v891
        %v1268 = vpop.f32.mrb[0].mxu0
        %v1269 = vadd.f32 0.0, %v1268
        %v1270 = vpop.f32.mrb[0].mxu0
        %v1271 = vpop.f32.mrb[0].mxu0
        %v1272 = vadd.f32 0.0, %v1271
        %v1273 = vpop.f32.mrb[0].mxu0
        %1274 = vmatprep.mubr.bf16.mxu0 0
        %1275 = vmatmul.mubr.bf16.gmra.mrb[0].mxu0 %v894
        %v1276 = vpop.f32.mrb[0].mxu0
        %v1277 = vadd.f32 0.0, %v1276
        %v1278 = vpop.f32.mrb[0].mxu0
        %v1279 = vpop.f32.mrb[0].mxu0
        %v1280 = vadd.f32 0.0, %v1279
        %v1281 = vpop.f32.mrb[0].mxu0
        %1282 = vmatprep.mubr.bf16.mxu0 0
        %1283 = vmatmul.mubr.bf16.gmra.mrb[0].mxu0 %v897
        %v1284 = vpop.f32.mrb[0].mxu0
        %v1285 = vadd.f32 0.0, %v1284
        %v1286 = vpop.f32.mrb[0].mxu0
        %v1287 = vpop.f32.mrb[0].mxu0
        %v1288 = vadd.f32 0.0, %v1287
        %v1289 = vpop.f32.mrb[0].mxu0
        %1290 = vmatprep.mubr.bf16.mxu0 0
        %1291 = vmatmul.mubr.bf16.gmra.mrb[0].mxu0 %v900
        %v1292 = vpop.f32.mrb[0].mxu0
        %v1293 = vadd.f32 0.0, %v1292
        %v1294 = vpop.f32.mrb[0].mxu0
        %v1295 = vpop.f32.mrb[0].mxu0
        %v1296 = vadd.f32 0.0, %v1295
        %v1297 = vpop.f32.mrb[0].mxu0
        %1298 = vmatprep.mubr.bf16.mxu0 0
        %1299 = vmatmul.mubr.bf16.gmra.mrb[0].mxu0 %v903
        %v1300 = vpop.f32.mrb[0].mxu0
        %v1301 = vadd.f32 0.0, %v1300
        %v1302 = vpop.f32.mrb[0].mxu0
        %v1303 = vpop.f32.mrb[0].mxu0
        %v1304 = vadd.f32 0.0, %v1303
        %v1305 = vpop.f32.mrb[0].mxu0
        %1306 = vmatprep.mubr.bf16.mxu0 0
        %1307 = vmatmul.mubr.bf16.gmra.mrb[0].mxu0 %v906
        %v1308 = vpop.f32.mrb[0].mxu0
        %v1309 = vadd.f32 0.0, %v1308
        %v1310 = vpop.f32.mrb[0].mxu0
        %v1311 = vpop.f32.mrb[0].mxu0
        %v1312 = vadd.f32 0.0, %v1311
        %v1313 = vpop.f32.mrb[0].mxu0
        %1314 = vmatprep.mubr.bf16.mxu0 0
        %1315 = vmatmul.mubr.bf16.gmra.mrb[0].mxu0 %v909
        %v1316 = vpop.f32.mrb[0].mxu0
        %v1317 = vadd.f32 0.0, %v1316
        %v1318 = vpop.f32.mrb[0].mxu0
        %v1319 = vpop.f32.mrb[0].mxu0
        %v1320 = vadd.f32 0.0, %v1319
        %v1321 = vpop.f32.mrb[0].mxu0
        %1322 = vmatprep.mubr.bf16.mxu0 0
        %1323 = vmatmul.mubr.bf16.gmra.mrb[0].mxu0 %v912
        %v1324 = vpop.f32.mrb[0].mxu0
        %v1325 = vadd.f32 0.0, %v1324
        %v1326 = vpop.f32.mrb[0].mxu0
        %v1327 = vpop.f32.mrb[0].mxu0
        %v1328 = vadd.f32 0.0, %v1327
        %v1329 = vpop.f32.mrb[0].mxu0
        %1330 = vmatprep.mubr.bf16.mxu0 0
        %1331 = vmatmul.mubr.bf16.gmra.mrb[0].mxu0 %v915
        %v1332 = vpop.f32.mrb[0].mxu0
        %v1333 = vadd.f32 0.0, %v1332
        %v1334 = vpop.f32.mrb[0].mxu0
        %v1335 = vpop.f32.mrb[0].mxu0
        %v1336 = vadd.f32 0.0, %v1335
        %v1337 = vpop.f32.mrb[0].mxu0
        %1338 = vmatprep.mubr.bf16.mxu0 0
        %1339 = vmatmul.mubr.bf16.gmra.mrb[0].mxu0 %v918
        %v1340 = vpop.f32.mrb[0].mxu0
        %v1341 = vadd.f32 0.0, %v1340
        %v1342 = vpop.f32.mrb[0].mxu0
        %v1343 = vpop.f32.mrb[0].mxu0
        %v1344 = vadd.f32 0.0, %v1343
        %v1345 = vpop.f32.mrb[0].mxu0
        %1346 = vmatprep.mubr.bf16.mxu0 0
        %1347 = vmatmul.mubr.bf16.gmra.mrb[0].mxu0 %v921
        %v1348 = vpop.f32.mrb[0].mxu0
        %v1349 = vadd.f32 0.0, %v1348
        %v1350 = vpop.f32.mrb[0].mxu0
        %v1351 = vpop.f32.mrb[0].mxu0
        %v1352 = vadd.f32 0.0, %v1351
        %v1353 = vpop.f32.mrb[0].mxu0
        %1354 = vmatprep.mubr.bf16.mxu0 0
        %1355 = vmatmul.mubr.bf16.gmra.mrb[0].mxu0 %v924
        %v1356 = vpop.f32.mrb[0].mxu0
        %v1357 = vadd.f32 0.0, %v1356
        %v1358 = vpop.f32.mrb[0].mxu0
        %v1359 = vpop.f32.mrb[0].mxu0
        %v1360 = vadd.f32 0.0, %v1359
        %v1361 = vpop.f32.mrb[0].mxu0
        %1362 = vmatprep.mubr.bf16.mxu0 0
        %1363 = vmatmul.mubr.bf16.gmra.mrb[0].mxu0 %v927
        %v1364 = vpop.f32.mrb[0].mxu0
        %v1365 = vadd.f32 0.0, %v1364
        %v1366 = vpop.f32.mrb[0].mxu0
        %v1367 = vpop.f32.mrb[0].mxu0
        %v1368 = vadd.f32 0.0, %v1367
        %v1369 = vpop.f32.mrb[0].mxu0
        %1370 = vmatprep.mubr.bf16.mxu0 0
        %1371 = vmatmul.mubr.bf16.gmra.mrb[0].mxu0 %v930
        %v1372 = vpop.f32.mrb[0].mxu0
        %v1373 = vadd.f32 0.0, %v1372
        %v1374 = vpop.f32.mrb[0].mxu0
        %v1375 = vpop.f32.mrb[0].mxu0
        %v1376 = vadd.f32 0.0, %v1375
        %v1377 = vpop.f32.mrb[0].mxu0
        %1378 = vmatprep.mubr.bf16.mxu0 0
        %1379 = vmatmul.mubr.bf16.gmra.mrb[0].mxu0 %v933
        %v1380 = vpop.f32.mrb[0].mxu0
        %v1381 = vadd.f32 0.0, %v1380
        %v1382 = vpop.f32.mrb[0].mxu0
        %v1383 = vpop.f32.mrb[0].mxu0
        %v1384 = vadd.f32 0.0, %v1383
        %v1385 = vpop.f32.mrb[0].mxu0
        %1386 = vmatprep.mubr.bf16.mxu0 0
        %1387 = vmatmul.mubr.bf16.gmra.mrb[0].mxu0 %v936
        %v1388 = vpop.f32.mrb[0].mxu0
        %v1389 = vadd.f32 0.0, %v1388
        %v1390 = vpop.f32.mrb[0].mxu0
        %v1391 = vpop.f32.mrb[0].mxu0
        %v1392 = vadd.f32 0.0, %v1391
        %v1393 = vpop.f32.mrb[0].mxu0
        %1394 = vmatprep.mubr.bf16.mxu0 0
        %1395 = vmatmul.mubr.bf16.gmra.mrb[0].mxu0 %v939
        %v1396 = vpop.f32.mrb[0].mxu0
        %v1397 = vadd.f32 0.0, %v1396
        %v1398 = vpop.f32.mrb[0].mxu0
        %v1399 = vpop.f32.mrb[0].mxu0
        %v1400 = vadd.f32 0.0, %v1399
        %v1401 = vpop.f32.mrb[0].mxu0
        %1402 = vmatprep.mubr.bf16.mxu0 0
        %1403 = vmatmul.mubr.bf16.gmra.mrb[0].mxu0 %v942
        %v1404 = vpop.f32.mrb[0].mxu0
        %v1405 = vadd.f32 0.0, %v1404
        %v1406 = vpop.f32.mrb[0].mxu0
        %v1407 = vpop.f32.mrb[0].mxu0
        %v1408 = vadd.f32 0.0, %v1407
        %v1409 = vpop.f32.mrb[0].mxu0
        %1410 = vmatprep.mubr.bf16.mxu0 0
        %1411 = vmatmul.mubr.bf16.gmra.mrb[0].mxu0 %v945
        %v1412 = vpop.f32.mrb[0].mxu0
        %v1413 = vadd.f32 0.0, %v1412
        %v1414 = vpop.f32.mrb[0].mxu0
        %v1415 = vpop.f32.mrb[0].mxu0
        %v1416 = vadd.f32 0.0, %v1415
        %v1417 = vpop.f32.mrb[0].mxu0
        %1418 = vmatprep.mubr.bf16.mxu0 0
        %1419 = vmatmul.mubr.bf16.gmra.mrb[0].mxu0 %v948
        %v1420 = vpop.f32.mrb[0].mxu0
        %v1421 = vadd.f32 0.0, %v1420
        %v1422 = vpop.f32.mrb[0].mxu0
        %v1423 = vpop.f32.mrb[0].mxu0
        %v1424 = vadd.f32 0.0, %v1423
        %v1425 = vpop.f32.mrb[0].mxu0
        %1426 = vmatprep.mubr.bf16.mxu0 0
        %1427 = vmatmul.mubr.bf16.gmra.mrb[0].mxu0 %v951
        %v1428 = vpop.f32.mrb[0].mxu0
        %v1429 = vadd.f32 0.0, %v1428
        %v1430 = vpop.f32.mrb[0].mxu0
        %v1431 = vpop.f32.mrb[0].mxu0
        %v1432 = vadd.f32 0.0, %v1431
        %v1433 = vpop.f32.mrb[0].mxu0
        %1434 = vmatprep.mubr.bf16.mxu0 0
        %1435 = vmatmul.mubr.bf16.gmra.mrb[0].mxu0 %v954
        %v1436 = vpop.f32.mrb[0].mxu0
        %v1437 = vadd.f32 0.0, %v1436
        %v1438 = vpop.f32.mrb[0].mxu0
        %v1439 = vpop.f32.mrb[0].mxu0
        %v1440 = vadd.f32 0.0, %v1439
        %v1441 = vpop.f32.mrb[0].mxu0
        %1442 = vmatprep.mubr.bf16.mxu0 0
        %1443 = vmatmul.mubr.bf16.gmra.mrb[0].mxu0 %v957
        %v1444 = vpop.f32.mrb[0].mxu0
        %v1445 = vadd.f32 0.0, %v1444
        %v1446 = vpop.f32.mrb[0].mxu0
        %v1447 = vpop.f32.mrb[0].mxu0
        %v1448 = vadd.f32 0.0, %v1447
        %v1449 = vpop.f32.mrb[0].mxu0
        %1450 = vmatprep.mubr.bf16.mxu0 0
        %1451 = vmatmul.mubr.bf16.gmra.mrb[0].mxu0 %v960
        %v1452 = vpop.f32.mrb[0].mxu0
        %v1453 = vadd.f32 0.0, %v1452
        %v1454 = vpop.f32.mrb[0].mxu0
        %v1455 = vpop.f32.mrb[0].mxu0
        %v1456 = vadd.f32 0.0, %v1455
        %v1457 = vpop.f32.mrb[0].mxu0
        %1458 = vmatprep.mubr.bf16.mxu0 0
        %1459 = vmatmul.mubr.bf16.gmra.mrb[0].mxu0 %v963
        %v1460 = vpop.f32.mrb[0].mxu0
        %v1461 = vadd.f32 0.0, %v1460
        %v1462 = vpop.f32.mrb[0].mxu0
        %v1463 = vpop.f32.mrb[0].mxu0
        %v1464 = vadd.f32 0.0, %v1463
        %v1465 = vpop.f32.mrb[0].mxu0
        %1466 = vmatprep.mubr.bf16.mxu0 0
        %1467 = vmatmul.mubr.bf16.gmra.mrb[0].mxu0 %v966
        %v1468 = vpop.f32.mrb[0].mxu0
        %v1469 = vadd.f32 0.0, %v1468
        %v1470 = vpop.f32.mrb[0].mxu0
        %v1471 = vpop.f32.mrb[0].mxu0
        %v1472 = vadd.f32 0.0, %v1471
        %v1473 = vpop.f32.mrb[0].mxu0
        %1474 = vmatprep.mubr.bf16.mxu0 0
        %1475 = vmatmul.mubr.bf16.gmra.mrb[0].mxu0 %v969
        %v1476 = vpop.f32.mrb[0].mxu0
        %v1477 = vadd.f32 0.0, %v1476
        %v1478 = vpop.f32.mrb[0].mxu0
        %v1479 = vpop.f32.mrb[0].mxu0
        %v1480 = vadd.f32 0.0, %v1479
        %v1481 = vpop.f32.mrb[0].mxu0
        %1482 = vmatprep.mubr.bf16.mxu0 0
        %1483 = vmatmul.mubr.bf16.gmra.mrb[0].mxu0 %v972
        %v1484 = vpop.f32.mrb[0].mxu0
        %v1485 = vadd.f32 0.0, %v1484
        %v1486 = vpop.f32.mrb[0].mxu0
        %v1487 = vpop.f32.mrb[0].mxu0
        %v1488 = vadd.f32 0.0, %v1487
        %v1489 = vpop.f32.mrb[0].mxu0
        %1490 = vmatprep.mubr.bf16.mxu0 0
        %1491 = vmatmul.mubr.bf16.gmra.mrb[0].mxu0 %v975
        %v1492 = vpop.f32.mrb[0].mxu0
        %v1493 = vadd.f32 0.0, %v1492
        %v1494 = vpop.f32.mrb[0].mxu0
        %v1495 = vpop.f32.mrb[0].mxu0
        %v1496 = vadd.f32 0.0, %v1495
        %v1497 = vpop.f32.mrb[0].mxu0
        %1498 = vmatprep.mubr.bf16.mxu0 0
        %1499 = vmatmul.mubr.bf16.gmra.mrb[0].mxu0 %v978
        %v1500 = vpop.f32.mrb[0].mxu0
        %v1501 = vadd.f32 0.0, %v1500
        %v1502 = vpop.f32.mrb[0].mxu0
        %v1503 = vpop.f32.mrb[0].mxu0
        %v1504 = vadd.f32 0.0, %v1503
        %v1505 = vpop.f32.mrb[0].mxu0
        %1506 = vmatprep.mubr.bf16.mxu0 0
        %1507 = vmatmul.mubr.bf16.gmra.mrb[0].mxu0 %v981
        %v1508 = vpop.f32.mrb[0].mxu0
        %v1509 = vadd.f32 0.0, %v1508
        %v1510 = vpop.f32.mrb[0].mxu0
        %v1511 = vpop.f32.mrb[0].mxu0
        %v1512 = vadd.f32 0.0, %v1511
        %v1513 = vpop.f32.mrb[0].mxu0
        %1514 = vmatprep.mubr.bf16.mxu0 0
        %1515 = vmatmul.mubr.bf16.gmra.mrb[0].mxu0 %v984
        %v1516 = vpop.f32.mrb[0].mxu0
        %v1517 = vadd.f32 0.0, %v1516
        %v1518 = vpop.f32.mrb[0].mxu0
        %v1519 = vpop.f32.mrb[0].mxu0
        %v1520 = vadd.f32 0.0, %v1519
        %v1521 = vpop.f32.mrb[0].mxu0
        %1522 = vmatprep.mubr.bf16.mxu0 0
        %1523 = vmatmul.mubr.bf16.gmra.mrb[0].mxu0 %v987
        %v1524 = vpop.f32.mrb[0].mxu0
        %v1525 = vadd.f32 0.0, %v1524
        %v1526 = vpop.f32.mrb[0].mxu0
        %v1527 = vpop.f32.mrb[0].mxu0
        %v1528 = vadd.f32 0.0, %v1527
        %v1529 = vpop.f32.mrb[0].mxu0
        %1530 = vmatprep.mubr.bf16.mxu0 0
        %1531 = vmatmul.mubr.bf16.gmra.mrb[0].mxu0 %v990
        %v1532 = vpop.f32.mrb[0].mxu0
        %v1533 = vadd.f32 0.0, %v1532
        %v1534 = vpop.f32.mrb[0].mxu0
        %v1535 = vpop.f32.mrb[0].mxu0
        %v1536 = vadd.f32 0.0, %v1535
        %v1537 = vpop.f32.mrb[0].mxu0
        %1538 = vmatprep.mubr.bf16.mxu0 0
        %1539 = vmatmul.mubr.bf16.gmra.mrb[0].mxu0 %v993
        %v1540 = vpop.f32.mrb[0].mxu0
        %v1541 = vadd.f32 0.0, %v1540
        %v1542 = vpop.f32.mrb[0].mxu0
        %v1543 = vpop.f32.mrb[0].mxu0
        %v1544 = vadd.f32 0.0, %v1543
        %v1545 = vpop.f32.mrb[0].mxu0
        %1546 = vdwg.mxu0
        %v1675 = vunpack.c.l.b16 %v215
        %v1676 = vunpack.c.l.b16 %v216
        %v1677 = vunpack.c.l.b16 %v217
        %v1678 = vunpack.c.l.b16 %v218
        %v1679 = vunpack.c.l.b16 %v219
        %v1680 = vunpack.c.l.b16 %v220
        %v1681 = vunpack.c.l.b16 %v221
        %v1682 = vunpack.c.l.b16 %v222
        %v1683 = vunpack.c.l.b16 %v223
        %v1684 = vunpack.c.l.b16 %v224
        %v1685 = vunpack.c.l.b16 %v225
        %v1686 = vunpack.c.l.b16 %v226
        %v1687 = vunpack.c.l.b16 %v227
        %v1688 = vunpack.c.l.b16 %v228
        %v1689 = vunpack.c.l.b16 %v229
        %v1690 = vunpack.c.l.b16 %v230
        %v1691 = vunpack.c.l.b16 %v231
        %v1692 = vunpack.c.l.b16 %v232
        %v1693 = vunpack.c.l.b16 %v233
        %v1694 = vunpack.c.l.b16 %v234
        %v1695 = vunpack.c.l.b16 %v235
        %v1696 = vunpack.c.l.b16 %v236
        %v1697 = vunpack.c.l.b16 %v237
        %v1698 = vunpack.c.l.b16 %v238
        %v1699 = vunpack.c.l.b16 %v239
        %v1700 = vunpack.c.l.b16 %v240
        %v1701 = vunpack.c.l.b16 %v241
        %v1702 = vunpack.c.l.b16 %v242
        %v1703 = vunpack.c.l.b16 %v243
        %v1704 = vunpack.c.l.b16 %v244
        %v1705 = vunpack.c.l.b16 %v245
        %v1706 = vunpack.c.l.b16 %v246
        %v1707 = vunpack.c.l.b16 %v247
        %v1708 = vunpack.c.l.b16 %v248
        %v1709 = vunpack.c.l.b16 %v249
        %v1710 = vunpack.c.l.b16 %v250
        %v1711 = vunpack.c.l.b16 %v251
        %v1712 = vunpack.c.l.b16 %v252
        %v1713 = vunpack.c.l.b16 %v253
        %v1714 = vunpack.c.l.b16 %v254
        %v1715 = vunpack.c.l.b16 %v255
        %v1716 = vunpack.c.l.b16 %v256
        %v1717 = vunpack.c.l.b16 %v257
        %v1718 = vunpack.c.l.b16 %v258
        %v1719 = vunpack.c.l.b16 %v259
        %v1720 = vunpack.c.l.b16 %v260
        %v1721 = vunpack.c.l.b16 %v261
        %v1722 = vunpack.c.l.b16 %v262
        %v1723 = vunpack.c.l.b16 %v263
        %v1724 = vunpack.c.l.b16 %v264
        %v1725 = vunpack.c.l.b16 %v265
        %v1726 = vunpack.c.l.b16 %v266
        %v1727 = vunpack.c.l.b16 %v267
        %v1728 = vunpack.c.l.b16 %v268
        %v1729 = vunpack.c.l.b16 %v269
        %v1730 = vunpack.c.l.b16 %v270
        %v1731 = vunpack.c.l.b16 %v271
        %v1732 = vunpack.c.l.b16 %v272
        %v1733 = vunpack.c.l.b16 %v273
        %v1734 = vunpack.c.l.b16 %v274
        %v1735 = vunpack.c.l.b16 %v275
        %v1736 = vunpack.c.l.b16 %v276
        %v1737 = vunpack.c.l.b16 %v277
        %v1738 = vunpack.c.l.b16 %v278
        %v1739 = vunpack.c.l.b16 %v279
        %v1740 = vunpack.c.l.b16 %v280
        %v1741 = vunpack.c.l.b16 %v281
        %v1742 = vunpack.c.l.b16 %v282
        %v1743 = vunpack.c.l.b16 %v283
        %v1744 = vunpack.c.l.b16 %v284
        %v1745 = vunpack.c.l.b16 %v285
        %v1746 = vunpack.c.l.b16 %v286
        %v1747 = vunpack.c.l.b16 %v287
        %v1748 = vunpack.c.l.b16 %v288
        %v1749 = vunpack.c.l.b16 %v289
        %v1750 = vunpack.c.l.b16 %v290
        %v1751 = vunpack.c.l.b16 %v291
        %v1752 = vunpack.c.l.b16 %v292
        %v1753 = vunpack.c.l.b16 %v293
        %v1754 = vunpack.c.l.b16 %v294
        %v1755 = vunpack.c.l.b16 %v295
        %v1756 = vunpack.c.l.b16 %v296
        %v1757 = vunpack.c.l.b16 %v297
        %v1758 = vunpack.c.l.b16 %v298
        %v1759 = vunpack.c.l.b16 %v299
        %v1760 = vunpack.c.l.b16 %v300
        %v1761 = vunpack.c.l.b16 %v301
        %v1762 = vunpack.c.l.b16 %v302
        %v1763 = vunpack.c.l.b16 %v303
        %v1764 = vunpack.c.l.b16 %v304
        %v1765 = vunpack.c.l.b16 %v305
        %v1766 = vunpack.c.l.b16 %v306
        %v1767 = vunpack.c.l.b16 %v307
        %v1768 = vunpack.c.l.b16 %v308
        %v1769 = vunpack.c.l.b16 %v309
        %v1770 = vunpack.c.l.b16 %v310
        %v1771 = vunpack.c.l.b16 %v311
        %v1772 = vunpack.c.l.b16 %v312
        %v1773 = vunpack.c.l.b16 %v313
        %v1774 = vunpack.c.l.b16 %v314
        %v1775 = vunpack.c.l.b16 %v315
        %v1776 = vunpack.c.l.b16 %v316
        %v1777 = vunpack.c.l.b16 %v317
        %v1778 = vunpack.c.l.b16 %v318
        %v1779 = vunpack.c.l.b16 %v319
        %v1780 = vunpack.c.l.b16 %v320
        %v1781 = vunpack.c.l.b16 %v321
        %v1782 = vunpack.c.l.b16 %v322
        %v1783 = vunpack.c.l.b16 %v323
        %v1784 = vunpack.c.l.b16 %v324
        %v1785 = vunpack.c.l.b16 %v325
        %v1786 = vunpack.c.l.b16 %v326
        %v1787 = vunpack.c.l.b16 %v327
        %v1788 = vunpack.c.l.b16 %v328
        %v1789 = vunpack.c.l.b16 %v329
        %v1790 = vunpack.c.l.b16 %v330
        %v1791 = vunpack.c.l.b16 %v331
        %v1792 = vunpack.c.l.b16 %v332
        %v1793 = vunpack.c.l.b16 %v333
        %v1794 = vunpack.c.l.b16 %v334
        %v1795 = vunpack.c.l.b16 %v335
        %v1796 = vunpack.c.l.b16 %v336
        %v1797 = vunpack.c.l.b16 %v337
        %v1798 = vunpack.c.l.b16 %v338
        %v1799 = vunpack.c.l.b16 %v339
        %v1800 = vunpack.c.l.b16 %v340
        %v1801 = vunpack.c.l.b16 %v341
        %v1802 = vunpack.c.l.b16 %v342
        %v1803 = vpack.c.b16 %v1676, %v1675
        %v1804 = vpack.c.b16 %v1678, %v1677
        %v1805 = vpack.c.b16 %v1680, %v1679
        %v1806 = vpack.c.b16 %v1682, %v1681
        %v1807 = vpack.c.b16 %v1684, %v1683
        %v1808 = vpack.c.b16 %v1686, %v1685
        %v1809 = vpack.c.b16 %v1688, %v1687
        %v1810 = vpack.c.b16 %v1690, %v1689
        %v1811 = vpack.c.b16 %v1692, %v1691
        %v1812 = vpack.c.b16 %v1694, %v1693
        %v1813 = vpack.c.b16 %v1696, %v1695
        %v1814 = vpack.c.b16 %v1698, %v1697
        %v1815 = vpack.c.b16 %v1700, %v1699
        %v1816 = vpack.c.b16 %v1702, %v1701
        %v1817 = vpack.c.b16 %v1704, %v1703
        %v1818 = vpack.c.b16 %v1706, %v1705
        %v1819 = vpack.c.b16 %v1708, %v1707
        %v1820 = vpack.c.b16 %v1710, %v1709
        %v1821 = vpack.c.b16 %v1712, %v1711
        %v1822 = vpack.c.b16 %v1714, %v1713
        %v1823 = vpack.c.b16 %v1716, %v1715
        %v1824 = vpack.c.b16 %v1718, %v1717
        %v1825 = vpack.c.b16 %v1720, %v1719
        %v1826 = vpack.c.b16 %v1722, %v1721
        %v1827 = vpack.c.b16 %v1724, %v1723
        %v1828 = vpack.c.b16 %v1726, %v1725
        %v1829 = vpack.c.b16 %v1728, %v1727
        %v1830 = vpack.c.b16 %v1730, %v1729
        %v1831 = vpack.c.b16 %v1732, %v1731
        %v1832 = vpack.c.b16 %v1734, %v1733
        %v1833 = vpack.c.b16 %v1736, %v1735
        %v1834 = vpack.c.b16 %v1738, %v1737
        %v1835 = vpack.c.b16 %v1740, %v1739
        %v1836 = vpack.c.b16 %v1742, %v1741
        %v1837 = vpack.c.b16 %v1744, %v1743
        %v1838 = vpack.c.b16 %v1746, %v1745
        %v1839 = vpack.c.b16 %v1748, %v1747
        %v1840 = vpack.c.b16 %v1750, %v1749
        %v1841 = vpack.c.b16 %v1752, %v1751
        %v1842 = vpack.c.b16 %v1754, %v1753
        %v1843 = vpack.c.b16 %v1756, %v1755
        %v1844 = vpack.c.b16 %v1758, %v1757
        %v1845 = vpack.c.b16 %v1760, %v1759
        %v1846 = vpack.c.b16 %v1762, %v1761
        %v1847 = vpack.c.b16 %v1764, %v1763
        %v1848 = vpack.c.b16 %v1766, %v1765
        %v1849 = vpack.c.b16 %v1768, %v1767
        %v1850 = vpack.c.b16 %v1770, %v1769
        %v1851 = vpack.c.b16 %v1772, %v1771
        %v1852 = vpack.c.b16 %v1774, %v1773
        %v1853 = vpack.c.b16 %v1776, %v1775
        %v1854 = vpack.c.b16 %v1778, %v1777
        %v1855 = vpack.c.b16 %v1780, %v1779
        %v1856 = vpack.c.b16 %v1782, %v1781
        %v1857 = vpack.c.b16 %v1784, %v1783
        %v1858 = vpack.c.b16 %v1786, %v1785
        %v1859 = vpack.c.b16 %v1788, %v1787
        %v1860 = vpack.c.b16 %v1790, %v1789
        %v1861 = vpack.c.b16 %v1792, %v1791
        %v1862 = vpack.c.b16 %v1794, %v1793
        %v1863 = vpack.c.b16 %v1796, %v1795
        %v1864 = vpack.c.b16 %v1798, %v1797
        %v1865 = vpack.c.b16 %v1800, %v1799
        %v1866 = vpack.c.b16 %v1802, %v1801
        %v1869 = vunpack.c.l.b16 %v343
        %v1870 = vunpack.c.l.b16 %v344
        %v1871 = vpack.c.b16 %v1870, %v1869
        %v1873 = vsel %vm802, %v1803, 0
        %v1876 = vsel %vm802, %v1804, 0
        %v1879 = vsel %vm802, %v1805, 0
        %v1882 = vsel %vm802, %v1806, 0
        %v1885 = vsel %vm802, %v1807, 0
        %v1888 = vsel %vm802, %v1808, 0
        %v1891 = vsel %vm802, %v1809, 0
        %v1894 = vsel %vm802, %v1810, 0
        %v1897 = vsel %vm802, %v1811, 0
        %v1900 = vsel %vm802, %v1812, 0
        %v1903 = vsel %vm802, %v1813, 0
        %v1906 = vsel %vm802, %v1814, 0
        %v1909 = vsel %vm802, %v1815, 0
        %v1912 = vsel %vm802, %v1816, 0
        %v1915 = vsel %vm802, %v1817, 0
        %v1918 = vsel %vm802, %v1818, 0
        %v1921 = vsel %vm802, %v1819, 0
        %v1924 = vsel %vm802, %v1820, 0
        %v1927 = vsel %vm802, %v1821, 0
        %v1930 = vsel %vm802, %v1822, 0
        %v1933 = vsel %vm802, %v1823, 0
        %v1936 = vsel %vm802, %v1824, 0
        %v1939 = vsel %vm802, %v1825, 0
        %v1942 = vsel %vm802, %v1826, 0
        %v1945 = vsel %vm802, %v1827, 0
        %v1948 = vsel %vm802, %v1828, 0
        %v1951 = vsel %vm802, %v1829, 0
        %v1954 = vsel %vm802, %v1830, 0
        %v1957 = vsel %vm802, %v1831, 0
        %v1960 = vsel %vm802, %v1832, 0
        %v1963 = vsel %vm802, %v1833, 0
        %v1966 = vsel %vm802, %v1834, 0
        %v1969 = vsel %vm802, %v1835, 0
        %v1972 = vsel %vm802, %v1836, 0
        %v1975 = vsel %vm802, %v1837, 0
        %v1978 = vsel %vm802, %v1838, 0
        %v1981 = vsel %vm802, %v1839, 0
        %v1984 = vsel %vm802, %v1840, 0
        %v1987 = vsel %vm802, %v1841, 0
        %v1990 = vsel %vm802, %v1842, 0
        %v1993 = vsel %vm802, %v1843, 0
        %v1996 = vsel %vm802, %v1844, 0
        %v1999 = vsel %vm802, %v1845, 0
        %v2002 = vsel %vm802, %v1846, 0
        %v2005 = vsel %vm802, %v1847, 0
        %v2008 = vsel %vm802, %v1848, 0
        %v2011 = vsel %vm802, %v1849, 0
        %v2014 = vsel %vm802, %v1850, 0
        %v2017 = vsel %vm802, %v1851, 0
        %v2020 = vsel %vm802, %v1852, 0
        %v2023 = vsel %vm802, %v1853, 0
        %v2026 = vsel %vm802, %v1854, 0
        %v2029 = vsel %vm802, %v1855, 0
        %v2032 = vsel %vm802, %v1856, 0
        %v2035 = vsel %vm802, %v1857, 0
        %v2038 = vsel %vm802, %v1858, 0
        %v2041 = vsel %vm802, %v1859, 0
        %v2044 = vsel %vm802, %v1860, 0
        %v2047 = vsel %vm802, %v1861, 0
        %v2050 = vsel %vm802, %v1862, 0
        %v2053 = vsel %vm802, %v1863, 0
        %v2056 = vsel %vm802, %v1864, 0
        %v2059 = vsel %vm802, %v1865, 0
        %v2062 = vsel %vm802, %v1866, 0
        %v2065 = vand.u32 %v1871, %v998
        %2067 = vmatprep.subr.bf16.mxu0 0
        %2068 = vmatpush1.bf16.msra.mxu0 %v2065
        %2069 = vmatprep.subr.bf16.mxu0 0
        %2070 = vmatpush1.bf16.msra.mxu0 0
        %2071 = vmatprep.subr.bf16.mxu0 0
        %2072 = vmatpush1.bf16.msra.mxu0 0
        %2073 = vmatprep.subr.bf16.mxu0 0
        %2074 = vmatpush1.bf16.msra.mxu0 0
        %2075 = vmatprep.subr.bf16.mxu0 0
        %2076 = vmatpush1.bf16.msra.mxu0 0
        %2077 = vmatprep.subr.bf16.mxu0 0
        %2078 = vmatpush1.bf16.msra.mxu0 0
        %2079 = vmatprep.subr.bf16.mxu0 0
        %2080 = vmatpush1.bf16.msra.mxu0 0
        %2081 = vmatprep.subr.bf16.mxu0 0
        %2082 = vmatpush1.bf16.msra.mxu0 0
        %2083 = vmatprep.subr.bf16.mxu0 0
        %2084 = vmatpush1.bf16.msra.mxu0 0
        %2085 = vmatprep.subr.bf16.mxu0 0
        %2086 = vmatpush1.bf16.msra.mxu0 0
        %2087 = vmatprep.subr.bf16.mxu0 0
        %2088 = vmatpush1.bf16.msra.mxu0 0
        %2089 = vmatprep.subr.bf16.mxu0 0
        %2090 = vmatpush1.bf16.msra.mxu0 0
        %2091 = vmatprep.subr.bf16.mxu0 0
        %2092 = vmatpush1.bf16.msra.mxu0 0
        %2093 = vmatprep.subr.bf16.mxu0 0
        %2094 = vmatpush1.bf16.msra.mxu0 0
        %2095 = vmatprep.subr.bf16.mxu0 0
        %2096 = vmatpush1.bf16.msra.mxu0 0
        %2097 = vmatprep.subr.bf16.mxu0 0
        %2098 = vmatpush1.bf16.msra.mxu0 0
        %2099 = vmatprep.mubr.bf16.mxu0 0
        %2100 = vmatmul.mubr.bf16.gmra.mrb[0].mxu0 %v1873
        %v2101 = vpop.f32.mrb[0].mxu0
        %v2102 = vadd.f32 %v1037, %v2101
        %v2103 = vpop.f32.mrb[0].mxu0
        %v2104 = vpop.f32.mrb[0].mxu0
        %v2105 = vadd.f32 %v1040, %v2104
        %v2106 = vpop.f32.mrb[0].mxu0
        %2107 = vmatprep.mubr.bf16.mxu0 0
        %2108 = vmatmul.mubr.bf16.gmra.mrb[0].mxu0 %v1876
        %v2109 = vpop.f32.mrb[0].mxu0
        %v2110 = vadd.f32 %v1045, %v2109
        %v2111 = vpop.f32.mrb[0].mxu0
        %v2112 = vpop.f32.mrb[0].mxu0
        %v2113 = vadd.f32 %v1048, %v2112
        %v2114 = vpop.f32.mrb[0].mxu0
        %2115 = vmatprep.mubr.bf16.mxu0 0
        %2116 = vmatmul.mubr.bf16.gmra.mrb[0].mxu0 %v1879
        %v2117 = vpop.f32.mrb[0].mxu0
        %v2118 = vadd.f32 %v1053, %v2117
        %v2119 = vpop.f32.mrb[0].mxu0
        %v2120 = vpop.f32.mrb[0].mxu0
        %v2121 = vadd.f32 %v1056, %v2120
        %v2122 = vpop.f32.mrb[0].mxu0
        %2123 = vmatprep.mubr.bf16.mxu0 0
        %2124 = vmatmul.mubr.bf16.gmra.mrb[0].mxu0 %v1882
        %v2125 = vpop.f32.mrb[0].mxu0
        %v2126 = vadd.f32 %v1061, %v2125
        %v2127 = vpop.f32.mrb[0].mxu0
        %v2128 = vpop.f32.mrb[0].mxu0
        %v2129 = vadd.f32 %v1064, %v2128
        %v2130 = vpop.f32.mrb[0].mxu0
        %2131 = vmatprep.mubr.bf16.mxu0 0
        %2132 = vmatmul.mubr.bf16.gmra.mrb[0].mxu0 %v1885
        %v2133 = vpop.f32.mrb[0].mxu0
        %v2134 = vadd.f32 %v1069, %v2133
        %v2135 = vpop.f32.mrb[0].mxu0
        %v2136 = vpop.f32.mrb[0].mxu0
        %v2137 = vadd.f32 %v1072, %v2136
        %v2138 = vpop.f32.mrb[0].mxu0
        %2139 = vmatprep.mubr.bf16.mxu0 0
        %2140 = vmatmul.mubr.bf16.gmra.mrb[0].mxu0 %v1888
        %v2141 = vpop.f32.mrb[0].mxu0
        %v2142 = vadd.f32 %v1077, %v2141
        %v2143 = vpop.f32.mrb[0].mxu0
        %v2144 = vpop.f32.mrb[0].mxu0
        %v2145 = vadd.f32 %v1080, %v2144
        %v2146 = vpop.f32.mrb[0].mxu0
        %2147 = vmatprep.mubr.bf16.mxu0 0
        %2148 = vmatmul.mubr.bf16.gmra.mrb[0].mxu0 %v1891
        %v2149 = vpop.f32.mrb[0].mxu0
        %v2150 = vadd.f32 %v1085, %v2149
        %v2151 = vpop.f32.mrb[0].mxu0
        %v2152 = vpop.f32.mrb[0].mxu0
        %v2153 = vadd.f32 %v1088, %v2152
        %v2154 = vpop.f32.mrb[0].mxu0
        %2155 = vmatprep.mubr.bf16.mxu0 0
        %2156 = vmatmul.mubr.bf16.gmra.mrb[0].mxu0 %v1894
        %v2157 = vpop.f32.mrb[0].mxu0
        %v2158 = vadd.f32 %v1093, %v2157
        %v2159 = vpop.f32.mrb[0].mxu0
        %v2160 = vpop.f32.mrb[0].mxu0
        %v2161 = vadd.f32 %v1096, %v2160
        %v2162 = vpop.f32.mrb[0].mxu0
        %2163 = vmatprep.mubr.bf16.mxu0 0
        %2164 = vmatmul.mubr.bf16.gmra.mrb[0].mxu0 %v1897
        %v2165 = vpop.f32.mrb[0].mxu0
        %v2166 = vadd.f32 %v1101, %v2165
        %v2167 = vpop.f32.mrb[0].mxu0
        %v2168 = vpop.f32.mrb[0].mxu0
        %v2169 = vadd.f32 %v1104, %v2168
        %v2170 = vpop.f32.mrb[0].mxu0
        %2171 = vmatprep.mubr.bf16.mxu0 0
        %2172 = vmatmul.mubr.bf16.gmra.mrb[0].mxu0 %v1900
        %v2173 = vpop.f32.mrb[0].mxu0
        %v2174 = vadd.f32 %v1109, %v2173
        %v2175 = vpop.f32.mrb[0].mxu0
        %v2176 = vpop.f32.mrb[0].mxu0
        %v2177 = vadd.f32 %v1112, %v2176
        %v2178 = vpop.f32.mrb[0].mxu0
        %2179 = vmatprep.mubr.bf16.mxu0 0
        %2180 = vmatmul.mubr.bf16.gmra.mrb[0].mxu0 %v1903
        %v2181 = vpop.f32.mrb[0].mxu0
        %v2182 = vadd.f32 %v1117, %v2181
        %v2183 = vpop.f32.mrb[0].mxu0
        %v2184 = vpop.f32.mrb[0].mxu0
        %v2185 = vadd.f32 %v1120, %v2184
        %v2186 = vpop.f32.mrb[0].mxu0
        %2187 = vmatprep.mubr.bf16.mxu0 0
        %2188 = vmatmul.mubr.bf16.gmra.mrb[0].mxu0 %v1906
        %v2189 = vpop.f32.mrb[0].mxu0
        %v2190 = vadd.f32 %v1125, %v2189
        %v2191 = vpop.f32.mrb[0].mxu0
        %v2192 = vpop.f32.mrb[0].mxu0
        %v2193 = vadd.f32 %v1128, %v2192
        %v2194 = vpop.f32.mrb[0].mxu0
        %2195 = vmatprep.mubr.bf16.mxu0 0
        %2196 = vmatmul.mubr.bf16.gmra.mrb[0].mxu0 %v1909
        %v2197 = vpop.f32.mrb[0].mxu0
        %v2198 = vadd.f32 %v1133, %v2197
        %v2199 = vpop.f32.mrb[0].mxu0
        %v2200 = vpop.f32.mrb[0].mxu0
        %v2201 = vadd.f32 %v1136, %v2200
        %v2202 = vpop.f32.mrb[0].mxu0
        %2203 = vmatprep.mubr.bf16.mxu0 0
        %2204 = vmatmul.mubr.bf16.gmra.mrb[0].mxu0 %v1912
        %v2205 = vpop.f32.mrb[0].mxu0
        %v2206 = vadd.f32 %v1141, %v2205
        %v2207 = vpop.f32.mrb[0].mxu0
        %v2208 = vpop.f32.mrb[0].mxu0
        %v2209 = vadd.f32 %v1144, %v2208
        %v2210 = vpop.f32.mrb[0].mxu0
        %2211 = vmatprep.mubr.bf16.mxu0 0
        %2212 = vmatmul.mubr.bf16.gmra.mrb[0].mxu0 %v1915
        %v2213 = vpop.f32.mrb[0].mxu0
        %v2214 = vadd.f32 %v1149, %v2213
        %v2215 = vpop.f32.mrb[0].mxu0
        %v2216 = vpop.f32.mrb[0].mxu0
        %v2217 = vadd.f32 %v1152, %v2216
        %v2218 = vpop.f32.mrb[0].mxu0
        %2219 = vmatprep.mubr.bf16.mxu0 0
        %2220 = vmatmul.mubr.bf16.gmra.mrb[0].mxu0 %v1918
        %v2221 = vpop.f32.mrb[0].mxu0
        %v2222 = vadd.f32 %v1157, %v2221
        %v2223 = vpop.f32.mrb[0].mxu0
        %v2224 = vpop.f32.mrb[0].mxu0
        %v2225 = vadd.f32 %v1160, %v2224
        %v2226 = vpop.f32.mrb[0].mxu0
        %2227 = vmatprep.mubr.bf16.mxu0 0
        %2228 = vmatmul.mubr.bf16.gmra.mrb[0].mxu0 %v1921
        %v2229 = vpop.f32.mrb[0].mxu0
        %v2230 = vadd.f32 %v1165, %v2229
        %v2231 = vpop.f32.mrb[0].mxu0
        %v2232 = vpop.f32.mrb[0].mxu0
        %v2233 = vadd.f32 %v1168, %v2232
        %v2234 = vpop.f32.mrb[0].mxu0
        %2235 = vmatprep.mubr.bf16.mxu0 0
        %2236 = vmatmul.mubr.bf16.gmra.mrb[0].mxu0 %v1924
        %v2237 = vpop.f32.mrb[0].mxu0
        %v2238 = vadd.f32 %v1173, %v2237
        %v2239 = vpop.f32.mrb[0].mxu0
        %v2240 = vpop.f32.mrb[0].mxu0
        %v2241 = vadd.f32 %v1176, %v2240
        %v2242 = vpop.f32.mrb[0].mxu0
        %2243 = vmatprep.mubr.bf16.mxu0 0
        %2244 = vmatmul.mubr.bf16.gmra.mrb[0].mxu0 %v1927
        %v2245 = vpop.f32.mrb[0].mxu0
        %v2246 = vadd.f32 %v1181, %v2245
        %v2247 = vpop.f32.mrb[0].mxu0
        %v2248 = vpop.f32.mrb[0].mxu0
        %v2249 = vadd.f32 %v1184, %v2248
        %v2250 = vpop.f32.mrb[0].mxu0
        %2251 = vmatprep.mubr.bf16.mxu0 0
        %2252 = vmatmul.mubr.bf16.gmra.mrb[0].mxu0 %v1930
        %v2253 = vpop.f32.mrb[0].mxu0
        %v2254 = vadd.f32 %v1189, %v2253
        %v2255 = vpop.f32.mrb[0].mxu0
        %v2256 = vpop.f32.mrb[0].mxu0
        %v2257 = vadd.f32 %v1192, %v2256
        %v2258 = vpop.f32.mrb[0].mxu0
        %2259 = vmatprep.mubr.bf16.mxu0 0
        %2260 = vmatmul.mubr.bf16.gmra.mrb[0].mxu0 %v1933
        %v2261 = vpop.f32.mrb[0].mxu0
        %v2262 = vadd.f32 %v1197, %v2261
        %v2263 = vpop.f32.mrb[0].mxu0
        %v2264 = vpop.f32.mrb[0].mxu0
        %v2265 = vadd.f32 %v1200, %v2264
        %v2266 = vpop.f32.mrb[0].mxu0
        %2267 = vmatprep.mubr.bf16.mxu0 0
        %2268 = vmatmul.mubr.bf16.gmra.mrb[0].mxu0 %v1936
        %v2269 = vpop.f32.mrb[0].mxu0
        %v2270 = vadd.f32 %v1205, %v2269
        %v2271 = vpop.f32.mrb[0].mxu0
        %v2272 = vpop.f32.mrb[0].mxu0
        %v2273 = vadd.f32 %v1208, %v2272
        %v2274 = vpop.f32.mrb[0].mxu0
        %2275 = vmatprep.mubr.bf16.mxu0 0
        %2276 = vmatmul.mubr.bf16.gmra.mrb[0].mxu0 %v1939
        %v2277 = vpop.f32.mrb[0].mxu0
        %v2278 = vadd.f32 %v1213, %v2277
        %v2279 = vpop.f32.mrb[0].mxu0
        %v2280 = vpop.f32.mrb[0].mxu0
        %v2281 = vadd.f32 %v1216, %v2280
        %v2282 = vpop.f32.mrb[0].mxu0
        %2283 = vmatprep.mubr.bf16.mxu0 0
        %2284 = vmatmul.mubr.bf16.gmra.mrb[0].mxu0 %v1942
        %v2285 = vpop.f32.mrb[0].mxu0
        %v2286 = vadd.f32 %v1221, %v2285
        %v2287 = vpop.f32.mrb[0].mxu0
        %v2288 = vpop.f32.mrb[0].mxu0
        %v2289 = vadd.f32 %v1224, %v2288
        %v2290 = vpop.f32.mrb[0].mxu0
        %2291 = vmatprep.mubr.bf16.mxu0 0
        %2292 = vmatmul.mubr.bf16.gmra.mrb[0].mxu0 %v1945
        %v2293 = vpop.f32.mrb[0].mxu0
        %v2294 = vadd.f32 %v1229, %v2293
        %v2295 = vpop.f32.mrb[0].mxu0
        %v2296 = vpop.f32.mrb[0].mxu0
        %v2297 = vadd.f32 %v1232, %v2296
        %v2298 = vpop.f32.mrb[0].mxu0
        %2299 = vmatprep.mubr.bf16.mxu0 0
        %2300 = vmatmul.mubr.bf16.gmra.mrb[0].mxu0 %v1948
        %v2301 = vpop.f32.mrb[0].mxu0
        %v2302 = vadd.f32 %v1237, %v2301
        %v2303 = vpop.f32.mrb[0].mxu0
        %v2304 = vpop.f32.mrb[0].mxu0
        %v2305 = vadd.f32 %v1240, %v2304
        %v2306 = vpop.f32.mrb[0].mxu0
        %2307 = vmatprep.mubr.bf16.mxu0 0
        %2308 = vmatmul.mubr.bf16.gmra.mrb[0].mxu0 %v1951
        %v2309 = vpop.f32.mrb[0].mxu0
        %v2310 = vadd.f32 %v1245, %v2309
        %v2311 = vpop.f32.mrb[0].mxu0
        %v2312 = vpop.f32.mrb[0].mxu0
        %v2313 = vadd.f32 %v1248, %v2312
        %v2314 = vpop.f32.mrb[0].mxu0
        %2315 = vmatprep.mubr.bf16.mxu0 0
        %2316 = vmatmul.mubr.bf16.gmra.mrb[0].mxu0 %v1954
        %v2317 = vpop.f32.mrb[0].mxu0
        %v2318 = vadd.f32 %v1253, %v2317
        %v2319 = vpop.f32.mrb[0].mxu0
        %v2320 = vpop.f32.mrb[0].mxu0
        %v2321 = vadd.f32 %v1256, %v2320
        %v2322 = vpop.f32.mrb[0].mxu0
        %2323 = vmatprep.mubr.bf16.mxu0 0
        %2324 = vmatmul.mubr.bf16.gmra.mrb[0].mxu0 %v1957
        %v2325 = vpop.f32.mrb[0].mxu0
        %v2326 = vadd.f32 %v1261, %v2325
        %v2327 = vpop.f32.mrb[0].mxu0
        %v2328 = vpop.f32.mrb[0].mxu0
        %v2329 = vadd.f32 %v1264, %v2328
        %v2330 = vpop.f32.mrb[0].mxu0
        %2331 = vmatprep.mubr.bf16.mxu0 0
        %2332 = vmatmul.mubr.bf16.gmra.mrb[0].mxu0 %v1960
        %v2333 = vpop.f32.mrb[0].mxu0
        %v2334 = vadd.f32 %v1269, %v2333
        %v2335 = vpop.f32.mrb[0].mxu0
        %v2336 = vpop.f32.mrb[0].mxu0
        %v2337 = vadd.f32 %v1272, %v2336
        %v2338 = vpop.f32.mrb[0].mxu0
        %2339 = vmatprep.mubr.bf16.mxu0 0
        %2340 = vmatmul.mubr.bf16.gmra.mrb[0].mxu0 %v1963
        %v2341 = vpop.f32.mrb[0].mxu0
        %v2342 = vadd.f32 %v1277, %v2341
        %v2343 = vpop.f32.mrb[0].mxu0
        %v2344 = vpop.f32.mrb[0].mxu0
        %v2345 = vadd.f32 %v1280, %v2344
        %v2346 = vpop.f32.mrb[0].mxu0
        %2347 = vmatprep.mubr.bf16.mxu0 0
        %2348 = vmatmul.mubr.bf16.gmra.mrb[0].mxu0 %v1966
        %v2349 = vpop.f32.mrb[0].mxu0
        %v2350 = vadd.f32 %v1285, %v2349
        %v2351 = vpop.f32.mrb[0].mxu0
        %v2352 = vpop.f32.mrb[0].mxu0
        %v2353 = vadd.f32 %v1288, %v2352
        %v2354 = vpop.f32.mrb[0].mxu0
        %2355 = vmatprep.mubr.bf16.mxu0 0
        %2356 = vmatmul.mubr.bf16.gmra.mrb[0].mxu0 %v1969
        %v2357 = vpop.f32.mrb[0].mxu0
        %v2358 = vadd.f32 %v1293, %v2357
        %v2359 = vpop.f32.mrb[0].mxu0
        %v2360 = vpop.f32.mrb[0].mxu0
        %v2361 = vadd.f32 %v1296, %v2360
        %v2362 = vpop.f32.mrb[0].mxu0
        %2363 = vmatprep.mubr.bf16.mxu0 0
        %2364 = vmatmul.mubr.bf16.gmra.mrb[0].mxu0 %v1972
        %v2365 = vpop.f32.mrb[0].mxu0
        %v2366 = vadd.f32 %v1301, %v2365
        %v2367 = vpop.f32.mrb[0].mxu0
        %v2368 = vpop.f32.mrb[0].mxu0
        %v2369 = vadd.f32 %v1304, %v2368
        %v2370 = vpop.f32.mrb[0].mxu0
        %2371 = vmatprep.mubr.bf16.mxu0 0
        %2372 = vmatmul.mubr.bf16.gmra.mrb[0].mxu0 %v1975
        %v2373 = vpop.f32.mrb[0].mxu0
        %v2374 = vadd.f32 %v1309, %v2373
        %v2375 = vpop.f32.mrb[0].mxu0
        %v2376 = vpop.f32.mrb[0].mxu0
        %v2377 = vadd.f32 %v1312, %v2376
        %v2378 = vpop.f32.mrb[0].mxu0
        %2379 = vmatprep.mubr.bf16.mxu0 0
        %2380 = vmatmul.mubr.bf16.gmra.mrb[0].mxu0 %v1978
        %v2381 = vpop.f32.mrb[0].mxu0
        %v2382 = vadd.f32 %v1317, %v2381
        %v2383 = vpop.f32.mrb[0].mxu0
        %v2384 = vpop.f32.mrb[0].mxu0
        %v2385 = vadd.f32 %v1320, %v2384
        %v2386 = vpop.f32.mrb[0].mxu0
        %2387 = vmatprep.mubr.bf16.mxu0 0
        %2388 = vmatmul.mubr.bf16.gmra.mrb[0].mxu0 %v1981
        %v2389 = vpop.f32.mrb[0].mxu0
        %v2390 = vadd.f32 %v1325, %v2389
        %v2391 = vpop.f32.mrb[0].mxu0
        %v2392 = vpop.f32.mrb[0].mxu0
        %v2393 = vadd.f32 %v1328, %v2392
        %v2394 = vpop.f32.mrb[0].mxu0
        %2395 = vmatprep.mubr.bf16.mxu0 0
        %2396 = vmatmul.mubr.bf16.gmra.mrb[0].mxu0 %v1984
        %v2397 = vpop.f32.mrb[0].mxu0
        %v2398 = vadd.f32 %v1333, %v2397
        %v2399 = vpop.f32.mrb[0].mxu0
        %v2400 = vpop.f32.mrb[0].mxu0
        %v2401 = vadd.f32 %v1336, %v2400
        %v2402 = vpop.f32.mrb[0].mxu0
        %2403 = vmatprep.mubr.bf16.mxu0 0
        %2404 = vmatmul.mubr.bf16.gmra.mrb[0].mxu0 %v1987
        %v2405 = vpop.f32.mrb[0].mxu0
        %v2406 = vadd.f32 %v1341, %v2405
        %v2407 = vpop.f32.mrb[0].mxu0
        %v2408 = vpop.f32.mrb[0].mxu0
        %v2409 = vadd.f32 %v1344, %v2408
        %v2410 = vpop.f32.mrb[0].mxu0
        %2411 = vmatprep.mubr.bf16.mxu0 0
        %2412 = vmatmul.mubr.bf16.gmra.mrb[0].mxu0 %v1990
        %v2413 = vpop.f32.mrb[0].mxu0
        %v2414 = vadd.f32 %v1349, %v2413
        %v2415 = vpop.f32.mrb[0].mxu0
        %v2416 = vpop.f32.mrb[0].mxu0
        %v2417 = vadd.f32 %v1352, %v2416
        %v2418 = vpop.f32.mrb[0].mxu0
        %2419 = vmatprep.mubr.bf16.mxu0 0
        %2420 = vmatmul.mubr.bf16.gmra.mrb[0].mxu0 %v1993
        %v2421 = vpop.f32.mrb[0].mxu0
        %v2422 = vadd.f32 %v1357, %v2421
        %v2423 = vpop.f32.mrb[0].mxu0
        %v2424 = vpop.f32.mrb[0].mxu0
        %v2425 = vadd.f32 %v1360, %v2424
        %v2426 = vpop.f32.mrb[0].mxu0
        %2427 = vmatprep.mubr.bf16.mxu0 0
        %2428 = vmatmul.mubr.bf16.gmra.mrb[0].mxu0 %v1996
        %v2429 = vpop.f32.mrb[0].mxu0
        %v2430 = vadd.f32 %v1365, %v2429
        %v2431 = vpop.f32.mrb[0].mxu0
        %v2432 = vpop.f32.mrb[0].mxu0
        %v2433 = vadd.f32 %v1368, %v2432
        %v2434 = vpop.f32.mrb[0].mxu0
        %2435 = vmatprep.mubr.bf16.mxu0 0
        %2436 = vmatmul.mubr.bf16.gmra.mrb[0].mxu0 %v1999
        %v2437 = vpop.f32.mrb[0].mxu0
        %v2438 = vadd.f32 %v1373, %v2437
        %v2439 = vpop.f32.mrb[0].mxu0
        %v2440 = vpop.f32.mrb[0].mxu0
        %v2441 = vadd.f32 %v1376, %v2440
        %v2442 = vpop.f32.mrb[0].mxu0
        %2443 = vmatprep.mubr.bf16.mxu0 0
        %2444 = vmatmul.mubr.bf16.gmra.mrb[0].mxu0 %v2002
        %v2445 = vpop.f32.mrb[0].mxu0
        %v2446 = vadd.f32 %v1381, %v2445
        %v2447 = vpop.f32.mrb[0].mxu0
        %v2448 = vpop.f32.mrb[0].mxu0
        %v2449 = vadd.f32 %v1384, %v2448
        %v2450 = vpop.f32.mrb[0].mxu0
        %2451 = vmatprep.mubr.bf16.mxu0 0
        %2452 = vmatmul.mubr.bf16.gmra.mrb[0].mxu0 %v2005
        %v2453 = vpop.f32.mrb[0].mxu0
        %v2454 = vadd.f32 %v1389, %v2453
        %v2455 = vpop.f32.mrb[0].mxu0
        %v2456 = vpop.f32.mrb[0].mxu0
        %v2457 = vadd.f32 %v1392, %v2456
        %v2458 = vpop.f32.mrb[0].mxu0
        %2459 = vmatprep.mubr.bf16.mxu0 0
        %2460 = vmatmul.mubr.bf16.gmra.mrb[0].mxu0 %v2008
        %v2461 = vpop.f32.mrb[0].mxu0
        %v2462 = vadd.f32 %v1397, %v2461
        %v2463 = vpop.f32.mrb[0].mxu0
        %v2464 = vpop.f32.mrb[0].mxu0
        %v2465 = vadd.f32 %v1400, %v2464
        %v2466 = vpop.f32.mrb[0].mxu0
        %2467 = vmatprep.mubr.bf16.mxu0 0
        %2468 = vmatmul.mubr.bf16.gmra.mrb[0].mxu0 %v2011
        %v2469 = vpop.f32.mrb[0].mxu0
        %v2470 = vadd.f32 %v1405, %v2469
        %v2471 = vpop.f32.mrb[0].mxu0
        %v2472 = vpop.f32.mrb[0].mxu0
        %v2473 = vadd.f32 %v1408, %v2472
        %v2474 = vpop.f32.mrb[0].mxu0
        %2475 = vmatprep.mubr.bf16.mxu0 0
        %2476 = vmatmul.mubr.bf16.gmra.mrb[0].mxu0 %v2014
        %v2477 = vpop.f32.mrb[0].mxu0
        %v2478 = vadd.f32 %v1413, %v2477
        %v2479 = vpop.f32.mrb[0].mxu0
        %v2480 = vpop.f32.mrb[0].mxu0
        %v2481 = vadd.f32 %v1416, %v2480
        %v2482 = vpop.f32.mrb[0].mxu0
        %2483 = vmatprep.mubr.bf16.mxu0 0
        %2484 = vmatmul.mubr.bf16.gmra.mrb[0].mxu0 %v2017
        %v2485 = vpop.f32.mrb[0].mxu0
        %v2486 = vadd.f32 %v1421, %v2485
        %v2487 = vpop.f32.mrb[0].mxu0
        %v2488 = vpop.f32.mrb[0].mxu0
        %v2489 = vadd.f32 %v1424, %v2488
        %v2490 = vpop.f32.mrb[0].mxu0
        %2491 = vmatprep.mubr.bf16.mxu0 0
        %2492 = vmatmul.mubr.bf16.gmra.mrb[0].mxu0 %v2020
        %v2493 = vpop.f32.mrb[0].mxu0
        %v2494 = vadd.f32 %v1429, %v2493
        %v2495 = vpop.f32.mrb[0].mxu0
        %v2496 = vpop.f32.mrb[0].mxu0
        %v2497 = vadd.f32 %v1432, %v2496
        %v2498 = vpop.f32.mrb[0].mxu0
        %2499 = vmatprep.mubr.bf16.mxu0 0
        %2500 = vmatmul.mubr.bf16.gmra.mrb[0].mxu0 %v2023
        %v2501 = vpop.f32.mrb[0].mxu0
        %v2502 = vadd.f32 %v1437, %v2501
        %v2503 = vpop.f32.mrb[0].mxu0
        %v2504 = vpop.f32.mrb[0].mxu0
        %v2505 = vadd.f32 %v1440, %v2504
        %v2506 = vpop.f32.mrb[0].mxu0
        %2507 = vmatprep.mubr.bf16.mxu0 0
        %2508 = vmatmul.mubr.bf16.gmra.mrb[0].mxu0 %v2026
        %v2509 = vpop.f32.mrb[0].mxu0
        %v2510 = vadd.f32 %v1445, %v2509
        %v2511 = vpop.f32.mrb[0].mxu0
        %v2512 = vpop.f32.mrb[0].mxu0
        %v2513 = vadd.f32 %v1448, %v2512
        %v2514 = vpop.f32.mrb[0].mxu0
        %2515 = vmatprep.mubr.bf16.mxu0 0
        %2516 = vmatmul.mubr.bf16.gmra.mrb[0].mxu0 %v2029
        %v2517 = vpop.f32.mrb[0].mxu0
        %v2518 = vadd.f32 %v1453, %v2517
        %v2519 = vpop.f32.mrb[0].mxu0
        %v2520 = vpop.f32.mrb[0].mxu0
        %v2521 = vadd.f32 %v1456, %v2520
        %v2522 = vpop.f32.mrb[0].mxu0
        %2523 = vmatprep.mubr.bf16.mxu0 0
        %2524 = vmatmul.mubr.bf16.gmra.mrb[0].mxu0 %v2032
        %v2525 = vpop.f32.mrb[0].mxu0
        %v2526 = vadd.f32 %v1461, %v2525
        %v2527 = vpop.f32.mrb[0].mxu0
        %v2528 = vpop.f32.mrb[0].mxu0
        %v2529 = vadd.f32 %v1464, %v2528
        %v2530 = vpop.f32.mrb[0].mxu0
        %2531 = vmatprep.mubr.bf16.mxu0 0
        %2532 = vmatmul.mubr.bf16.gmra.mrb[0].mxu0 %v2035
        %v2533 = vpop.f32.mrb[0].mxu0
        %v2534 = vadd.f32 %v1469, %v2533
        %v2535 = vpop.f32.mrb[0].mxu0
        %v2536 = vpop.f32.mrb[0].mxu0
        %v2537 = vadd.f32 %v1472, %v2536
        %v2538 = vpop.f32.mrb[0].mxu0
        %2539 = vmatprep.mubr.bf16.mxu0 0
        %2540 = vmatmul.mubr.bf16.gmra.mrb[0].mxu0 %v2038
        %v2541 = vpop.f32.mrb[0].mxu0
        %v2542 = vadd.f32 %v1477, %v2541
        %v2543 = vpop.f32.mrb[0].mxu0
        %v2544 = vpop.f32.mrb[0].mxu0
        %v2545 = vadd.f32 %v1480, %v2544
        %v2546 = vpop.f32.mrb[0].mxu0
        %2547 = vmatprep.mubr.bf16.mxu0 0
        %2548 = vmatmul.mubr.bf16.gmra.mrb[0].mxu0 %v2041
        %v2549 = vpop.f32.mrb[0].mxu0
        %v2550 = vadd.f32 %v1485, %v2549
        %v2551 = vpop.f32.mrb[0].mxu0
        %v2552 = vpop.f32.mrb[0].mxu0
        %v2553 = vadd.f32 %v1488, %v2552
        %v2554 = vpop.f32.mrb[0].mxu0
        %2555 = vmatprep.mubr.bf16.mxu0 0
        %2556 = vmatmul.mubr.bf16.gmra.mrb[0].mxu0 %v2044
        %v2557 = vpop.f32.mrb[0].mxu0
        %v2558 = vadd.f32 %v1493, %v2557
        %v2559 = vpop.f32.mrb[0].mxu0
        %v2560 = vpop.f32.mrb[0].mxu0
        %v2561 = vadd.f32 %v1496, %v2560
        %v2562 = vpop.f32.mrb[0].mxu0
        %2563 = vmatprep.mubr.bf16.mxu0 0
        %2564 = vmatmul.mubr.bf16.gmra.mrb[0].mxu0 %v2047
        %v2565 = vpop.f32.mrb[0].mxu0
        %v2566 = vadd.f32 %v1501, %v2565
        %v2567 = vpop.f32.mrb[0].mxu0
        %v2568 = vpop.f32.mrb[0].mxu0
        %v2569 = vadd.f32 %v1504, %v2568
        %v2570 = vpop.f32.mrb[0].mxu0
        %2571 = vmatprep.mubr.bf16.mxu0 0
        %2572 = vmatmul.mubr.bf16.gmra.mrb[0].mxu0 %v2050
        %v2573 = vpop.f32.mrb[0].mxu0
        %v2574 = vadd.f32 %v1509, %v2573
        %v2575 = vpop.f32.mrb[0].mxu0
        %v2576 = vpop.f32.mrb[0].mxu0
        %v2577 = vadd.f32 %v1512, %v2576
        %v2578 = vpop.f32.mrb[0].mxu0
        %2579 = vmatprep.mubr.bf16.mxu0 0
        %2580 = vmatmul.mubr.bf16.gmra.mrb[0].mxu0 %v2053
        %v2581 = vpop.f32.mrb[0].mxu0
        %v2582 = vadd.f32 %v1517, %v2581
        %v2583 = vpop.f32.mrb[0].mxu0
        %v2584 = vpop.f32.mrb[0].mxu0
        %v2585 = vadd.f32 %v1520, %v2584
        %v2586 = vpop.f32.mrb[0].mxu0
        %2587 = vmatprep.mubr.bf16.mxu0 0
        %2588 = vmatmul.mubr.bf16.gmra.mrb[0].mxu0 %v2056
        %v2589 = vpop.f32.mrb[0].mxu0
        %v2590 = vadd.f32 %v1525, %v2589
        %v2591 = vpop.f32.mrb[0].mxu0
        %v2592 = vpop.f32.mrb[0].mxu0
        %v2593 = vadd.f32 %v1528, %v2592
        %v2594 = vpop.f32.mrb[0].mxu0
        %2595 = vmatprep.mubr.bf16.mxu0 0
        %2596 = vmatmul.mubr.bf16.gmra.mrb[0].mxu0 %v2059
        %v2597 = vpop.f32.mrb[0].mxu0
        %v2598 = vadd.f32 %v1533, %v2597
        %v2599 = vpop.f32.mrb[0].mxu0
        %v2600 = vpop.f32.mrb[0].mxu0
        %v2601 = vadd.f32 %v1536, %v2600
        %v2602 = vpop.f32.mrb[0].mxu0
        %2603 = vmatprep.mubr.bf16.mxu0 0
        %2604 = vmatmul.mubr.bf16.gmra.mrb[0].mxu0 %v2062
        %v2605 = vpop.f32.mrb[0].mxu0
        %v2606 = vadd.f32 %v1541, %v2605
        %v2607 = vpop.f32.mrb[0].mxu0
        %v2608 = vpop.f32.mrb[0].mxu0
        %v2609 = vadd.f32 %v1544, %v2608
        %v2610 = vpop.f32.mrb[0].mxu0
        %2611 = vdwg.mxu0
        %s2612 = scalar_lea.vmem %s206, 32
        %v2613 = vld [vmem:[%s2612] sm:$0xf]
        %v2614 = vld [vmem:[%s2612 + $0x4] sm:$0xf]
        %v2615 = vld [vmem:[%s2612 + $0x8] sm:$0xf]
        %v2616 = vld [vmem:[%s2612 + $0xc] sm:$0xf]
        %v2617 = vld [vmem:[%s2612 + $0x10] sm:$0xf]
        %v2618 = vld [vmem:[%s2612 + $0x14] sm:$0xf]
        %v2619 = vld [vmem:[%s2612 + $0x18] sm:$0xf]
        %v2620 = vld [vmem:[%s2612 + $0x1c] sm:$0xf]
        %v2621 = vld [vmem:[%s2612 + $0x20] sm:$0xf]
        %v2622 = vld [vmem:[%s2612 + $0x24] sm:$0xf]
        %v2623 = vld [vmem:[%s2612 + $0x28] sm:$0xf]
        %v2624 = vld [vmem:[%s2612 + $0x2c] sm:$0xf]
        %v2625 = vld [vmem:[%s2612 + $0x30] sm:$0xf]
        %v2626 = vld [vmem:[%s2612 + $0x34] sm:$0xf]
        %v2627 = vld [vmem:[%s2612 + $0x38] sm:$0xf]
        %v2628 = vld [vmem:[%s2612 + $0x3c] sm:$0xf]
        %v2629 = vld [vmem:[%s2612 + $0x40] sm:$0xf]
        %v2630 = vld [vmem:[%s2612 + $0x44] sm:$0xf]
        %v2631 = vld [vmem:[%s2612 + $0x48] sm:$0xf]
        %v2632 = vld [vmem:[%s2612 + $0x4c] sm:$0xf]
        %v2633 = vld [vmem:[%s2612 + $0x50] sm:$0xf]
        %v2634 = vld [vmem:[%s2612 + $0x54] sm:$0xf]
        %v2635 = vld [vmem:[%s2612 + $0x58] sm:$0xf]
        %v2636 = vld [vmem:[%s2612 + $0x5c] sm:$0xf]
        %v2637 = vld [vmem:[%s2612 + $0x60] sm:$0xf]
        %v2638 = vld [vmem:[%s2612 + $0x64] sm:$0xf]
        %v2639 = vld [vmem:[%s2612 + $0x68] sm:$0xf]
        %v2640 = vld [vmem:[%s2612 + $0x6c] sm:$0xf]
        %v2641 = vld [vmem:[%s2612 + $0x70] sm:$0xf]
        %v2642 = vld [vmem:[%s2612 + $0x74] sm:$0xf]
        %v2643 = vld [vmem:[%s2612 + $0x78] sm:$0xf]
        %v2644 = vld [vmem:[%s2612 + $0x7c] sm:$0xf]
        %v2645 = vld [vmem:[%s2612 + $0x80] sm:$0xf]
        %v2646 = vld [vmem:[%s2612 + $0x84] sm:$0xf]
        %v2647 = vld [vmem:[%s2612 + $0x88] sm:$0xf]
        %v2648 = vld [vmem:[%s2612 + $0x8c] sm:$0xf]
        %v2649 = vld [vmem:[%s2612 + $0x90] sm:$0xf]
        %v2650 = vld [vmem:[%s2612 + $0x94] sm:$0xf]
        %v2651 = vld [vmem:[%s2612 + $0x98] sm:$0xf]
        %v2652 = vld [vmem:[%s2612 + $0x9c] sm:$0xf]
        %v2653 = vld [vmem:[%s2612 + $0xa0] sm:$0xf]
        %v2654 = vld [vmem:[%s2612 + $0xa4] sm:$0xf]
        %v2655 = vld [vmem:[%s2612 + $0xa8] sm:$0xf]
        %v2656 = vld [vmem:[%s2612 + $0xac] sm:$0xf]
        %v2657 = vld [vmem:[%s2612 + $0xb0] sm:$0xf]
        %v2658 = vld [vmem:[%s2612 + $0xb4] sm:$0xf]
        %v2659 = vld [vmem:[%s2612 + $0xb8] sm:$0xf]
        %v2660 = vld [vmem:[%s2612 + $0xbc] sm:$0xf]
        %v2661 = vld [vmem:[%s2612 + $0xc0] sm:$0xf]
        %v2662 = vld [vmem:[%s2612 + $0xc4] sm:$0xf]
        %v2663 = vld [vmem:[%s2612 + $0xc8] sm:$0xf]
        %v2664 = vld [vmem:[%s2612 + $0xcc] sm:$0xf]
        %v2665 = vld [vmem:[%s2612 + $0xd0] sm:$0xf]
        %v2666 = vld [vmem:[%s2612 + $0xd4] sm:$0xf]
        %v2667 = vld [vmem:[%s2612 + $0xd8] sm:$0xf]
        %v2668 = vld [vmem:[%s2612 + $0xdc] sm:$0xf]
        %v2669 = vld [vmem:[%s2612 + $0xe0] sm:$0xf]
        %v2670 = vld [vmem:[%s2612 + $0xe4] sm:$0xf]
        %v2671 = vld [vmem:[%s2612 + $0xe8] sm:$0xf]
        %v2672 = vld [vmem:[%s2612 + $0xec] sm:$0xf]
        %v2673 = vld [vmem:[%s2612 + $0xf0] sm:$0xf]
        %v2674 = vld [vmem:[%s2612 + $0xf4] sm:$0xf]
        %v2675 = vld [vmem:[%s2612 + $0xf8] sm:$0xf]
        %v2676 = vld [vmem:[%s2612 + $0xfc] sm:$0xf]
        %v2677 = vld [vmem:[%s2612 + $0x100] sm:$0xf]
        %v2678 = vld [vmem:[%s2612 + $0x104] sm:$0xf]
        %v2679 = vld [vmem:[%s2612 + $0x108] sm:$0xf]
        %v2680 = vld [vmem:[%s2612 + $0x10c] sm:$0xf]
        %v2681 = vld [vmem:[%s2612 + $0x110] sm:$0xf]
        %v2682 = vld [vmem:[%s2612 + $0x114] sm:$0xf]
        %v2683 = vld [vmem:[%s2612 + $0x118] sm:$0xf]
        %v2684 = vld [vmem:[%s2612 + $0x11c] sm:$0xf]
        %v2685 = vld [vmem:[%s2612 + $0x120] sm:$0xf]
        %v2686 = vld [vmem:[%s2612 + $0x124] sm:$0xf]
        %v2687 = vld [vmem:[%s2612 + $0x128] sm:$0xf]
        %v2688 = vld [vmem:[%s2612 + $0x12c] sm:$0xf]
        %v2689 = vld [vmem:[%s2612 + $0x130] sm:$0xf]
        %v2690 = vld [vmem:[%s2612 + $0x134] sm:$0xf]
        %v2691 = vld [vmem:[%s2612 + $0x138] sm:$0xf]
        %v2692 = vld [vmem:[%s2612 + $0x13c] sm:$0xf]
        %v2693 = vld [vmem:[%s2612 + $0x140] sm:$0xf]
        %v2694 = vld [vmem:[%s2612 + $0x144] sm:$0xf]
        %v2695 = vld [vmem:[%s2612 + $0x148] sm:$0xf]
        %v2696 = vld [vmem:[%s2612 + $0x14c] sm:$0xf]
        %v2697 = vld [vmem:[%s2612 + $0x150] sm:$0xf]
        %v2698 = vld [vmem:[%s2612 + $0x154] sm:$0xf]
        %v2699 = vld [vmem:[%s2612 + $0x158] sm:$0xf]
        %v2700 = vld [vmem:[%s2612 + $0x15c] sm:$0xf]
        %v2701 = vld [vmem:[%s2612 + $0x160] sm:$0xf]
        %v2702 = vld [vmem:[%s2612 + $0x164] sm:$0xf]
        %v2703 = vld [vmem:[%s2612 + $0x168] sm:$0xf]
        %v2704 = vld [vmem:[%s2612 + $0x16c] sm:$0xf]
        %v2705 = vld [vmem:[%s2612 + $0x170] sm:$0xf]
        %v2706 = vld [vmem:[%s2612 + $0x174] sm:$0xf]
        %v2707 = vld [vmem:[%s2612 + $0x178] sm:$0xf]
        %v2708 = vld [vmem:[%s2612 + $0x17c] sm:$0xf]
        %v2709 = vld [vmem:[%s2612 + $0x180] sm:$0xf]
        %v2710 = vld [vmem:[%s2612 + $0x184] sm:$0xf]
        %v2711 = vld [vmem:[%s2612 + $0x188] sm:$0xf]
        %v2712 = vld [vmem:[%s2612 + $0x18c] sm:$0xf]
        %v2713 = vld [vmem:[%s2612 + $0x190] sm:$0xf]
        %v2714 = vld [vmem:[%s2612 + $0x194] sm:$0xf]
        %v2715 = vld [vmem:[%s2612 + $0x198] sm:$0xf]
        %v2716 = vld [vmem:[%s2612 + $0x19c] sm:$0xf]
        %v2717 = vld [vmem:[%s2612 + $0x1a0] sm:$0xf]
        %v2718 = vld [vmem:[%s2612 + $0x1a4] sm:$0xf]
        %v2719 = vld [vmem:[%s2612 + $0x1a8] sm:$0xf]
        %v2720 = vld [vmem:[%s2612 + $0x1ac] sm:$0xf]
        %v2721 = vld [vmem:[%s2612 + $0x1b0] sm:$0xf]
        %v2722 = vld [vmem:[%s2612 + $0x1b4] sm:$0xf]
        %v2723 = vld [vmem:[%s2612 + $0x1b8] sm:$0xf]
        %v2724 = vld [vmem:[%s2612 + $0x1bc] sm:$0xf]
        %v2725 = vld [vmem:[%s2612 + $0x1c0] sm:$0xf]
        %v2726 = vld [vmem:[%s2612 + $0x1c4] sm:$0xf]
        %v2727 = vld [vmem:[%s2612 + $0x1c8] sm:$0xf]
        %v2728 = vld [vmem:[%s2612 + $0x1cc] sm:$0xf]
        %v2729 = vld [vmem:[%s2612 + $0x1d0] sm:$0xf]
        %v2730 = vld [vmem:[%s2612 + $0x1d4] sm:$0xf]
        %v2731 = vld [vmem:[%s2612 + $0x1d8] sm:$0xf]
        %v2732 = vld [vmem:[%s2612 + $0x1dc] sm:$0xf]
        %v2733 = vld [vmem:[%s2612 + $0x1e0] sm:$0xf]
        %v2734 = vld [vmem:[%s2612 + $0x1e4] sm:$0xf]
        %v2735 = vld [vmem:[%s2612 + $0x1e8] sm:$0xf]
        %v2736 = vld [vmem:[%s2612 + $0x1ec] sm:$0xf]
        %v2737 = vld [vmem:[%s2612 + $0x1f0] sm:$0xf]
        %v2738 = vld [vmem:[%s2612 + $0x1f4] sm:$0xf]
        %v2739 = vld [vmem:[%s2612 + $0x1f8] sm:$0xf]
        %v2740 = vld [vmem:[%s2612 + $0x1fc] sm:$0xf]
        %s2741 = scalar_lea.vmem %s210, 16
        %v2742 = vld [vmem:[%s2741] sm:$0xf]
        %v2743 = vld [vmem:[%s2741 + $0x4] sm:$0x1]
        %v2872 = vunpack.c.l.b16 %v2613
        %v2873 = vunpack.c.l.b16 %v2614
        %v2874 = vunpack.c.l.b16 %v2615
        %v2875 = vunpack.c.l.b16 %v2616
        %v2876 = vunpack.c.l.b16 %v2617
        %v2877 = vunpack.c.l.b16 %v2618
        %v2878 = vunpack.c.l.b16 %v2619
        %v2879 = vunpack.c.l.b16 %v2620
        %v2880 = vunpack.c.l.b16 %v2621
        %v2881 = vunpack.c.l.b16 %v2622
        %v2882 = vunpack.c.l.b16 %v2623
        %v2883 = vunpack.c.l.b16 %v2624
        %v2884 = vunpack.c.l.b16 %v2625
        %v2885 = vunpack.c.l.b16 %v2626
        %v2886 = vunpack.c.l.b16 %v2627
        %v2887 = vunpack.c.l.b16 %v2628
        %v2888 = vunpack.c.l.b16 %v2629
        %v2889 = vunpack.c.l.b16 %v2630
        %v2890 = vunpack.c.l.b16 %v2631
        %v2891 = vunpack.c.l.b16 %v2632
        %v2892 = vunpack.c.l.b16 %v2633
        %v2893 = vunpack.c.l.b16 %v2634
        %v2894 = vunpack.c.l.b16 %v2635
        %v2895 = vunpack.c.l.b16 %v2636
        %v2896 = vunpack.c.l.b16 %v2637
        %v2897 = vunpack.c.l.b16 %v2638
        %v2898 = vunpack.c.l.b16 %v2639
        %v2899 = vunpack.c.l.b16 %v2640
        %v2900 = vunpack.c.l.b16 %v2641
        %v2901 = vunpack.c.l.b16 %v2642
        %v2902 = vunpack.c.l.b16 %v2643
        %v2903 = vunpack.c.l.b16 %v2644
        %v2904 = vunpack.c.l.b16 %v2645
        %v2905 = vunpack.c.l.b16 %v2646
        %v2906 = vunpack.c.l.b16 %v2647
        %v2907 = vunpack.c.l.b16 %v2648
        %v2908 = vunpack.c.l.b16 %v2649
        %v2909 = vunpack.c.l.b16 %v2650
        %v2910 = vunpack.c.l.b16 %v2651
        %v2911 = vunpack.c.l.b16 %v2652
        %v2912 = vunpack.c.l.b16 %v2653
        %v2913 = vunpack.c.l.b16 %v2654
        %v2914 = vunpack.c.l.b16 %v2655
        %v2915 = vunpack.c.l.b16 %v2656
        %v2916 = vunpack.c.l.b16 %v2657
        %v2917 = vunpack.c.l.b16 %v2658
        %v2918 = vunpack.c.l.b16 %v2659
        %v2919 = vunpack.c.l.b16 %v2660
        %v2920 = vunpack.c.l.b16 %v2661
        %v2921 = vunpack.c.l.b16 %v2662
        %v2922 = vunpack.c.l.b16 %v2663
        %v2923 = vunpack.c.l.b16 %v2664
        %v2924 = vunpack.c.l.b16 %v2665
        %v2925 = vunpack.c.l.b16 %v2666
        %v2926 = vunpack.c.l.b16 %v2667
        %v2927 = vunpack.c.l.b16 %v2668
        %v2928 = vunpack.c.l.b16 %v2669
        %v2929 = vunpack.c.l.b16 %v2670
        %v2930 = vunpack.c.l.b16 %v2671
        %v2931 = vunpack.c.l.b16 %v2672
        %v2932 = vunpack.c.l.b16 %v2673
        %v2933 = vunpack.c.l.b16 %v2674
        %v2934 = vunpack.c.l.b16 %v2675
        %v2935 = vunpack.c.l.b16 %v2676
        %v2936 = vunpack.c.l.b16 %v2677
        %v2937 = vunpack.c.l.b16 %v2678
        %v2938 = vunpack.c.l.b16 %v2679
        %v2939 = vunpack.c.l.b16 %v2680
        %v2940 = vunpack.c.l.b16 %v2681
        %v2941 = vunpack.c.l.b16 %v2682
        %v2942 = vunpack.c.l.b16 %v2683
        %v2943 = vunpack.c.l.b16 %v2684
        %v2944 = vunpack.c.l.b16 %v2685
        %v2945 = vunpack.c.l.b16 %v2686
        %v2946 = vunpack.c.l.b16 %v2687
        %v2947 = vunpack.c.l.b16 %v2688
        %v2948 = vunpack.c.l.b16 %v2689
        %v2949 = vunpack.c.l.b16 %v2690
        %v2950 = vunpack.c.l.b16 %v2691
        %v2951 = vunpack.c.l.b16 %v2692
        %v2952 = vunpack.c.l.b16 %v2693
        %v2953 = vunpack.c.l.b16 %v2694
        %v2954 = vunpack.c.l.b16 %v2695
        %v2955 = vunpack.c.l.b16 %v2696
        %v2956 = vunpack.c.l.b16 %v2697
        %v2957 = vunpack.c.l.b16 %v2698
        %v2958 = vunpack.c.l.b16 %v2699
        %v2959 = vunpack.c.l.b16 %v2700
        %v2960 = vunpack.c.l.b16 %v2701
        %v2961 = vunpack.c.l.b16 %v2702
        %v2962 = vunpack.c.l.b16 %v2703
        %v2963 = vunpack.c.l.b16 %v2704
        %v2964 = vunpack.c.l.b16 %v2705
        %v2965 = vunpack.c.l.b16 %v2706
        %v2966 = vunpack.c.l.b16 %v2707
        %v2967 = vunpack.c.l.b16 %v2708
        %v2968 = vunpack.c.l.b16 %v2709
        %v2969 = vunpack.c.l.b16 %v2710
        %v2970 = vunpack.c.l.b16 %v2711
        %v2971 = vunpack.c.l.b16 %v2712
        %v2972 = vunpack.c.l.b16 %v2713
        %v2973 = vunpack.c.l.b16 %v2714
        %v2974 = vunpack.c.l.b16 %v2715
        %v2975 = vunpack.c.l.b16 %v2716
        %v2976 = vunpack.c.l.b16 %v2717
        %v2977 = vunpack.c.l.b16 %v2718
        %v2978 = vunpack.c.l.b16 %v2719
        %v2979 = vunpack.c.l.b16 %v2720
        %v2980 = vunpack.c.l.b16 %v2721
        %v2981 = vunpack.c.l.b16 %v2722
        %v2982 = vunpack.c.l.b16 %v2723
        %v2983 = vunpack.c.l.b16 %v2724
        %v2984 = vunpack.c.l.b16 %v2725
        %v2985 = vunpack.c.l.b16 %v2726
        %v2986 = vunpack.c.l.b16 %v2727
        %v2987 = vunpack.c.l.b16 %v2728
        %v2988 = vunpack.c.l.b16 %v2729
        %v2989 = vunpack.c.l.b16 %v2730
        %v2990 = vunpack.c.l.b16 %v2731
        %v2991 = vunpack.c.l.b16 %v2732
        %v2992 = vunpack.c.l.b16 %v2733
        %v2993 = vunpack.c.l.b16 %v2734
        %v2994 = vunpack.c.l.b16 %v2735
        %v2995 = vunpack.c.l.b16 %v2736
        %v2996 = vunpack.c.l.b16 %v2737
        %v2997 = vunpack.c.l.b16 %v2738
        %v2998 = vunpack.c.l.b16 %v2739
        %v2999 = vunpack.c.l.b16 %v2740
        %v3000 = vpack.c.b16 %v2873, %v2872
        %v3001 = vpack.c.b16 %v2875, %v2874
        %v3002 = vpack.c.b16 %v2877, %v2876
        %v3003 = vpack.c.b16 %v2879, %v2878
        %v3004 = vpack.c.b16 %v2881, %v2880
        %v3005 = vpack.c.b16 %v2883, %v2882
        %v3006 = vpack.c.b16 %v2885, %v2884
        %v3007 = vpack.c.b16 %v2887, %v2886
        %v3008 = vpack.c.b16 %v2889, %v2888
        %v3009 = vpack.c.b16 %v2891, %v2890
        %v3010 = vpack.c.b16 %v2893, %v2892
        %v3011 = vpack.c.b16 %v2895, %v2894
        %v3012 = vpack.c.b16 %v2897, %v2896
        %v3013 = vpack.c.b16 %v2899, %v2898
        %v3014 = vpack.c.b16 %v2901, %v2900
        %v3015 = vpack.c.b16 %v2903, %v2902
        %v3016 = vpack.c.b16 %v2905, %v2904
        %v3017 = vpack.c.b16 %v2907, %v2906
        %v3018 = vpack.c.b16 %v2909, %v2908
        %v3019 = vpack.c.b16 %v2911, %v2910
        %v3020 = vpack.c.b16 %v2913, %v2912
        %v3021 = vpack.c.b16 %v2915, %v2914
        %v3022 = vpack.c.b16 %v2917, %v2916
        %v3023 = vpack.c.b16 %v2919, %v2918
        %v3024 = vpack.c.b16 %v2921, %v2920
        %v3025 = vpack.c.b16 %v2923, %v2922
        %v3026 = vpack.c.b16 %v2925, %v2924
        %v3027 = vpack.c.b16 %v2927, %v2926
        %v3028 = vpack.c.b16 %v2929, %v2928
        %v3029 = vpack.c.b16 %v2931, %v2930
        %v3030 = vpack.c.b16 %v2933, %v2932
        %v3031 = vpack.c.b16 %v2935, %v2934
        %v3032 = vpack.c.b16 %v2937, %v2936
        %v3033 = vpack.c.b16 %v2939, %v2938
        %v3034 = vpack.c.b16 %v2941, %v2940
        %v3035 = vpack.c.b16 %v2943, %v2942
        %v3036 = vpack.c.b16 %v2945, %v2944
        %v3037 = vpack.c.b16 %v2947, %v2946
        %v3038 = vpack.c.b16 %v2949, %v2948
        %v3039 = vpack.c.b16 %v2951, %v2950
        %v3040 = vpack.c.b16 %v2953, %v2952
        %v3041 = vpack.c.b16 %v2955, %v2954
        %v3042 = vpack.c.b16 %v2957, %v2956
        %v3043 = vpack.c.b16 %v2959, %v2958
        %v3044 = vpack.c.b16 %v2961, %v2960
        %v3045 = vpack.c.b16 %v2963, %v2962
        %v3046 = vpack.c.b16 %v2965, %v2964
        %v3047 = vpack.c.b16 %v2967, %v2966
        %v3048 = vpack.c.b16 %v2969, %v2968
        %v3049 = vpack.c.b16 %v2971, %v2970
        %v3050 = vpack.c.b16 %v2973, %v2972
        %v3051 = vpack.c.b16 %v2975, %v2974
        %v3052 = vpack.c.b16 %v2977, %v2976
        %v3053 = vpack.c.b16 %v2979, %v2978
        %v3054 = vpack.c.b16 %v2981, %v2980
        %v3055 = vpack.c.b16 %v2983, %v2982
        %v3056 = vpack.c.b16 %v2985, %v2984
        %v3057 = vpack.c.b16 %v2987, %v2986
        %v3058 = vpack.c.b16 %v2989, %v2988
        %v3059 = vpack.c.b16 %v2991, %v2990
        %v3060 = vpack.c.b16 %v2993, %v2992
        %v3061 = vpack.c.b16 %v2995, %v2994
        %v3062 = vpack.c.b16 %v2997, %v2996
        %v3063 = vpack.c.b16 %v2999, %v2998
        %v3066 = vunpack.c.l.b16 %v2742
        %v3067 = vunpack.c.l.b16 %v2743
        %v3068 = vpack.c.b16 %v3067, %v3066
        %v3070 = vsel %vm802, %v3000, 0
        %v3073 = vsel %vm802, %v3001, 0
        %v3076 = vsel %vm802, %v3002, 0
        %v3079 = vsel %vm802, %v3003, 0
        %v3082 = vsel %vm802, %v3004, 0
        %v3085 = vsel %vm802, %v3005, 0
        %v3088 = vsel %vm802, %v3006, 0
        %v3091 = vsel %vm802, %v3007, 0
        %v3094 = vsel %vm802, %v3008, 0
        %v3097 = vsel %vm802, %v3009, 0
        %v3100 = vsel %vm802, %v3010, 0
        %v3103 = vsel %vm802, %v3011, 0
        %v3106 = vsel %vm802, %v3012, 0
        %v3109 = vsel %vm802, %v3013, 0
        %v3112 = vsel %vm802, %v3014, 0
        %v3115 = vsel %vm802, %v3015, 0
        %v3118 = vsel %vm802, %v3016, 0
        %v3121 = vsel %vm802, %v3017, 0
        %v3124 = vsel %vm802, %v3018, 0
        %v3127 = vsel %vm802, %v3019, 0
        %v3130 = vsel %vm802, %v3020, 0
        %v3133 = vsel %vm802, %v3021, 0
        %v3136 = vsel %vm802, %v3022, 0
        %v3139 = vsel %vm802, %v3023, 0
        %v3142 = vsel %vm802, %v3024, 0
        %v3145 = vsel %vm802, %v3025, 0
        %v3148 = vsel %vm802, %v3026, 0
        %v3151 = vsel %vm802, %v3027, 0
        %v3154 = vsel %vm802, %v3028, 0
        %v3157 = vsel %vm802, %v3029, 0
        %v3160 = vsel %vm802, %v3030, 0
        %v3163 = vsel %vm802, %v3031, 0
        %v3166 = vsel %vm802, %v3032, 0
        %v3169 = vsel %vm802, %v3033, 0
        %v3172 = vsel %vm802, %v3034, 0
        %v3175 = vsel %vm802, %v3035, 0
        %v3178 = vsel %vm802, %v3036, 0
        %v3181 = vsel %vm802, %v3037, 0
        %v3184 = vsel %vm802, %v3038, 0
        %v3187 = vsel %vm802, %v3039, 0
        %v3190 = vsel %vm802, %v3040, 0
        %v3193 = vsel %vm802, %v3041, 0
        %v3196 = vsel %vm802, %v3042, 0
        %v3199 = vsel %vm802, %v3043, 0
        %v3202 = vsel %vm802, %v3044, 0
        %v3205 = vsel %vm802, %v3045, 0
        %v3208 = vsel %vm802, %v3046, 0
        %v3211 = vsel %vm802, %v3047, 0
        %v3214 = vsel %vm802, %v3048, 0
        %v3217 = vsel %vm802, %v3049, 0
        %v3220 = vsel %vm802, %v3050, 0
        %v3223 = vsel %vm802, %v3051, 0
        %v3226 = vsel %vm802, %v3052, 0
        %v3229 = vsel %vm802, %v3053, 0
        %v3232 = vsel %vm802, %v3054, 0
        %v3235 = vsel %vm802, %v3055, 0
        %v3238 = vsel %vm802, %v3056, 0
        %v3241 = vsel %vm802, %v3057, 0
        %v3244 = vsel %vm802, %v3058, 0
        %v3247 = vsel %vm802, %v3059, 0
        %v3250 = vsel %vm802, %v3060, 0
        %v3253 = vsel %vm802, %v3061, 0
        %v3256 = vsel %vm802, %v3062, 0
        %v3259 = vsel %vm802, %v3063, 0
        %v3262 = vand.u32 %v3068, %v998
        %3264 = vmatprep.subr.bf16.mxu0 0
        %3265 = vmatpush1.bf16.msra.mxu0 %v3262
        %3266 = vmatprep.subr.bf16.mxu0 0
        %3267 = vmatpush1.bf16.msra.mxu0 0
        %3268 = vmatprep.subr.bf16.mxu0 0
        %3269 = vmatpush1.bf16.msra.mxu0 0
        %3270 = vmatprep.subr.bf16.mxu0 0
        %3271 = vmatpush1.bf16.msra.mxu0 0
        %3272 = vmatprep.subr.bf16.mxu0 0
        %3273 = vmatpush1.bf16.msra.mxu0 0
        %3274 = vmatprep.subr.bf16.mxu0 0
        %3275 = vmatpush1.bf16.msra.mxu0 0
        %3276 = vmatprep.subr.bf16.mxu0 0
        %3277 = vmatpush1.bf16.msra.mxu0 0
        %3278 = vmatprep.subr.bf16.mxu0 0
        %3279 = vmatpush1.bf16.msra.mxu0 0
        %3280 = vmatprep.subr.bf16.mxu0 0
        %3281 = vmatpush1.bf16.msra.mxu0 0
        %3282 = vmatprep.subr.bf16.mxu0 0
        %3283 = vmatpush1.bf16.msra.mxu0 0
        %3284 = vmatprep.subr.bf16.mxu0 0
        %3285 = vmatpush1.bf16.msra.mxu0 0
        %3286 = vmatprep.subr.bf16.mxu0 0
        %3287 = vmatpush1.bf16.msra.mxu0 0
        %3288 = vmatprep.subr.bf16.mxu0 0
        %3289 = vmatpush1.bf16.msra.mxu0 0
        %3290 = vmatprep.subr.bf16.mxu0 0
        %3291 = vmatpush1.bf16.msra.mxu0 0
        %3292 = vmatprep.subr.bf16.mxu0 0
        %3293 = vmatpush1.bf16.msra.mxu0 0
        %3294 = vmatprep.subr.bf16.mxu0 0
        %3295 = vmatpush1.bf16.msra.mxu0 0
        %3296 = vmatprep.mubr.bf16.mxu0 0
        %3297 = vmatmul.mubr.bf16.gmra.mrb[0].mxu0 %v3070
        %v3298 = vpop.f32.mrb[0].mxu0
        %v3299 = vadd.f32 0.0, %v3298
        %v3300 = vpop.f32.mrb[0].mxu0
        %v3301 = vpop.f32.mrb[0].mxu0
        %v3302 = vadd.f32 0.0, %v3301
        %v3303 = vpop.f32.mrb[0].mxu0
        %3304 = vmatprep.mubr.bf16.mxu0 0
        %3305 = vmatmul.mubr.bf16.gmra.mrb[0].mxu0 %v3073
        %v3306 = vpop.f32.mrb[0].mxu0
        %v3307 = vadd.f32 0.0, %v3306
        %v3308 = vpop.f32.mrb[0].mxu0
        %v3309 = vpop.f32.mrb[0].mxu0
        %v3310 = vadd.f32 0.0, %v3309
        %v3311 = vpop.f32.mrb[0].mxu0
        %3312 = vmatprep.mubr.bf16.mxu0 0
        %3313 = vmatmul.mubr.bf16.gmra.mrb[0].mxu0 %v3076
        %v3314 = vpop.f32.mrb[0].mxu0
        %v3315 = vadd.f32 0.0, %v3314
        %v3316 = vpop.f32.mrb[0].mxu0
        %v3317 = vpop.f32.mrb[0].mxu0
        %v3318 = vadd.f32 0.0, %v3317
        %v3319 = vpop.f32.mrb[0].mxu0
        %3320 = vmatprep.mubr.bf16.mxu0 0
        %3321 = vmatmul.mubr.bf16.gmra.mrb[0].mxu0 %v3079
        %v3322 = vpop.f32.mrb[0].mxu0
        %v3323 = vadd.f32 0.0, %v3322
        %v3324 = vpop.f32.mrb[0].mxu0
        %v3325 = vpop.f32.mrb[0].mxu0
        %v3326 = vadd.f32 0.0, %v3325
        %v3327 = vpop.f32.mrb[0].mxu0
        %3328 = vmatprep.mubr.bf16.mxu0 0
        %3329 = vmatmul.mubr.bf16.gmra.mrb[0].mxu0 %v3082
        %v3330 = vpop.f32.mrb[0].mxu0
        %v3331 = vadd.f32 0.0, %v3330
        %v3332 = vpop.f32.mrb[0].mxu0
        %v3333 = vpop.f32.mrb[0].mxu0
        %v3334 = vadd.f32 0.0, %v3333
        %v3335 = vpop.f32.mrb[0].mxu0
        %3336 = vmatprep.mubr.bf16.mxu0 0
        %3337 = vmatmul.mubr.bf16.gmra.mrb[0].mxu0 %v3085
        %v3338 = vpop.f32.mrb[0].mxu0
        %v3339 = vadd.f32 0.0, %v3338
        %v3340 = vpop.f32.mrb[0].mxu0
        %v3341 = vpop.f32.mrb[0].mxu0
        %v3342 = vadd.f32 0.0, %v3341
        %v3343 = vpop.f32.mrb[0].mxu0
        %3344 = vmatprep.mubr.bf16.mxu0 0
        %3345 = vmatmul.mubr.bf16.gmra.mrb[0].mxu0 %v3088
        %v3346 = vpop.f32.mrb[0].mxu0
        %v3347 = vadd.f32 0.0, %v3346
        %v3348 = vpop.f32.mrb[0].mxu0
        %v3349 = vpop.f32.mrb[0].mxu0
        %v3350 = vadd.f32 0.0, %v3349
        %v3351 = vpop.f32.mrb[0].mxu0
        %3352 = vmatprep.mubr.bf16.mxu0 0
        %3353 = vmatmul.mubr.bf16.gmra.mrb[0].mxu0 %v3091
        %v3354 = vpop.f32.mrb[0].mxu0
        %v3355 = vadd.f32 0.0, %v3354
        %v3356 = vpop.f32.mrb[0].mxu0
        %v3357 = vpop.f32.mrb[0].mxu0
        %v3358 = vadd.f32 0.0, %v3357
        %v3359 = vpop.f32.mrb[0].mxu0
        %3360 = vmatprep.mubr.bf16.mxu0 0
        %3361 = vmatmul.mubr.bf16.gmra.mrb[0].mxu0 %v3094
        %v3362 = vpop.f32.mrb[0].mxu0
        %v3363 = vadd.f32 0.0, %v3362
        %v3364 = vpop.f32.mrb[0].mxu0
        %v3365 = vpop.f32.mrb[0].mxu0
        %v3366 = vadd.f32 0.0, %v3365
        %v3367 = vpop.f32.mrb[0].mxu0
        %3368 = vmatprep.mubr.bf16.mxu0 0
        %3369 = vmatmul.mubr.bf16.gmra.mrb[0].mxu0 %v3097
        %v3370 = vpop.f32.mrb[0].mxu0
        %v3371 = vadd.f32 0.0, %v3370
        %v3372 = vpop.f32.mrb[0].mxu0
        %v3373 = vpop.f32.mrb[0].mxu0
        %v3374 = vadd.f32 0.0, %v3373
        %v3375 = vpop.f32.mrb[0].mxu0
        %3376 = vmatprep.mubr.bf16.mxu0 0
        %3377 = vmatmul.mubr.bf16.gmra.mrb[0].mxu0 %v3100
        %v3378 = vpop.f32.mrb[0].mxu0
        %v3379 = vadd.f32 0.0, %v3378
        %v3380 = vpop.f32.mrb[0].mxu0
        %v3381 = vpop.f32.mrb[0].mxu0
        %v3382 = vadd.f32 0.0, %v3381
        %v3383 = vpop.f32.mrb[0].mxu0
        %3384 = vmatprep.mubr.bf16.mxu0 0
        %3385 = vmatmul.mubr.bf16.gmra.mrb[0].mxu0 %v3103
        %v3386 = vpop.f32.mrb[0].mxu0
        %v3387 = vadd.f32 0.0, %v3386
        %v3388 = vpop.f32.mrb[0].mxu0
        %v3389 = vpop.f32.mrb[0].mxu0
        %v3390 = vadd.f32 0.0, %v3389
        %v3391 = vpop.f32.mrb[0].mxu0
        %3392 = vmatprep.mubr.bf16.mxu0 0
        %3393 = vmatmul.mubr.bf16.gmra.mrb[0].mxu0 %v3106
        %v3394 = vpop.f32.mrb[0].mxu0
        %v3395 = vadd.f32 0.0, %v3394
        %v3396 = vpop.f32.mrb[0].mxu0
        %v3397 = vpop.f32.mrb[0].mxu0
        %v3398 = vadd.f32 0.0, %v3397
        %v3399 = vpop.f32.mrb[0].mxu0
        %3400 = vmatprep.mubr.bf16.mxu0 0
        %3401 = vmatmul.mubr.bf16.gmra.mrb[0].mxu0 %v3109
        %v3402 = vpop.f32.mrb[0].mxu0
        %v3403 = vadd.f32 0.0, %v3402
        %v3404 = vpop.f32.mrb[0].mxu0
        %v3405 = vpop.f32.mrb[0].mxu0
        %v3406 = vadd.f32 0.0, %v3405
        %v3407 = vpop.f32.mrb[0].mxu0
        %3408 = vmatprep.mubr.bf16.mxu0 0
        %3409 = vmatmul.mubr.bf16.gmra.mrb[0].mxu0 %v3112
        %v3410 = vpop.f32.mrb[0].mxu0
        %v3411 = vadd.f32 0.0, %v3410
        %v3412 = vpop.f32.mrb[0].mxu0
        %v3413 = vpop.f32.mrb[0].mxu0
        %v3414 = vadd.f32 0.0, %v3413
        %v3415 = vpop.f32.mrb[0].mxu0
        %3416 = vmatprep.mubr.bf16.mxu0 0
        %3417 = vmatmul.mubr.bf16.gmra.mrb[0].mxu0 %v3115
        %v3418 = vpop.f32.mrb[0].mxu0
        %v3419 = vadd.f32 0.0, %v3418
        %v3420 = vpop.f32.mrb[0].mxu0
        %v3421 = vpop.f32.mrb[0].mxu0
        %v3422 = vadd.f32 0.0, %v3421
        %v3423 = vpop.f32.mrb[0].mxu0
        %3424 = vmatprep.mubr.bf16.mxu0 0
        %3425 = vmatmul.mubr.bf16.gmra.mrb[0].mxu0 %v3118
        %v3426 = vpop.f32.mrb[0].mxu0
        %v3427 = vadd.f32 0.0, %v3426
        %v3428 = vpop.f32.mrb[0].mxu0
        %v3429 = vpop.f32.mrb[0].mxu0
        %v3430 = vadd.f32 0.0, %v3429
        %v3431 = vpop.f32.mrb[0].mxu0
        %3432 = vmatprep.mubr.bf16.mxu0 0
        %3433 = vmatmul.mubr.bf16.gmra.mrb[0].mxu0 %v3121
        %v3434 = vpop.f32.mrb[0].mxu0
        %v3435 = vadd.f32 0.0, %v3434
        %v3436 = vpop.f32.mrb[0].mxu0
        %v3437 = vpop.f32.mrb[0].mxu0
        %v3438 = vadd.f32 0.0, %v3437
        %v3439 = vpop.f32.mrb[0].mxu0
        %3440 = vmatprep.mubr.bf16.mxu0 0
        %3441 = vmatmul.mubr.bf16.gmra.mrb[0].mxu0 %v3124
        %v3442 = vpop.f32.mrb[0].mxu0
        %v3443 = vadd.f32 0.0, %v3442
        %v3444 = vpop.f32.mrb[0].mxu0
        %v3445 = vpop.f32.mrb[0].mxu0
        %v3446 = vadd.f32 0.0, %v3445
        %v3447 = vpop.f32.mrb[0].mxu0
        %3448 = vmatprep.mubr.bf16.mxu0 0
        %3449 = vmatmul.mubr.bf16.gmra.mrb[0].mxu0 %v3127
        %v3450 = vpop.f32.mrb[0].mxu0
        %v3451 = vadd.f32 0.0, %v3450
        %v3452 = vpop.f32.mrb[0].mxu0
        %v3453 = vpop.f32.mrb[0].mxu0
        %v3454 = vadd.f32 0.0, %v3453
        %v3455 = vpop.f32.mrb[0].mxu0
        %3456 = vmatprep.mubr.bf16.mxu0 0
        %3457 = vmatmul.mubr.bf16.gmra.mrb[0].mxu0 %v3130
        %v3458 = vpop.f32.mrb[0].mxu0
        %v3459 = vadd.f32 0.0, %v3458
        %v3460 = vpop.f32.mrb[0].mxu0
        %v3461 = vpop.f32.mrb[0].mxu0
        %v3462 = vadd.f32 0.0, %v3461
        %v3463 = vpop.f32.mrb[0].mxu0
        %3464 = vmatprep.mubr.bf16.mxu0 0
        %3465 = vmatmul.mubr.bf16.gmra.mrb[0].mxu0 %v3133
        %v3466 = vpop.f32.mrb[0].mxu0
        %v3467 = vadd.f32 0.0, %v3466
        %v3468 = vpop.f32.mrb[0].mxu0
        %v3469 = vpop.f32.mrb[0].mxu0
        %v3470 = vadd.f32 0.0, %v3469
        %v3471 = vpop.f32.mrb[0].mxu0
        %3472 = vmatprep.mubr.bf16.mxu0 0
        %3473 = vmatmul.mubr.bf16.gmra.mrb[0].mxu0 %v3136
        %v3474 = vpop.f32.mrb[0].mxu0
        %v3475 = vadd.f32 0.0, %v3474
        %v3476 = vpop.f32.mrb[0].mxu0
        %v3477 = vpop.f32.mrb[0].mxu0
        %v3478 = vadd.f32 0.0, %v3477
        %v3479 = vpop.f32.mrb[0].mxu0
        %3480 = vmatprep.mubr.bf16.mxu0 0
        %3481 = vmatmul.mubr.bf16.gmra.mrb[0].mxu0 %v3139
        %v3482 = vpop.f32.mrb[0].mxu0
        %v3483 = vadd.f32 0.0, %v3482
        %v3484 = vpop.f32.mrb[0].mxu0
        %v3485 = vpop.f32.mrb[0].mxu0
        %v3486 = vadd.f32 0.0, %v3485
        %v3487 = vpop.f32.mrb[0].mxu0
        %3488 = vmatprep.mubr.bf16.mxu0 0
        %3489 = vmatmul.mubr.bf16.gmra.mrb[0].mxu0 %v3142
        %v3490 = vpop.f32.mrb[0].mxu0
        %v3491 = vadd.f32 0.0, %v3490
        %v3492 = vpop.f32.mrb[0].mxu0
        %v3493 = vpop.f32.mrb[0].mxu0
        %v3494 = vadd.f32 0.0, %v3493
        %v3495 = vpop.f32.mrb[0].mxu0
        %3496 = vmatprep.mubr.bf16.mxu0 0
        %3497 = vmatmul.mubr.bf16.gmra.mrb[0].mxu0 %v3145
        %v3498 = vpop.f32.mrb[0].mxu0
        %v3499 = vadd.f32 0.0, %v3498
        %v3500 = vpop.f32.mrb[0].mxu0
        %v3501 = vpop.f32.mrb[0].mxu0
        %v3502 = vadd.f32 0.0, %v3501
        %v3503 = vpop.f32.mrb[0].mxu0
        %3504 = vmatprep.mubr.bf16.mxu0 0
        %3505 = vmatmul.mubr.bf16.gmra.mrb[0].mxu0 %v3148
        %v3506 = vpop.f32.mrb[0].mxu0
        %v3507 = vadd.f32 0.0, %v3506
        %v3508 = vpop.f32.mrb[0].mxu0
        %v3509 = vpop.f32.mrb[0].mxu0
        %v3510 = vadd.f32 0.0, %v3509
        %v3511 = vpop.f32.mrb[0].mxu0
        %3512 = vmatprep.mubr.bf16.mxu0 0
        %3513 = vmatmul.mubr.bf16.gmra.mrb[0].mxu0 %v3151
        %v3514 = vpop.f32.mrb[0].mxu0
        %v3515 = vadd.f32 0.0, %v3514
        %v3516 = vpop.f32.mrb[0].mxu0
        %v3517 = vpop.f32.mrb[0].mxu0
        %v3518 = vadd.f32 0.0, %v3517
        %v3519 = vpop.f32.mrb[0].mxu0
        %3520 = vmatprep.mubr.bf16.mxu0 0
        %3521 = vmatmul.mubr.bf16.gmra.mrb[0].mxu0 %v3154
        %v3522 = vpop.f32.mrb[0].mxu0
        %v3523 = vadd.f32 0.0, %v3522
        %v3524 = vpop.f32.mrb[0].mxu0
        %v3525 = vpop.f32.mrb[0].mxu0
        %v3526 = vadd.f32 0.0, %v3525
        %v3527 = vpop.f32.mrb[0].mxu0
        %3528 = vmatprep.mubr.bf16.mxu0 0
        %3529 = vmatmul.mubr.bf16.gmra.mrb[0].mxu0 %v3157
        %v3530 = vpop.f32.mrb[0].mxu0
        %v3531 = vadd.f32 0.0, %v3530
        %v3532 = vpop.f32.mrb[0].mxu0
        %v3533 = vpop.f32.mrb[0].mxu0
        %v3534 = vadd.f32 0.0, %v3533
        %v3535 = vpop.f32.mrb[0].mxu0
        %3536 = vmatprep.mubr.bf16.mxu0 0
        %3537 = vmatmul.mubr.bf16.gmra.mrb[0].mxu0 %v3160
        %v3538 = vpop.f32.mrb[0].mxu0
        %v3539 = vadd.f32 0.0, %v3538
        %v3540 = vpop.f32.mrb[0].mxu0
        %v3541 = vpop.f32.mrb[0].mxu0
        %v3542 = vadd.f32 0.0, %v3541
        %v3543 = vpop.f32.mrb[0].mxu0
        %3544 = vmatprep.mubr.bf16.mxu0 0
        %3545 = vmatmul.mubr.bf16.gmra.mrb[0].mxu0 %v3163
        %v3546 = vpop.f32.mrb[0].mxu0
        %v3547 = vadd.f32 0.0, %v3546
        %v3548 = vpop.f32.mrb[0].mxu0
        %v3549 = vpop.f32.mrb[0].mxu0
        %v3550 = vadd.f32 0.0, %v3549
        %v3551 = vpop.f32.mrb[0].mxu0
        %3552 = vmatprep.mubr.bf16.mxu0 0
        %3553 = vmatmul.mubr.bf16.gmra.mrb[0].mxu0 %v3166
        %v3554 = vpop.f32.mrb[0].mxu0
        %v3555 = vadd.f32 0.0, %v3554
        %v3556 = vpop.f32.mrb[0].mxu0
        %v3557 = vpop.f32.mrb[0].mxu0
        %v3558 = vadd.f32 0.0, %v3557
        %v3559 = vpop.f32.mrb[0].mxu0
        %3560 = vmatprep.mubr.bf16.mxu0 0
        %3561 = vmatmul.mubr.bf16.gmra.mrb[0].mxu0 %v3169
        %v3562 = vpop.f32.mrb[0].mxu0
        %v3563 = vadd.f32 0.0, %v3562
        %v3564 = vpop.f32.mrb[0].mxu0
        %v3565 = vpop.f32.mrb[0].mxu0
        %v3566 = vadd.f32 0.0, %v3565
        %v3567 = vpop.f32.mrb[0].mxu0
        %3568 = vmatprep.mubr.bf16.mxu0 0
        %3569 = vmatmul.mubr.bf16.gmra.mrb[0].mxu0 %v3172
        %v3570 = vpop.f32.mrb[0].mxu0
        %v3571 = vadd.f32 0.0, %v3570
        %v3572 = vpop.f32.mrb[0].mxu0
        %v3573 = vpop.f32.mrb[0].mxu0
        %v3574 = vadd.f32 0.0, %v3573
        %v3575 = vpop.f32.mrb[0].mxu0
        %3576 = vmatprep.mubr.bf16.mxu0 0
        %3577 = vmatmul.mubr.bf16.gmra.mrb[0].mxu0 %v3175
        %v3578 = vpop.f32.mrb[0].mxu0
        %v3579 = vadd.f32 0.0, %v3578
        %v3580 = vpop.f32.mrb[0].mxu0
        %v3581 = vpop.f32.mrb[0].mxu0
        %v3582 = vadd.f32 0.0, %v3581
        %v3583 = vpop.f32.mrb[0].mxu0
        %3584 = vmatprep.mubr.bf16.mxu0 0
        %3585 = vmatmul.mubr.bf16.gmra.mrb[0].mxu0 %v3178
        %v3586 = vpop.f32.mrb[0].mxu0
        %v3587 = vadd.f32 0.0, %v3586
        %v3588 = vpop.f32.mrb[0].mxu0
        %v3589 = vpop.f32.mrb[0].mxu0
        %v3590 = vadd.f32 0.0, %v3589
        %v3591 = vpop.f32.mrb[0].mxu0
        %3592 = vmatprep.mubr.bf16.mxu0 0
        %3593 = vmatmul.mubr.bf16.gmra.mrb[0].mxu0 %v3181
        %v3594 = vpop.f32.mrb[0].mxu0
        %v3595 = vadd.f32 0.0, %v3594
        %v3596 = vpop.f32.mrb[0].mxu0
        %v3597 = vpop.f32.mrb[0].mxu0
        %v3598 = vadd.f32 0.0, %v3597
        %v3599 = vpop.f32.mrb[0].mxu0
        %3600 = vmatprep.mubr.bf16.mxu0 0
        %3601 = vmatmul.mubr.bf16.gmra.mrb[0].mxu0 %v3184
        %v3602 = vpop.f32.mrb[0].mxu0
        %v3603 = vadd.f32 0.0, %v3602
        %v3604 = vpop.f32.mrb[0].mxu0
        %v3605 = vpop.f32.mrb[0].mxu0
        %v3606 = vadd.f32 0.0, %v3605
        %v3607 = vpop.f32.mrb[0].mxu0
        %3608 = vmatprep.mubr.bf16.mxu0 0
        %3609 = vmatmul.mubr.bf16.gmra.mrb[0].mxu0 %v3187
        %v3610 = vpop.f32.mrb[0].mxu0
        %v3611 = vadd.f32 0.0, %v3610
        %v3612 = vpop.f32.mrb[0].mxu0
        %v3613 = vpop.f32.mrb[0].mxu0
        %v3614 = vadd.f32 0.0, %v3613
        %v3615 = vpop.f32.mrb[0].mxu0
        %3616 = vmatprep.mubr.bf16.mxu0 0
        %3617 = vmatmul.mubr.bf16.gmra.mrb[0].mxu0 %v3190
        %v3618 = vpop.f32.mrb[0].mxu0
        %v3619 = vadd.f32 0.0, %v3618
        %v3620 = vpop.f32.mrb[0].mxu0
        %v3621 = vpop.f32.mrb[0].mxu0
        %v3622 = vadd.f32 0.0, %v3621
        %v3623 = vpop.f32.mrb[0].mxu0
        %3624 = vmatprep.mubr.bf16.mxu0 0
        %3625 = vmatmul.mubr.bf16.gmra.mrb[0].mxu0 %v3193
        %v3626 = vpop.f32.mrb[0].mxu0
        %v3627 = vadd.f32 0.0, %v3626
        %v3628 = vpop.f32.mrb[0].mxu0
        %v3629 = vpop.f32.mrb[0].mxu0
        %v3630 = vadd.f32 0.0, %v3629
        %v3631 = vpop.f32.mrb[0].mxu0
        %3632 = vmatprep.mubr.bf16.mxu0 0
        %3633 = vmatmul.mubr.bf16.gmra.mrb[0].mxu0 %v3196
        %v3634 = vpop.f32.mrb[0].mxu0
        %v3635 = vadd.f32 0.0, %v3634
        %v3636 = vpop.f32.mrb[0].mxu0
        %v3637 = vpop.f32.mrb[0].mxu0
        %v3638 = vadd.f32 0.0, %v3637
        %v3639 = vpop.f32.mrb[0].mxu0
        %3640 = vmatprep.mubr.bf16.mxu0 0
        %3641 = vmatmul.mubr.bf16.gmra.mrb[0].mxu0 %v3199
        %v3642 = vpop.f32.mrb[0].mxu0
        %v3643 = vadd.f32 0.0, %v3642
        %v3644 = vpop.f32.mrb[0].mxu0
        %v3645 = vpop.f32.mrb[0].mxu0
        %v3646 = vadd.f32 0.0, %v3645
        %v3647 = vpop.f32.mrb[0].mxu0
        %3648 = vmatprep.mubr.bf16.mxu0 0
        %3649 = vmatmul.mubr.bf16.gmra.mrb[0].mxu0 %v3202
        %v3650 = vpop.f32.mrb[0].mxu0
        %v3651 = vadd.f32 0.0, %v3650
        %v3652 = vpop.f32.mrb[0].mxu0
        %v3653 = vpop.f32.mrb[0].mxu0
        %v3654 = vadd.f32 0.0, %v3653
        %v3655 = vpop.f32.mrb[0].mxu0
        %3656 = vmatprep.mubr.bf16.mxu0 0
        %3657 = vmatmul.mubr.bf16.gmra.mrb[0].mxu0 %v3205
        %v3658 = vpop.f32.mrb[0].mxu0
        %v3659 = vadd.f32 0.0, %v3658
        %v3660 = vpop.f32.mrb[0].mxu0
        %v3661 = vpop.f32.mrb[0].mxu0
        %v3662 = vadd.f32 0.0, %v3661
        %v3663 = vpop.f32.mrb[0].mxu0
        %3664 = vmatprep.mubr.bf16.mxu0 0
        %3665 = vmatmul.mubr.bf16.gmra.mrb[0].mxu0 %v3208
        %v3666 = vpop.f32.mrb[0].mxu0
        %v3667 = vadd.f32 0.0, %v3666
        %v3668 = vpop.f32.mrb[0].mxu0
        %v3669 = vpop.f32.mrb[0].mxu0
        %v3670 = vadd.f32 0.0, %v3669
        %v3671 = vpop.f32.mrb[0].mxu0
        %3672 = vmatprep.mubr.bf16.mxu0 0
        %3673 = vmatmul.mubr.bf16.gmra.mrb[0].mxu0 %v3211
        %v3674 = vpop.f32.mrb[0].mxu0
        %v3675 = vadd.f32 0.0, %v3674
        %v3676 = vpop.f32.mrb[0].mxu0
        %v3677 = vpop.f32.mrb[0].mxu0
        %v3678 = vadd.f32 0.0, %v3677
        %v3679 = vpop.f32.mrb[0].mxu0
        %3680 = vmatprep.mubr.bf16.mxu0 0
        %3681 = vmatmul.mubr.bf16.gmra.mrb[0].mxu0 %v3214
        %v3682 = vpop.f32.mrb[0].mxu0
        %v3683 = vadd.f32 0.0, %v3682
        %v3684 = vpop.f32.mrb[0].mxu0
        %v3685 = vpop.f32.mrb[0].mxu0
        %v3686 = vadd.f32 0.0, %v3685
        %v3687 = vpop.f32.mrb[0].mxu0
        %3688 = vmatprep.mubr.bf16.mxu0 0
        %3689 = vmatmul.mubr.bf16.gmra.mrb[0].mxu0 %v3217
        %v3690 = vpop.f32.mrb[0].mxu0
        %v3691 = vadd.f32 0.0, %v3690
        %v3692 = vpop.f32.mrb[0].mxu0
        %v3693 = vpop.f32.mrb[0].mxu0
        %v3694 = vadd.f32 0.0, %v3693
        %v3695 = vpop.f32.mrb[0].mxu0
        %3696 = vmatprep.mubr.bf16.mxu0 0
        %3697 = vmatmul.mubr.bf16.gmra.mrb[0].mxu0 %v3220
        %v3698 = vpop.f32.mrb[0].mxu0
        %v3699 = vadd.f32 0.0, %v3698
        %v3700 = vpop.f32.mrb[0].mxu0
        %v3701 = vpop.f32.mrb[0].mxu0
        %v3702 = vadd.f32 0.0, %v3701
        %v3703 = vpop.f32.mrb[0].mxu0
        %3704 = vmatprep.mubr.bf16.mxu0 0
        %3705 = vmatmul.mubr.bf16.gmra.mrb[0].mxu0 %v3223
        %v3706 = vpop.f32.mrb[0].mxu0
        %v3707 = vadd.f32 0.0, %v3706
        %v3708 = vpop.f32.mrb[0].mxu0
        %v3709 = vpop.f32.mrb[0].mxu0
        %v3710 = vadd.f32 0.0, %v3709
        %v3711 = vpop.f32.mrb[0].mxu0
        %3712 = vmatprep.mubr.bf16.mxu0 0
        %3713 = vmatmul.mubr.bf16.gmra.mrb[0].mxu0 %v3226
        %v3714 = vpop.f32.mrb[0].mxu0
        %v3715 = vadd.f32 0.0, %v3714
        %v3716 = vpop.f32.mrb[0].mxu0
        %v3717 = vpop.f32.mrb[0].mxu0
        %v3718 = vadd.f32 0.0, %v3717
        %v3719 = vpop.f32.mrb[0].mxu0
        %3720 = vmatprep.mubr.bf16.mxu0 0
        %3721 = vmatmul.mubr.bf16.gmra.mrb[0].mxu0 %v3229
        %v3722 = vpop.f32.mrb[0].mxu0
        %v3723 = vadd.f32 0.0, %v3722
        %v3724 = vpop.f32.mrb[0].mxu0
        %v3725 = vpop.f32.mrb[0].mxu0
        %v3726 = vadd.f32 0.0, %v3725
        %v3727 = vpop.f32.mrb[0].mxu0
        %3728 = vmatprep.mubr.bf16.mxu0 0
        %3729 = vmatmul.mubr.bf16.gmra.mrb[0].mxu0 %v3232
        %v3730 = vpop.f32.mrb[0].mxu0
        %v3731 = vadd.f32 0.0, %v3730
        %v3732 = vpop.f32.mrb[0].mxu0
        %v3733 = vpop.f32.mrb[0].mxu0
        %v3734 = vadd.f32 0.0, %v3733
        %v3735 = vpop.f32.mrb[0].mxu0
        %3736 = vmatprep.mubr.bf16.mxu0 0
        %3737 = vmatmul.mubr.bf16.gmra.mrb[0].mxu0 %v3235
        %v3738 = vpop.f32.mrb[0].mxu0
        %v3739 = vadd.f32 0.0, %v3738
        %v3740 = vpop.f32.mrb[0].mxu0
        %v3741 = vpop.f32.mrb[0].mxu0
        %v3742 = vadd.f32 0.0, %v3741
        %v3743 = vpop.f32.mrb[0].mxu0
        %3744 = vmatprep.mubr.bf16.mxu0 0
        %3745 = vmatmul.mubr.bf16.gmra.mrb[0].mxu0 %v3238
        %v3746 = vpop.f32.mrb[0].mxu0
        %v3747 = vadd.f32 0.0, %v3746
        %v3748 = vpop.f32.mrb[0].mxu0
        %v3749 = vpop.f32.mrb[0].mxu0
        %v3750 = vadd.f32 0.0, %v3749
        %v3751 = vpop.f32.mrb[0].mxu0
        %3752 = vmatprep.mubr.bf16.mxu0 0
        %3753 = vmatmul.mubr.bf16.gmra.mrb[0].mxu0 %v3241
        %v3754 = vpop.f32.mrb[0].mxu0
        %v3755 = vadd.f32 0.0, %v3754
        %v3756 = vpop.f32.mrb[0].mxu0
        %v3757 = vpop.f32.mrb[0].mxu0
        %v3758 = vadd.f32 0.0, %v3757
        %v3759 = vpop.f32.mrb[0].mxu0
        %3760 = vmatprep.mubr.bf16.mxu0 0
        %3761 = vmatmul.mubr.bf16.gmra.mrb[0].mxu0 %v3244
        %v3762 = vpop.f32.mrb[0].mxu0
        %v3763 = vadd.f32 0.0, %v3762
        %v3764 = vpop.f32.mrb[0].mxu0
        %v3765 = vpop.f32.mrb[0].mxu0
        %v3766 = vadd.f32 0.0, %v3765
        %v3767 = vpop.f32.mrb[0].mxu0
        %3768 = vmatprep.mubr.bf16.mxu0 0
        %3769 = vmatmul.mubr.bf16.gmra.mrb[0].mxu0 %v3247
        %v3770 = vpop.f32.mrb[0].mxu0
        %v3771 = vadd.f32 0.0, %v3770
        %v3772 = vpop.f32.mrb[0].mxu0
        %v3773 = vpop.f32.mrb[0].mxu0
        %v3774 = vadd.f32 0.0, %v3773
        %v3775 = vpop.f32.mrb[0].mxu0
        %3776 = vmatprep.mubr.bf16.mxu0 0
        %3777 = vmatmul.mubr.bf16.gmra.mrb[0].mxu0 %v3250
        %v3778 = vpop.f32.mrb[0].mxu0
        %v3779 = vadd.f32 0.0, %v3778
        %v3780 = vpop.f32.mrb[0].mxu0
        %v3781 = vpop.f32.mrb[0].mxu0
        %v3782 = vadd.f32 0.0, %v3781
        %v3783 = vpop.f32.mrb[0].mxu0
        %3784 = vmatprep.mubr.bf16.mxu0 0
        %3785 = vmatmul.mubr.bf16.gmra.mrb[0].mxu0 %v3253
        %v3786 = vpop.f32.mrb[0].mxu0
        %v3787 = vadd.f32 0.0, %v3786
        %v3788 = vpop.f32.mrb[0].mxu0
        %v3789 = vpop.f32.mrb[0].mxu0
        %v3790 = vadd.f32 0.0, %v3789
        %v3791 = vpop.f32.mrb[0].mxu0
        %3792 = vmatprep.mubr.bf16.mxu0 0
        %3793 = vmatmul.mubr.bf16.gmra.mrb[0].mxu0 %v3256
        %v3794 = vpop.f32.mrb[0].mxu0
        %v3795 = vadd.f32 0.0, %v3794
        %v3796 = vpop.f32.mrb[0].mxu0
        %v3797 = vpop.f32.mrb[0].mxu0
        %v3798 = vadd.f32 0.0, %v3797
        %v3799 = vpop.f32.mrb[0].mxu0
        %3800 = vmatprep.mubr.bf16.mxu0 0
        %3801 = vmatmul.mubr.bf16.gmra.mrb[0].mxu0 %v3259
        %v3802 = vpop.f32.mrb[0].mxu0
        %v3803 = vadd.f32 0.0, %v3802
        %v3804 = vpop.f32.mrb[0].mxu0
        %v3805 = vpop.f32.mrb[0].mxu0
        %v3806 = vadd.f32 0.0, %v3805
        %v3807 = vpop.f32.mrb[0].mxu0
        %3808 = vdwg.mxu0
        %v3809 = vadd.f32 %v2102, %v3299
        %v3810 = vadd.f32 %v2105, %v3302
        %v3811 = vadd.f32 %v2110, %v3307
        %v3812 = vadd.f32 %v2113, %v3310
        %v3813 = vadd.f32 %v2118, %v3315
        %v3814 = vadd.f32 %v2121, %v3318
        %v3815 = vadd.f32 %v2126, %v3323
        %v3816 = vadd.f32 %v2129, %v3326
        %v3817 = vadd.f32 %v2134, %v3331
        %v3818 = vadd.f32 %v2137, %v3334
        %v3819 = vadd.f32 %v2142, %v3339
        %v3820 = vadd.f32 %v2145, %v3342
        %v3821 = vadd.f32 %v2150, %v3347
        %v3822 = vadd.f32 %v2153, %v3350
        %v3823 = vadd.f32 %v2158, %v3355
        %v3824 = vadd.f32 %v2161, %v3358
        %v3825 = vadd.f32 %v2166, %v3363
        %v3826 = vadd.f32 %v2169, %v3366
        %v3827 = vadd.f32 %v2174, %v3371
        %v3828 = vadd.f32 %v2177, %v3374
        %v3829 = vadd.f32 %v2182, %v3379
        %v3830 = vadd.f32 %v2185, %v3382
        %v3831 = vadd.f32 %v2190, %v3387
        %v3832 = vadd.f32 %v2193, %v3390
        %v3833 = vadd.f32 %v2198, %v3395
        %v3834 = vadd.f32 %v2201, %v3398
        %v3835 = vadd.f32 %v2206, %v3403
        %v3836 = vadd.f32 %v2209, %v3406
        %v3837 = vadd.f32 %v2214, %v3411
        %v3838 = vadd.f32 %v2217, %v3414
        %v3839 = vadd.f32 %v2222, %v3419
        %v3840 = vadd.f32 %v2225, %v3422
        %v3841 = vadd.f32 %v2230, %v3427
        %v3842 = vadd.f32 %v2233, %v3430
        %v3843 = vadd.f32 %v2238, %v3435
        %v3844 = vadd.f32 %v2241, %v3438
        %v3845 = vadd.f32 %v2246, %v3443
        %v3846 = vadd.f32 %v2249, %v3446
        %v3847 = vadd.f32 %v2254, %v3451
        %v3848 = vadd.f32 %v2257, %v3454
        %v3849 = vadd.f32 %v2262, %v3459
        %v3850 = vadd.f32 %v2265, %v3462
        %v3851 = vadd.f32 %v2270, %v3467
        %v3852 = vadd.f32 %v2273, %v3470
        %v3853 = vadd.f32 %v2278, %v3475
        %v3854 = vadd.f32 %v2281, %v3478
        %v3855 = vadd.f32 %v2286, %v3483
        %v3856 = vadd.f32 %v2289, %v3486
        %v3857 = vadd.f32 %v2294, %v3491
        %v3858 = vadd.f32 %v2297, %v3494
        %v3859 = vadd.f32 %v2302, %v3499
        %v3860 = vadd.f32 %v2305, %v3502
        %v3861 = vadd.f32 %v2310, %v3507
        %v3862 = vadd.f32 %v2313, %v3510
        %v3863 = vadd.f32 %v2318, %v3515
        %v3864 = vadd.f32 %v2321, %v3518
        %v3865 = vadd.f32 %v2326, %v3523
        %v3866 = vadd.f32 %v2329, %v3526
        %v3867 = vadd.f32 %v2334, %v3531
        %v3868 = vadd.f32 %v2337, %v3534
        %v3869 = vadd.f32 %v2342, %v3539
        %v3870 = vadd.f32 %v2345, %v3542
        %v3871 = vadd.f32 %v2350, %v3547
        %v3872 = vadd.f32 %v2353, %v3550
        %v3873 = vadd.f32 %v2358, %v3555
        %v3874 = vadd.f32 %v2361, %v3558
        %v3875 = vadd.f32 %v2366, %v3563
        %v3876 = vadd.f32 %v2369, %v3566
        %v3877 = vadd.f32 %v2374, %v3571
        %v3878 = vadd.f32 %v2377, %v3574
        %v3879 = vadd.f32 %v2382, %v3579
        %v3880 = vadd.f32 %v2385, %v3582
        %v3881 = vadd.f32 %v2390, %v3587
        %v3882 = vadd.f32 %v2393, %v3590
        %v3883 = vadd.f32 %v2398, %v3595
        %v3884 = vadd.f32 %v2401, %v3598
        %v3885 = vadd.f32 %v2406, %v3603
        %v3886 = vadd.f32 %v2409, %v3606
        %v3887 = vadd.f32 %v2414, %v3611
        %v3888 = vadd.f32 %v2417, %v3614
        %v3889 = vadd.f32 %v2422, %v3619
        %v3890 = vadd.f32 %v2425, %v3622
        %v3891 = vadd.f32 %v2430, %v3627
        %v3892 = vadd.f32 %v2433, %v3630
        %v3893 = vadd.f32 %v2438, %v3635
        %v3894 = vadd.f32 %v2441, %v3638
        %v3895 = vadd.f32 %v2446, %v3643
        %v3896 = vadd.f32 %v2449, %v3646
        %v3897 = vadd.f32 %v2454, %v3651
        %v3898 = vadd.f32 %v2457, %v3654
        %v3899 = vadd.f32 %v2462, %v3659
        %v3900 = vadd.f32 %v2465, %v3662
        %v3901 = vadd.f32 %v2470, %v3667
        %v3902 = vadd.f32 %v2473, %v3670
        %v3903 = vadd.f32 %v2478, %v3675
        %v3904 = vadd.f32 %v2481, %v3678
        %v3905 = vadd.f32 %v2486, %v3683
        %v3906 = vadd.f32 %v2489, %v3686
        %v3907 = vadd.f32 %v2494, %v3691
        %v3908 = vadd.f32 %v2497, %v3694
        %v3909 = vadd.f32 %v2502, %v3699
        %v3910 = vadd.f32 %v2505, %v3702
        %v3911 = vadd.f32 %v2510, %v3707
        %v3912 = vadd.f32 %v2513, %v3710
        %v3913 = vadd.f32 %v2518, %v3715
        %v3914 = vadd.f32 %v2521, %v3718
        %v3915 = vadd.f32 %v2526, %v3723
        %v3916 = vadd.f32 %v2529, %v3726
        %v3917 = vadd.f32 %v2534, %v3731
        %v3918 = vadd.f32 %v2537, %v3734
        %v3919 = vadd.f32 %v2542, %v3739
        %v3920 = vadd.f32 %v2545, %v3742
        %v3921 = vadd.f32 %v2550, %v3747
        %v3922 = vadd.f32 %v2553, %v3750
        %v3923 = vadd.f32 %v2558, %v3755
        %v3924 = vadd.f32 %v2561, %v3758
        %v3925 = vadd.f32 %v2566, %v3763
        %v3926 = vadd.f32 %v2569, %v3766
        %v3927 = vadd.f32 %v2574, %v3771
        %v3928 = vadd.f32 %v2577, %v3774
        %v3929 = vadd.f32 %v2582, %v3779
        %v3930 = vadd.f32 %v2585, %v3782
        %v3931 = vadd.f32 %v2590, %v3787
        %v3932 = vadd.f32 %v2593, %v3790
        %v3933 = vadd.f32 %v2598, %v3795
        %v3934 = vadd.f32 %v2601, %v3798
        %v3935 = vadd.f32 %v2606, %v3803
        %v3936 = vadd.f32 %v2609, %v3806
        %v3937 = vld [vmem:[%s213] sm:$0x1]
        %v3939 = vlaneseq
        %v3940 = vshrl.u32 %v3939, 7
        %v3941 = vsub.s32 0, %v3940
        %v3942 = vrot.slane %v3937, %v3941
        %v3944 = vadd.f32 %v3809, %v3942
        %v3945 = vadd.f32 %v3810, %v3942
        %v3946 = vadd.f32 %v3811, %v3942
        %v3947 = vadd.f32 %v3812, %v3942
        %v3948 = vadd.f32 %v3813, %v3942
        %v3949 = vadd.f32 %v3814, %v3942
        %v3950 = vadd.f32 %v3815, %v3942
        %v3951 = vadd.f32 %v3816, %v3942
        %v3952 = vadd.f32 %v3817, %v3942
        %v3953 = vadd.f32 %v3818, %v3942
        %v3954 = vadd.f32 %v3819, %v3942
        %v3955 = vadd.f32 %v3820, %v3942
        %v3956 = vadd.f32 %v3821, %v3942
        %v3957 = vadd.f32 %v3822, %v3942
        %v3958 = vadd.f32 %v3823, %v3942
        %v3959 = vadd.f32 %v3824, %v3942
        %v3960 = vadd.f32 %v3825, %v3942
        %v3961 = vadd.f32 %v3826, %v3942
        %v3962 = vadd.f32 %v3827, %v3942
        %v3963 = vadd.f32 %v3828, %v3942
        %v3964 = vadd.f32 %v3829, %v3942
        %v3965 = vadd.f32 %v3830, %v3942
        %v3966 = vadd.f32 %v3831, %v3942
        %v3967 = vadd.f32 %v3832, %v3942
        %v3968 = vadd.f32 %v3833, %v3942
        %v3969 = vadd.f32 %v3834, %v3942
        %v3970 = vadd.f32 %v3835, %v3942
        %v3971 = vadd.f32 %v3836, %v3942
        %v3972 = vadd.f32 %v3837, %v3942
        %v3973 = vadd.f32 %v3838, %v3942
        %v3974 = vadd.f32 %v3839, %v3942
        %v3975 = vadd.f32 %v3840, %v3942
        %v3976 = vadd.f32 %v3841, %v3942
        %v3977 = vadd.f32 %v3842, %v3942
        %v3978 = vadd.f32 %v3843, %v3942
        %v3979 = vadd.f32 %v3844, %v3942
        %v3980 = vadd.f32 %v3845, %v3942
        %v3981 = vadd.f32 %v3846, %v3942
        %v3982 = vadd.f32 %v3847, %v3942
        %v3983 = vadd.f32 %v3848, %v3942
        %v3984 = vadd.f32 %v3849, %v3942
        %v3985 = vadd.f32 %v3850, %v3942
        %v3986 = vadd.f32 %v3851, %v3942
        %v3987 = vadd.f32 %v3852, %v3942
        %v3988 = vadd.f32 %v3853, %v3942
        %v3989 = vadd.f32 %v3854, %v3942
        %v3990 = vadd.f32 %v3855, %v3942
        %v3991 = vadd.f32 %v3856, %v3942
        %v3992 = vadd.f32 %v3857, %v3942
        %v3993 = vadd.f32 %v3858, %v3942
        %v3994 = vadd.f32 %v3859, %v3942
        %v3995 = vadd.f32 %v3860, %v3942
        %v3996 = vadd.f32 %v3861, %v3942
        %v3997 = vadd.f32 %v3862, %v3942
        %v3998 = vadd.f32 %v3863, %v3942
        %v3999 = vadd.f32 %v3864, %v3942
        %v4000 = vadd.f32 %v3865, %v3942
        %v4001 = vadd.f32 %v3866, %v3942
        %v4002 = vadd.f32 %v3867, %v3942
        %v4003 = vadd.f32 %v3868, %v3942
        %v4004 = vadd.f32 %v3869, %v3942
        %v4005 = vadd.f32 %v3870, %v3942
        %v4006 = vadd.f32 %v3871, %v3942
        %v4007 = vadd.f32 %v3872, %v3942
        %v4008 = vadd.f32 %v3873, %v3942
        %v4009 = vadd.f32 %v3874, %v3942
        %v4010 = vadd.f32 %v3875, %v3942
        %v4011 = vadd.f32 %v3876, %v3942
        %v4012 = vadd.f32 %v3877, %v3942
        %v4013 = vadd.f32 %v3878, %v3942
        %v4014 = vadd.f32 %v3879, %v3942
        %v4015 = vadd.f32 %v3880, %v3942
        %v4016 = vadd.f32 %v3881, %v3942
        %v4017 = vadd.f32 %v3882, %v3942
        %v4018 = vadd.f32 %v3883, %v3942
        %v4019 = vadd.f32 %v3884, %v3942
        %v4020 = vadd.f32 %v3885, %v3942
        %v4021 = vadd.f32 %v3886, %v3942
        %v4022 = vadd.f32 %v3887, %v3942
        %v4023 = vadd.f32 %v3888, %v3942
        %v4024 = vadd.f32 %v3889, %v3942
        %v4025 = vadd.f32 %v3890, %v3942
        %v4026 = vadd.f32 %v3891, %v3942
        %v4027 = vadd.f32 %v3892, %v3942
        %v4028 = vadd.f32 %v3893, %v3942
        %v4029 = vadd.f32 %v3894, %v3942
        %v4030 = vadd.f32 %v3895, %v3942
        %v4031 = vadd.f32 %v3896, %v3942
        %v4032 = vadd.f32 %v3897, %v3942
        %v4033 = vadd.f32 %v3898, %v3942
        %v4034 = vadd.f32 %v3899, %v3942
        %v4035 = vadd.f32 %v3900, %v3942
        %v4036 = vadd.f32 %v3901, %v3942
        %v4037 = vadd.f32 %v3902, %v3942
        %v4038 = vadd.f32 %v3903, %v3942
        %v4039 = vadd.f32 %v3904, %v3942
        %v4040 = vadd.f32 %v3905, %v3942
        %v4041 = vadd.f32 %v3906, %v3942
        %v4042 = vadd.f32 %v3907, %v3942
        %v4043 = vadd.f32 %v3908, %v3942
        %v4044 = vadd.f32 %v3909, %v3942
        %v4045 = vadd.f32 %v3910, %v3942
        %v4046 = vadd.f32 %v3911, %v3942
        %v4047 = vadd.f32 %v3912, %v3942
        %v4048 = vadd.f32 %v3913, %v3942
        %v4049 = vadd.f32 %v3914, %v3942
        %v4050 = vadd.f32 %v3915, %v3942
        %v4051 = vadd.f32 %v3916, %v3942
        %v4052 = vadd.f32 %v3917, %v3942
        %v4053 = vadd.f32 %v3918, %v3942
        %v4054 = vadd.f32 %v3919, %v3942
        %v4055 = vadd.f32 %v3920, %v3942
        %v4056 = vadd.f32 %v3921, %v3942
        %v4057 = vadd.f32 %v3922, %v3942
        %v4058 = vadd.f32 %v3923, %v3942
        %v4059 = vadd.f32 %v3924, %v3942
        %v4060 = vadd.f32 %v3925, %v3942
        %v4061 = vadd.f32 %v3926, %v3942
        %v4062 = vadd.f32 %v3927, %v3942
        %v4063 = vadd.f32 %v3928, %v3942
        %v4064 = vadd.f32 %v3929, %v3942
        %v4065 = vadd.f32 %v3930, %v3942
        %v4066 = vadd.f32 %v3931, %v3942
        %v4067 = vadd.f32 %v3932, %v3942
        %v4068 = vadd.f32 %v3933, %v3942
        %v4069 = vadd.f32 %v3934, %v3942
        %v4070 = vadd.f32 %v3935, %v3942
        %v4071 = vadd.f32 %v3936, %v3942
        %v4072 = vmax.f32 %v3944, 0.0
        %v4073 = vmax.f32 %v3945, 0.0
        %v4074 = vmax.f32 %v3946, 0.0
        %v4075 = vmax.f32 %v3947, 0.0
        %v4076 = vmax.f32 %v3948, 0.0
        %v4077 = vmax.f32 %v3949, 0.0
        %v4078 = vmax.f32 %v3950, 0.0
        %v4079 = vmax.f32 %v3951, 0.0
        %v4080 = vmax.f32 %v3952, 0.0
        %v4081 = vmax.f32 %v3953, 0.0
        %v4082 = vmax.f32 %v3954, 0.0
        %v4083 = vmax.f32 %v3955, 0.0
        %v4084 = vmax.f32 %v3956, 0.0
        %v4085 = vmax.f32 %v3957, 0.0
        %v4086 = vmax.f32 %v3958, 0.0
        %v4087 = vmax.f32 %v3959, 0.0
        %v4088 = vmax.f32 %v3960, 0.0
        %v4089 = vmax.f32 %v3961, 0.0
        %v4090 = vmax.f32 %v3962, 0.0
        %v4091 = vmax.f32 %v3963, 0.0
        %v4092 = vmax.f32 %v3964, 0.0
        %v4093 = vmax.f32 %v3965, 0.0
        %v4094 = vmax.f32 %v3966, 0.0
        %v4095 = vmax.f32 %v3967, 0.0
        %v4096 = vmax.f32 %v3968, 0.0
        %v4097 = vmax.f32 %v3969, 0.0
        %v4098 = vmax.f32 %v3970, 0.0
        %v4099 = vmax.f32 %v3971, 0.0
        %v4100 = vmax.f32 %v3972, 0.0
        %v4101 = vmax.f32 %v3973, 0.0
        %v4102 = vmax.f32 %v3974, 0.0
        %v4103 = vmax.f32 %v3975, 0.0
        %v4104 = vmax.f32 %v3976, 0.0
        %v4105 = vmax.f32 %v3977, 0.0
        %v4106 = vmax.f32 %v3978, 0.0
        %v4107 = vmax.f32 %v3979, 0.0
        %v4108 = vmax.f32 %v3980, 0.0
        %v4109 = vmax.f32 %v3981, 0.0
        %v4110 = vmax.f32 %v3982, 0.0
        %v4111 = vmax.f32 %v3983, 0.0
        %v4112 = vmax.f32 %v3984, 0.0
        %v4113 = vmax.f32 %v3985, 0.0
        %v4114 = vmax.f32 %v3986, 0.0
        %v4115 = vmax.f32 %v3987, 0.0
        %v4116 = vmax.f32 %v3988, 0.0
        %v4117 = vmax.f32 %v3989, 0.0
        %v4118 = vmax.f32 %v3990, 0.0
        %v4119 = vmax.f32 %v3991, 0.0
        %v4120 = vmax.f32 %v3992, 0.0
        %v4121 = vmax.f32 %v3993, 0.0
        %v4122 = vmax.f32 %v3994, 0.0
        %v4123 = vmax.f32 %v3995, 0.0
        %v4124 = vmax.f32 %v3996, 0.0
        %v4125 = vmax.f32 %v3997, 0.0
        %v4126 = vmax.f32 %v3998, 0.0
        %v4127 = vmax.f32 %v3999, 0.0
        %v4128 = vmax.f32 %v4000, 0.0
        %v4129 = vmax.f32 %v4001, 0.0
        %v4130 = vmax.f32 %v4002, 0.0
        %v4131 = vmax.f32 %v4003, 0.0
        %v4132 = vmax.f32 %v4004, 0.0
        %v4133 = vmax.f32 %v4005, 0.0
        %v4134 = vmax.f32 %v4006, 0.0
        %v4135 = vmax.f32 %v4007, 0.0
        %v4136 = vmax.f32 %v4008, 0.0
        %v4137 = vmax.f32 %v4009, 0.0
        %v4138 = vmax.f32 %v4010, 0.0
        %v4139 = vmax.f32 %v4011, 0.0
        %v4140 = vmax.f32 %v4012, 0.0
        %v4141 = vmax.f32 %v4013, 0.0
        %v4142 = vmax.f32 %v4014, 0.0
        %v4143 = vmax.f32 %v4015, 0.0
        %v4144 = vmax.f32 %v4016, 0.0
        %v4145 = vmax.f32 %v4017, 0.0
        %v4146 = vmax.f32 %v4018, 0.0
        %v4147 = vmax.f32 %v4019, 0.0
        %v4148 = vmax.f32 %v4020, 0.0
        %v4149 = vmax.f32 %v4021, 0.0
        %v4150 = vmax.f32 %v4022, 0.0
        %v4151 = vmax.f32 %v4023, 0.0
        %v4152 = vmax.f32 %v4024, 0.0
        %v4153 = vmax.f32 %v4025, 0.0
        %v4154 = vmax.f32 %v4026, 0.0
        %v4155 = vmax.f32 %v4027, 0.0
        %v4156 = vmax.f32 %v4028, 0.0
        %v4157 = vmax.f32 %v4029, 0.0
        %v4158 = vmax.f32 %v4030, 0.0
        %v4159 = vmax.f32 %v4031, 0.0
        %v4160 = vmax.f32 %v4032, 0.0
        %v4161 = vmax.f32 %v4033, 0.0
        %v4162 = vmax.f32 %v4034, 0.0
        %v4163 = vmax.f32 %v4035, 0.0
        %v4164 = vmax.f32 %v4036, 0.0
        %v4165 = vmax.f32 %v4037, 0.0
        %v4166 = vmax.f32 %v4038, 0.0
        %v4167 = vmax.f32 %v4039, 0.0
        %v4168 = vmax.f32 %v4040, 0.0
        %v4169 = vmax.f32 %v4041, 0.0
        %v4170 = vmax.f32 %v4042, 0.0
        %v4171 = vmax.f32 %v4043, 0.0
        %v4172 = vmax.f32 %v4044, 0.0
        %v4173 = vmax.f32 %v4045, 0.0
        %v4174 = vmax.f32 %v4046, 0.0
        %v4175 = vmax.f32 %v4047, 0.0
        %v4176 = vmax.f32 %v4048, 0.0
        %v4177 = vmax.f32 %v4049, 0.0
        %v4178 = vmax.f32 %v4050, 0.0
        %v4179 = vmax.f32 %v4051, 0.0
        %v4180 = vmax.f32 %v4052, 0.0
        %v4181 = vmax.f32 %v4053, 0.0
        %v4182 = vmax.f32 %v4054, 0.0
        %v4183 = vmax.f32 %v4055, 0.0
        %v4184 = vmax.f32 %v4056, 0.0
        %v4185 = vmax.f32 %v4057, 0.0
        %v4186 = vmax.f32 %v4058, 0.0
        %v4187 = vmax.f32 %v4059, 0.0
        %v4188 = vmax.f32 %v4060, 0.0
        %v4189 = vmax.f32 %v4061, 0.0
        %v4190 = vmax.f32 %v4062, 0.0
        %v4191 = vmax.f32 %v4063, 0.0
        %v4192 = vmax.f32 %v4064, 0.0
        %v4193 = vmax.f32 %v4065, 0.0
        %v4194 = vmax.f32 %v4066, 0.0
        %v4195 = vmax.f32 %v4067, 0.0
        %v4196 = vmax.f32 %v4068, 0.0
        %v4197 = vmax.f32 %v4069, 0.0
        %v4198 = vmax.f32 %v4070, 0.0
        %v4199 = vmax.f32 %v4071, 0.0
        %v4200 = vpack.c.bf16 %v4073, %v4072
        %v4201 = vpack.c.bf16 %v4075, %v4074
        %v4202 = vpack.c.bf16 %v4077, %v4076
        %v4203 = vpack.c.bf16 %v4079, %v4078
        %v4204 = vpack.c.bf16 %v4081, %v4080
        %v4205 = vpack.c.bf16 %v4083, %v4082
        %v4206 = vpack.c.bf16 %v4085, %v4084
        %v4207 = vpack.c.bf16 %v4087, %v4086
        %v4208 = vpack.c.bf16 %v4089, %v4088
        %v4209 = vpack.c.bf16 %v4091, %v4090
        %v4210 = vpack.c.bf16 %v4093, %v4092
        %v4211 = vpack.c.bf16 %v4095, %v4094
        %v4212 = vpack.c.bf16 %v4097, %v4096
        %v4213 = vpack.c.bf16 %v4099, %v4098
        %v4214 = vpack.c.bf16 %v4101, %v4100
        %v4215 = vpack.c.bf16 %v4103, %v4102
        %v4216 = vpack.c.bf16 %v4105, %v4104
        %v4217 = vpack.c.bf16 %v4107, %v4106
        %v4218 = vpack.c.bf16 %v4109, %v4108
        %v4219 = vpack.c.bf16 %v4111, %v4110
        %v4220 = vpack.c.bf16 %v4113, %v4112
        %v4221 = vpack.c.bf16 %v4115, %v4114
        %v4222 = vpack.c.bf16 %v4117, %v4116
        %v4223 = vpack.c.bf16 %v4119, %v4118
        %v4224 = vpack.c.bf16 %v4121, %v4120
        %v4225 = vpack.c.bf16 %v4123, %v4122
        %v4226 = vpack.c.bf16 %v4125, %v4124
        %v4227 = vpack.c.bf16 %v4127, %v4126
        %v4228 = vpack.c.bf16 %v4129, %v4128
        %v4229 = vpack.c.bf16 %v4131, %v4130
        %v4230 = vpack.c.bf16 %v4133, %v4132
        %v4231 = vpack.c.bf16 %v4135, %v4134
        %v4232 = vpack.c.bf16 %v4137, %v4136
        %v4233 = vpack.c.bf16 %v4139, %v4138
        %v4234 = vpack.c.bf16 %v4141, %v4140
        %v4235 = vpack.c.bf16 %v4143, %v4142
        %v4236 = vpack.c.bf16 %v4145, %v4144
        %v4237 = vpack.c.bf16 %v4147, %v4146
        %v4238 = vpack.c.bf16 %v4149, %v4148
        %v4239 = vpack.c.bf16 %v4151, %v4150
        %v4240 = vpack.c.bf16 %v4153, %v4152
        %v4241 = vpack.c.bf16 %v4155, %v4154
        %v4242 = vpack.c.bf16 %v4157, %v4156
        %v4243 = vpack.c.bf16 %v4159, %v4158
        %v4244 = vpack.c.bf16 %v4161, %v4160
        %v4245 = vpack.c.bf16 %v4163, %v4162
        %v4246 = vpack.c.bf16 %v4165, %v4164
        %v4247 = vpack.c.bf16 %v4167, %v4166
        %v4248 = vpack.c.bf16 %v4169, %v4168
        %v4249 = vpack.c.bf16 %v4171, %v4170
        %v4250 = vpack.c.bf16 %v4173, %v4172
        %v4251 = vpack.c.bf16 %v4175, %v4174
        %v4252 = vpack.c.bf16 %v4177, %v4176
        %v4253 = vpack.c.bf16 %v4179, %v4178
        %v4254 = vpack.c.bf16 %v4181, %v4180
        %v4255 = vpack.c.bf16 %v4183, %v4182
        %v4256 = vpack.c.bf16 %v4185, %v4184
        %v4257 = vpack.c.bf16 %v4187, %v4186
        %v4258 = vpack.c.bf16 %v4189, %v4188
        %v4259 = vpack.c.bf16 %v4191, %v4190
        %v4260 = vpack.c.bf16 %v4193, %v4192
        %v4261 = vpack.c.bf16 %v4195, %v4194
        %v4262 = vpack.c.bf16 %v4197, %v4196
        %v4263 = vpack.c.bf16 %v4199, %v4198
        %v4328 = vunpack.c.l.b16 %v4200
        %v4329 = vunpack.c.h.b16 %v4200
        %v4330 = vunpack.c.l.b16 %v4201
        %v4331 = vunpack.c.h.b16 %v4201
        %v4332 = vunpack.c.l.b16 %v4202
        %v4333 = vunpack.c.h.b16 %v4202
        %v4334 = vunpack.c.l.b16 %v4203
        %v4335 = vunpack.c.h.b16 %v4203
        %v4336 = vunpack.c.l.b16 %v4204
        %v4337 = vunpack.c.h.b16 %v4204
        %v4338 = vunpack.c.l.b16 %v4205
        %v4339 = vunpack.c.h.b16 %v4205
        %v4340 = vunpack.c.l.b16 %v4206
        %v4341 = vunpack.c.h.b16 %v4206
        %v4342 = vunpack.c.l.b16 %v4207
        %v4343 = vunpack.c.h.b16 %v4207
        %v4344 = vunpack.c.l.b16 %v4208
        %v4345 = vunpack.c.h.b16 %v4208
        %v4346 = vunpack.c.l.b16 %v4209
        %v4347 = vunpack.c.h.b16 %v4209
        %v4348 = vunpack.c.l.b16 %v4210
        %v4349 = vunpack.c.h.b16 %v4210
        %v4350 = vunpack.c.l.b16 %v4211
        %v4351 = vunpack.c.h.b16 %v4211
        %v4352 = vunpack.c.l.b16 %v4212
        %v4353 = vunpack.c.h.b16 %v4212
        %v4354 = vunpack.c.l.b16 %v4213
        %v4355 = vunpack.c.h.b16 %v4213
        %v4356 = vunpack.c.l.b16 %v4214
        %v4357 = vunpack.c.h.b16 %v4214
        %v4358 = vunpack.c.l.b16 %v4215
        %v4359 = vunpack.c.h.b16 %v4215
        %v4360 = vunpack.c.l.b16 %v4216
        %v4361 = vunpack.c.h.b16 %v4216
        %v4362 = vunpack.c.l.b16 %v4217
        %v4363 = vunpack.c.h.b16 %v4217
        %v4364 = vunpack.c.l.b16 %v4218
        %v4365 = vunpack.c.h.b16 %v4218
        %v4366 = vunpack.c.l.b16 %v4219
        %v4367 = vunpack.c.h.b16 %v4219
        %v4368 = vunpack.c.l.b16 %v4220
        %v4369 = vunpack.c.h.b16 %v4220
        %v4370 = vunpack.c.l.b16 %v4221
        %v4371 = vunpack.c.h.b16 %v4221
        %v4372 = vunpack.c.l.b16 %v4222
        %v4373 = vunpack.c.h.b16 %v4222
        %v4374 = vunpack.c.l.b16 %v4223
        %v4375 = vunpack.c.h.b16 %v4223
        %v4376 = vunpack.c.l.b16 %v4224
        %v4377 = vunpack.c.h.b16 %v4224
        %v4378 = vunpack.c.l.b16 %v4225
        %v4379 = vunpack.c.h.b16 %v4225
        %v4380 = vunpack.c.l.b16 %v4226
        %v4381 = vunpack.c.h.b16 %v4226
        %v4382 = vunpack.c.l.b16 %v4227
        %v4383 = vunpack.c.h.b16 %v4227
        %v4384 = vunpack.c.l.b16 %v4228
        %v4385 = vunpack.c.h.b16 %v4228
        %v4386 = vunpack.c.l.b16 %v4229
        %v4387 = vunpack.c.h.b16 %v4229
        %v4388 = vunpack.c.l.b16 %v4230
        %v4389 = vunpack.c.h.b16 %v4230
        %v4390 = vunpack.c.l.b16 %v4231
        %v4391 = vunpack.c.h.b16 %v4231
        %v4392 = vunpack.c.l.b16 %v4232
        %v4393 = vunpack.c.h.b16 %v4232
        %v4394 = vunpack.c.l.b16 %v4233
        %v4395 = vunpack.c.h.b16 %v4233
        %v4396 = vunpack.c.l.b16 %v4234
        %v4397 = vunpack.c.h.b16 %v4234
        %v4398 = vunpack.c.l.b16 %v4235
        %v4399 = vunpack.c.h.b16 %v4235
        %v4400 = vunpack.c.l.b16 %v4236
        %v4401 = vunpack.c.h.b16 %v4236
        %v4402 = vunpack.c.l.b16 %v4237
        %v4403 = vunpack.c.h.b16 %v4237
        %v4404 = vunpack.c.l.b16 %v4238
        %v4405 = vunpack.c.h.b16 %v4238
        %v4406 = vunpack.c.l.b16 %v4239
        %v4407 = vunpack.c.h.b16 %v4239
        %v4408 = vunpack.c.l.b16 %v4240
        %v4409 = vunpack.c.h.b16 %v4240
        %v4410 = vunpack.c.l.b16 %v4241
        %v4411 = vunpack.c.h.b16 %v4241
        %v4412 = vunpack.c.l.b16 %v4242
        %v4413 = vunpack.c.h.b16 %v4242
        %v4414 = vunpack.c.l.b16 %v4243
        %v4415 = vunpack.c.h.b16 %v4243
        %v4416 = vunpack.c.l.b16 %v4244
        %v4417 = vunpack.c.h.b16 %v4244
        %v4418 = vunpack.c.l.b16 %v4245
        %v4419 = vunpack.c.h.b16 %v4245
        %v4420 = vunpack.c.l.b16 %v4246
        %v4421 = vunpack.c.h.b16 %v4246
        %v4422 = vunpack.c.l.b16 %v4247
        %v4423 = vunpack.c.h.b16 %v4247
        %v4424 = vunpack.c.l.b16 %v4248
        %v4425 = vunpack.c.h.b16 %v4248
        %v4426 = vunpack.c.l.b16 %v4249
        %v4427 = vunpack.c.h.b16 %v4249
        %v4428 = vunpack.c.l.b16 %v4250
        %v4429 = vunpack.c.h.b16 %v4250
        %v4430 = vunpack.c.l.b16 %v4251
        %v4431 = vunpack.c.h.b16 %v4251
        %v4432 = vunpack.c.l.b16 %v4252
        %v4433 = vunpack.c.h.b16 %v4252
        %v4434 = vunpack.c.l.b16 %v4253
        %v4435 = vunpack.c.h.b16 %v4253
        %v4436 = vunpack.c.l.b16 %v4254
        %v4437 = vunpack.c.h.b16 %v4254
        %v4438 = vunpack.c.l.b16 %v4255
        %v4439 = vunpack.c.h.b16 %v4255
        %v4440 = vunpack.c.l.b16 %v4256
        %v4441 = vunpack.c.h.b16 %v4256
        %v4442 = vunpack.c.l.b16 %v4257
        %v4443 = vunpack.c.h.b16 %v4257
        %v4444 = vunpack.c.l.b16 %v4258
        %v4445 = vunpack.c.h.b16 %v4258
        %v4446 = vunpack.c.l.b16 %v4259
        %v4447 = vunpack.c.h.b16 %v4259
        %v4448 = vunpack.c.l.b16 %v4260
        %v4449 = vunpack.c.h.b16 %v4260
        %v4450 = vunpack.c.l.b16 %v4261
        %v4451 = vunpack.c.h.b16 %v4261
        %v4452 = vunpack.c.l.b16 %v4262
        %v4453 = vunpack.c.h.b16 %v4262
        %v4454 = vunpack.c.l.b16 %v4263
        %v4455 = vunpack.c.h.b16 %v4263
        %v4456 = vpack.c.b16 %v4328, %v4328
        %v4457 = vpack.c.b16 %v4329, %v4329
        %v4458 = vpack.c.b16 %v4330, %v4330
        %v4459 = vpack.c.b16 %v4331, %v4331
        %v4460 = vpack.c.b16 %v4332, %v4332
        %v4461 = vpack.c.b16 %v4333, %v4333
        %v4462 = vpack.c.b16 %v4334, %v4334
        %v4463 = vpack.c.b16 %v4335, %v4335
        %v4464 = vpack.c.b16 %v4336, %v4336
        %v4465 = vpack.c.b16 %v4337, %v4337
        %v4466 = vpack.c.b16 %v4338, %v4338
        %v4467 = vpack.c.b16 %v4339, %v4339
        %v4468 = vpack.c.b16 %v4340, %v4340
        %v4469 = vpack.c.b16 %v4341, %v4341
        %v4470 = vpack.c.b16 %v4342, %v4342
        %v4471 = vpack.c.b16 %v4343, %v4343
        %v4472 = vpack.c.b16 %v4344, %v4344
        %v4473 = vpack.c.b16 %v4345, %v4345
        %v4474 = vpack.c.b16 %v4346, %v4346
        %v4475 = vpack.c.b16 %v4347, %v4347
        %v4476 = vpack.c.b16 %v4348, %v4348
        %v4477 = vpack.c.b16 %v4349, %v4349
        %v4478 = vpack.c.b16 %v4350, %v4350
        %v4479 = vpack.c.b16 %v4351, %v4351
        %v4480 = vpack.c.b16 %v4352, %v4352
        %v4481 = vpack.c.b16 %v4353, %v4353
        %v4482 = vpack.c.b16 %v4354, %v4354
        %v4483 = vpack.c.b16 %v4355, %v4355
        %v4484 = vpack.c.b16 %v4356, %v4356
        %v4485 = vpack.c.b16 %v4357, %v4357
        %v4486 = vpack.c.b16 %v4358, %v4358
        %v4487 = vpack.c.b16 %v4359, %v4359
        %v4488 = vpack.c.b16 %v4360, %v4360
        %v4489 = vpack.c.b16 %v4361, %v4361
        %v4490 = vpack.c.b16 %v4362, %v4362
        %v4491 = vpack.c.b16 %v4363, %v4363
        %v4492 = vpack.c.b16 %v4364, %v4364
        %v4493 = vpack.c.b16 %v4365, %v4365
        %v4494 = vpack.c.b16 %v4366, %v4366
        %v4495 = vpack.c.b16 %v4367, %v4367
        %v4496 = vpack.c.b16 %v4368, %v4368
        %v4497 = vpack.c.b16 %v4369, %v4369
        %v4498 = vpack.c.b16 %v4370, %v4370
        %v4499 = vpack.c.b16 %v4371, %v4371
        %v4500 = vpack.c.b16 %v4372, %v4372
        %v4501 = vpack.c.b16 %v4373, %v4373
        %v4502 = vpack.c.b16 %v4374, %v4374
        %v4503 = vpack.c.b16 %v4375, %v4375
        %v4504 = vpack.c.b16 %v4376, %v4376
        %v4505 = vpack.c.b16 %v4377, %v4377
        %v4506 = vpack.c.b16 %v4378, %v4378
        %v4507 = vpack.c.b16 %v4379, %v4379
        %v4508 = vpack.c.b16 %v4380, %v4380
        %v4509 = vpack.c.b16 %v4381, %v4381
        %v4510 = vpack.c.b16 %v4382, %v4382
        %v4511 = vpack.c.b16 %v4383, %v4383
        %v4512 = vpack.c.b16 %v4384, %v4384
        %v4513 = vpack.c.b16 %v4385, %v4385
        %v4514 = vpack.c.b16 %v4386, %v4386
        %v4515 = vpack.c.b16 %v4387, %v4387
        %v4516 = vpack.c.b16 %v4388, %v4388
        %v4517 = vpack.c.b16 %v4389, %v4389
        %v4518 = vpack.c.b16 %v4390, %v4390
        %v4519 = vpack.c.b16 %v4391, %v4391
        %v4520 = vpack.c.b16 %v4392, %v4392
        %v4521 = vpack.c.b16 %v4393, %v4393
        %v4522 = vpack.c.b16 %v4394, %v4394
        %v4523 = vpack.c.b16 %v4395, %v4395
        %v4524 = vpack.c.b16 %v4396, %v4396
        %v4525 = vpack.c.b16 %v4397, %v4397
        %v4526 = vpack.c.b16 %v4398, %v4398
        %v4527 = vpack.c.b16 %v4399, %v4399
        %v4528 = vpack.c.b16 %v4400, %v4400
        %v4529 = vpack.c.b16 %v4401, %v4401
        %v4530 = vpack.c.b16 %v4402, %v4402
        %v4531 = vpack.c.b16 %v4403, %v4403
        %v4532 = vpack.c.b16 %v4404, %v4404
        %v4533 = vpack.c.b16 %v4405, %v4405
        %v4534 = vpack.c.b16 %v4406, %v4406
        %v4535 = vpack.c.b16 %v4407, %v4407
        %v4536 = vpack.c.b16 %v4408, %v4408
        %v4537 = vpack.c.b16 %v4409, %v4409
        %v4538 = vpack.c.b16 %v4410, %v4410
        %v4539 = vpack.c.b16 %v4411, %v4411
        %v4540 = vpack.c.b16 %v4412, %v4412
        %v4541 = vpack.c.b16 %v4413, %v4413
        %v4542 = vpack.c.b16 %v4414, %v4414
        %v4543 = vpack.c.b16 %v4415, %v4415
        %v4544 = vpack.c.b16 %v4416, %v4416
        %v4545 = vpack.c.b16 %v4417, %v4417
        %v4546 = vpack.c.b16 %v4418, %v4418
        %v4547 = vpack.c.b16 %v4419, %v4419
        %v4548 = vpack.c.b16 %v4420, %v4420
        %v4549 = vpack.c.b16 %v4421, %v4421
        %v4550 = vpack.c.b16 %v4422, %v4422
        %v4551 = vpack.c.b16 %v4423, %v4423
        %v4552 = vpack.c.b16 %v4424, %v4424
        %v4553 = vpack.c.b16 %v4425, %v4425
        %v4554 = vpack.c.b16 %v4426, %v4426
        %v4555 = vpack.c.b16 %v4427, %v4427
        %v4556 = vpack.c.b16 %v4428, %v4428
        %v4557 = vpack.c.b16 %v4429, %v4429
        %v4558 = vpack.c.b16 %v4430, %v4430
        %v4559 = vpack.c.b16 %v4431, %v4431
        %v4560 = vpack.c.b16 %v4432, %v4432
        %v4561 = vpack.c.b16 %v4433, %v4433
        %v4562 = vpack.c.b16 %v4434, %v4434
        %v4563 = vpack.c.b16 %v4435, %v4435
        %v4564 = vpack.c.b16 %v4436, %v4436
        %v4565 = vpack.c.b16 %v4437, %v4437
        %v4566 = vpack.c.b16 %v4438, %v4438
        %v4567 = vpack.c.b16 %v4439, %v4439
        %v4568 = vpack.c.b16 %v4440, %v4440
        %v4569 = vpack.c.b16 %v4441, %v4441
        %v4570 = vpack.c.b16 %v4442, %v4442
        %v4571 = vpack.c.b16 %v4443, %v4443
        %v4572 = vpack.c.b16 %v4444, %v4444
        %v4573 = vpack.c.b16 %v4445, %v4445
        %v4574 = vpack.c.b16 %v4446, %v4446
        %v4575 = vpack.c.b16 %v4447, %v4447
        %v4576 = vpack.c.b16 %v4448, %v4448
        %v4577 = vpack.c.b16 %v4449, %v4449
        %v4578 = vpack.c.b16 %v4450, %v4450
        %v4579 = vpack.c.b16 %v4451, %v4451
        %v4580 = vpack.c.b16 %v4452, %v4452
        %v4581 = vpack.c.b16 %v4453, %v4453
        %v4582 = vpack.c.b16 %v4454, %v4454
        %v4583 = vpack.c.b16 %v4455, %v4455
        %vm4712 = vcmask 519168
        %4713 = vst.msk [vmem:[%s201] sm:$0xf] %vm4712, %v4456
        %4714 = vst.msk [vmem:[%s201 + $0x4] sm:$0xf] %vm4712, %v4457
        %4715 = vst.msk [vmem:[%s201 + $0x8] sm:$0xf] %vm4712, %v4458
        %4716 = vst.msk [vmem:[%s201 + $0xc] sm:$0xf] %vm4712, %v4459
        %4717 = vst.msk [vmem:[%s201 + $0x10] sm:$0xf] %vm4712, %v4460
        %4718 = vst.msk [vmem:[%s201 + $0x14] sm:$0xf] %vm4712, %v4461
        %4719 = vst.msk [vmem:[%s201 + $0x18] sm:$0xf] %vm4712, %v4462
        %4720 = vst.msk [vmem:[%s201 + $0x1c] sm:$0xf] %vm4712, %v4463
        %4721 = vst.msk [vmem:[%s201 + $0x20] sm:$0xf] %vm4712, %v4464
        %4722 = vst.msk [vmem:[%s201 + $0x24] sm:$0xf] %vm4712, %v4465
        %4723 = vst.msk [vmem:[%s201 + $0x28] sm:$0xf] %vm4712, %v4466
        %4724 = vst.msk [vmem:[%s201 + $0x2c] sm:$0xf] %vm4712, %v4467
        %4725 = vst.msk [vmem:[%s201 + $0x30] sm:$0xf] %vm4712, %v4468
        %4726 = vst.msk [vmem:[%s201 + $0x34] sm:$0xf] %vm4712, %v4469
        %4727 = vst.msk [vmem:[%s201 + $0x38] sm:$0xf] %vm4712, %v4470
        %4728 = vst.msk [vmem:[%s201 + $0x3c] sm:$0xf] %vm4712, %v4471
        %4729 = vst.msk [vmem:[%s201 + $0x40] sm:$0xf] %vm4712, %v4472
        %4730 = vst.msk [vmem:[%s201 + $0x44] sm:$0xf] %vm4712, %v4473
        %4731 = vst.msk [vmem:[%s201 + $0x48] sm:$0xf] %vm4712, %v4474
        %4732 = vst.msk [vmem:[%s201 + $0x4c] sm:$0xf] %vm4712, %v4475
        %4733 = vst.msk [vmem:[%s201 + $0x50] sm:$0xf] %vm4712, %v4476
        %4734 = vst.msk [vmem:[%s201 + $0x54] sm:$0xf] %vm4712, %v4477
        %4735 = vst.msk [vmem:[%s201 + $0x58] sm:$0xf] %vm4712, %v4478
        %4736 = vst.msk [vmem:[%s201 + $0x5c] sm:$0xf] %vm4712, %v4479
        %4737 = vst.msk [vmem:[%s201 + $0x60] sm:$0xf] %vm4712, %v4480
        %4738 = vst.msk [vmem:[%s201 + $0x64] sm:$0xf] %vm4712, %v4481
        %4739 = vst.msk [vmem:[%s201 + $0x68] sm:$0xf] %vm4712, %v4482
        %4740 = vst.msk [vmem:[%s201 + $0x6c] sm:$0xf] %vm4712, %v4483
        %4741 = vst.msk [vmem:[%s201 + $0x70] sm:$0xf] %vm4712, %v4484
        %4742 = vst.msk [vmem:[%s201 + $0x74] sm:$0xf] %vm4712, %v4485
        %4743 = vst.msk [vmem:[%s201 + $0x78] sm:$0xf] %vm4712, %v4486
        %4744 = vst.msk [vmem:[%s201 + $0x7c] sm:$0xf] %vm4712, %v4487
        %4745 = vst.msk [vmem:[%s201 + $0x80] sm:$0xf] %vm4712, %v4488
        %4746 = vst.msk [vmem:[%s201 + $0x84] sm:$0xf] %vm4712, %v4489
        %4747 = vst.msk [vmem:[%s201 + $0x88] sm:$0xf] %vm4712, %v4490
        %4748 = vst.msk [vmem:[%s201 + $0x8c] sm:$0xf] %vm4712, %v4491
        %4749 = vst.msk [vmem:[%s201 + $0x90] sm:$0xf] %vm4712, %v4492
        %4750 = vst.msk [vmem:[%s201 + $0x94] sm:$0xf] %vm4712, %v4493
        %4751 = vst.msk [vmem:[%s201 + $0x98] sm:$0xf] %vm4712, %v4494
        %4752 = vst.msk [vmem:[%s201 + $0x9c] sm:$0xf] %vm4712, %v4495
        %4753 = vst.msk [vmem:[%s201 + $0xa0] sm:$0xf] %vm4712, %v4496
        %4754 = vst.msk [vmem:[%s201 + $0xa4] sm:$0xf] %vm4712, %v4497
        %4755 = vst.msk [vmem:[%s201 + $0xa8] sm:$0xf] %vm4712, %v4498
        %4756 = vst.msk [vmem:[%s201 + $0xac] sm:$0xf] %vm4712, %v4499
        %4757 = vst.msk [vmem:[%s201 + $0xb0] sm:$0xf] %vm4712, %v4500
        %4758 = vst.msk [vmem:[%s201 + $0xb4] sm:$0xf] %vm4712, %v4501
        %4759 = vst.msk [vmem:[%s201 + $0xb8] sm:$0xf] %vm4712, %v4502
        %4760 = vst.msk [vmem:[%s201 + $0xbc] sm:$0xf] %vm4712, %v4503
        %4761 = vst.msk [vmem:[%s201 + $0xc0] sm:$0xf] %vm4712, %v4504
        %4762 = vst.msk [vmem:[%s201 + $0xc4] sm:$0xf] %vm4712, %v4505
        %4763 = vst.msk [vmem:[%s201 + $0xc8] sm:$0xf] %vm4712, %v4506
        %4764 = vst.msk [vmem:[%s201 + $0xcc] sm:$0xf] %vm4712, %v4507
        %4765 = vst.msk [vmem:[%s201 + $0xd0] sm:$0xf] %vm4712, %v4508
        %4766 = vst.msk [vmem:[%s201 + $0xd4] sm:$0xf] %vm4712, %v4509
        %4767 = vst.msk [vmem:[%s201 + $0xd8] sm:$0xf] %vm4712, %v4510
        %4768 = vst.msk [vmem:[%s201 + $0xdc] sm:$0xf] %vm4712, %v4511
        %4769 = vst.msk [vmem:[%s201 + $0xe0] sm:$0xf] %vm4712, %v4512
        %4770 = vst.msk [vmem:[%s201 + $0xe4] sm:$0xf] %vm4712, %v4513
        %4771 = vst.msk [vmem:[%s201 + $0xe8] sm:$0xf] %vm4712, %v4514
        %4772 = vst.msk [vmem:[%s201 + $0xec] sm:$0xf] %vm4712, %v4515
        %4773 = vst.msk [vmem:[%s201 + $0xf0] sm:$0xf] %vm4712, %v4516
        %4774 = vst.msk [vmem:[%s201 + $0xf4] sm:$0xf] %vm4712, %v4517
        %4775 = vst.msk [vmem:[%s201 + $0xf8] sm:$0xf] %vm4712, %v4518
        %4776 = vst.msk [vmem:[%s201 + $0xfc] sm:$0xf] %vm4712, %v4519
        %4777 = vst.msk [vmem:[%s201 + $0x100] sm:$0xf] %vm4712, %v4520
        %4778 = vst.msk [vmem:[%s201 + $0x104] sm:$0xf] %vm4712, %v4521
        %4779 = vst.msk [vmem:[%s201 + $0x108] sm:$0xf] %vm4712, %v4522
        %4780 = vst.msk [vmem:[%s201 + $0x10c] sm:$0xf] %vm4712, %v4523
        %4781 = vst.msk [vmem:[%s201 + $0x110] sm:$0xf] %vm4712, %v4524
        %4782 = vst.msk [vmem:[%s201 + $0x114] sm:$0xf] %vm4712, %v4525
        %4783 = vst.msk [vmem:[%s201 + $0x118] sm:$0xf] %vm4712, %v4526
        %4784 = vst.msk [vmem:[%s201 + $0x11c] sm:$0xf] %vm4712, %v4527
        %4785 = vst.msk [vmem:[%s201 + $0x120] sm:$0xf] %vm4712, %v4528
        %4786 = vst.msk [vmem:[%s201 + $0x124] sm:$0xf] %vm4712, %v4529
        %4787 = vst.msk [vmem:[%s201 + $0x128] sm:$0xf] %vm4712, %v4530
        %4788 = vst.msk [vmem:[%s201 + $0x12c] sm:$0xf] %vm4712, %v4531
        %4789 = vst.msk [vmem:[%s201 + $0x130] sm:$0xf] %vm4712, %v4532
        %4790 = vst.msk [vmem:[%s201 + $0x134] sm:$0xf] %vm4712, %v4533
        %4791 = vst.msk [vmem:[%s201 + $0x138] sm:$0xf] %vm4712, %v4534
        %4792 = vst.msk [vmem:[%s201 + $0x13c] sm:$0xf] %vm4712, %v4535
        %4793 = vst.msk [vmem:[%s201 + $0x140] sm:$0xf] %vm4712, %v4536
        %4794 = vst.msk [vmem:[%s201 + $0x144] sm:$0xf] %vm4712, %v4537
        %4795 = vst.msk [vmem:[%s201 + $0x148] sm:$0xf] %vm4712, %v4538
        %4796 = vst.msk [vmem:[%s201 + $0x14c] sm:$0xf] %vm4712, %v4539
        %4797 = vst.msk [vmem:[%s201 + $0x150] sm:$0xf] %vm4712, %v4540
        %4798 = vst.msk [vmem:[%s201 + $0x154] sm:$0xf] %vm4712, %v4541
        %4799 = vst.msk [vmem:[%s201 + $0x158] sm:$0xf] %vm4712, %v4542
        %4800 = vst.msk [vmem:[%s201 + $0x15c] sm:$0xf] %vm4712, %v4543
        %4801 = vst.msk [vmem:[%s201 + $0x160] sm:$0xf] %vm4712, %v4544
        %4802 = vst.msk [vmem:[%s201 + $0x164] sm:$0xf] %vm4712, %v4545
        %4803 = vst.msk [vmem:[%s201 + $0x168] sm:$0xf] %vm4712, %v4546
        %4804 = vst.msk [vmem:[%s201 + $0x16c] sm:$0xf] %vm4712, %v4547
        %4805 = vst.msk [vmem:[%s201 + $0x170] sm:$0xf] %vm4712, %v4548
        %4806 = vst.msk [vmem:[%s201 + $0x174] sm:$0xf] %vm4712, %v4549
        %4807 = vst.msk [vmem:[%s201 + $0x178] sm:$0xf] %vm4712, %v4550
        %4808 = vst.msk [vmem:[%s201 + $0x17c] sm:$0xf] %vm4712, %v4551
        %4809 = vst.msk [vmem:[%s201 + $0x180] sm:$0xf] %vm4712, %v4552
        %4810 = vst.msk [vmem:[%s201 + $0x184] sm:$0xf] %vm4712, %v4553
        %4811 = vst.msk [vmem:[%s201 + $0x188] sm:$0xf] %vm4712, %v4554
        %4812 = vst.msk [vmem:[%s201 + $0x18c] sm:$0xf] %vm4712, %v4555
        %4813 = vst.msk [vmem:[%s201 + $0x190] sm:$0xf] %vm4712, %v4556
        %4814 = vst.msk [vmem:[%s201 + $0x194] sm:$0xf] %vm4712, %v4557
        %4815 = vst.msk [vmem:[%s201 + $0x198] sm:$0xf] %vm4712, %v4558
        %4816 = vst.msk [vmem:[%s201 + $0x19c] sm:$0xf] %vm4712, %v4559
        %4817 = vst.msk [vmem:[%s201 + $0x1a0] sm:$0xf] %vm4712, %v4560
        %4818 = vst.msk [vmem:[%s201 + $0x1a4] sm:$0xf] %vm4712, %v4561
        %4819 = vst.msk [vmem:[%s201 + $0x1a8] sm:$0xf] %vm4712, %v4562
        %4820 = vst.msk [vmem:[%s201 + $0x1ac] sm:$0xf] %vm4712, %v4563
        %4821 = vst.msk [vmem:[%s201 + $0x1b0] sm:$0xf] %vm4712, %v4564
        %4822 = vst.msk [vmem:[%s201 + $0x1b4] sm:$0xf] %vm4712, %v4565
        %4823 = vst.msk [vmem:[%s201 + $0x1b8] sm:$0xf] %vm4712, %v4566
        %4824 = vst.msk [vmem:[%s201 + $0x1bc] sm:$0xf] %vm4712, %v4567
        %4825 = vst.msk [vmem:[%s201 + $0x1c0] sm:$0xf] %vm4712, %v4568
        %4826 = vst.msk [vmem:[%s201 + $0x1c4] sm:$0xf] %vm4712, %v4569
        %4827 = vst.msk [vmem:[%s201 + $0x1c8] sm:$0xf] %vm4712, %v4570
        %4828 = vst.msk [vmem:[%s201 + $0x1cc] sm:$0xf] %vm4712, %v4571
        %4829 = vst.msk [vmem:[%s201 + $0x1d0] sm:$0xf] %vm4712, %v4572
        %4830 = vst.msk [vmem:[%s201 + $0x1d4] sm:$0xf] %vm4712, %v4573
        %4831 = vst.msk [vmem:[%s201 + $0x1d8] sm:$0xf] %vm4712, %v4574
        %4832 = vst.msk [vmem:[%s201 + $0x1dc] sm:$0xf] %vm4712, %v4575
        %4833 = vst.msk [vmem:[%s201 + $0x1e0] sm:$0xf] %vm4712, %v4576
        %4834 = vst.msk [vmem:[%s201 + $0x1e4] sm:$0xf] %vm4712, %v4577
        %4835 = vst.msk [vmem:[%s201 + $0x1e8] sm:$0xf] %vm4712, %v4578
        %4836 = vst.msk [vmem:[%s201 + $0x1ec] sm:$0xf] %vm4712, %v4579
        %4837 = vst.msk [vmem:[%s201 + $0x1f0] sm:$0xf] %vm4712, %v4580
        %4838 = vst.msk [vmem:[%s201 + $0x1f4] sm:$0xf] %vm4712, %v4581
        %4839 = vst.msk [vmem:[%s201 + $0x1f8] sm:$0xf] %vm4712, %v4582
        %4840 = vst.msk [vmem:[%s201 + $0x1fc] sm:$0xf] %vm4712, %v4583
        %s4841 = sand.u32 %s117, 1
        %s4842 = scalar_lea.sflag [#allocation3], %s4841
        %s4843 = sand.u32 %s117, 1
        %s4844 = smul.addr %s4843, 512
        %s4845 = scalar_lea.vmem [#allocation2], %s4844
        // Predicated region
        $region33: #{tpu_custom_call.1} parent=31 // pred_check
          %p4846 = pneg %p127
        $region34: #{tpu_custom_call.1} parent=31 // pred_check_branch
          %4848 = sbr.rel (%p4846) target = $region36
        $region35: #{tpu_custom_call.1} parent=31 // pred_region
          %s4850 = ssub.s32 8192, 8192
          %4851 = vsyncadd %s4842, %s4850
          %s4852 = smul.addr %s21, 128
          %s4853 = sadd.s32 %s22, %s4852
          %s4854 = smul.addr %s4853, 64
          %s4855 = scalar_lea.hbm %s3, %s4854
          %s4856 = sshll.u32 %s4845, 4
          %s4857 = int_to_ptr.vmem [resolvable:$true] %s4856
          %4862 = dma.vmem_to_hbm [thread:$0]  %s4857, 8192, %s4855, %s4842, 64, 64, 4
        $region36: #{tpu_custom_call.1} parent=31 // pred_fallthru
          _
      $region32: #{tpu_custom_call.1} parent=5 // pred_fallthru
        _
      %p4863 = scmp.le.s32.totalorder 2, %s12
      // Predicated region
      $region37: #{tpu_custom_call.1} parent=5 // pred_check
        %p4864 = pneg %p4863
      $region38: #{tpu_custom_call.1} parent=5 // pred_check_branch
        %4866 = sbr.rel (%p4864) target = $region40
      $region39: #{tpu_custom_call.1} parent=5 // pred_region
        %s4867 = ssub.s32 %s12, 2
        // Predicated region
        $region41: #{tpu_custom_call.1} parent=39 // pred_check
          %p4868 = pneg %p133
        $region42: #{tpu_custom_call.1} parent=39 // pred_check_branch
          %4870 = sbr.rel (%p4868) target = $region44
        $region43: #{tpu_custom_call.1} parent=39 // pred_region
          %s4871 = sand.u32 %s118, 1
          %s4872 = scalar_lea.sflag [#allocation3], %s4871
          %s4873 = sand.u32 %s118, 1
          %s4874 = smul.addr %s4873, 512
          %s4875 = scalar_lea.vmem [#allocation2], %s4874
          %4876 = dma.done %s4872, 8192
        $region44: #{tpu_custom_call.1} parent=39 // pred_fallthru
          _
      $region40: #{tpu_custom_call.1} parent=5 // pred_fallthru
        _
    $region6: #{tpu_custom_call.1} parent=1 // loop_footer
      %s16 = sadd.s32 1, %s12
    $region7: #{tpu_custom_call.1} parent=1 // loop_footer_branch
      %11 = sbr.rel target = $region3
    $region8: #{tpu_custom_call.1} parent=1 // loop_exit
      _
    %4877 = vsyncpa [#allocation3], 1
    %s4878 = scalar_lea.sflag [#allocation3], 1
    %4879 = vsyncpa %s4878, 1

</llo_original>
